<compile_context>
chip_gen: v7x
topology: tpu7x:2x2x1
jax: 0.10.0
libtpu: 0.0.40
codegen_flags: <defaults>
</compile_context>

<pallas_src>
import functools

import numpy as np

import jax
import jax.numpy as jnp
from jax import lax
from jax.experimental import pallas as pl
from jax.experimental.pallas import tpu as pltpu

LRELU_SLOPE = 0.1

# ----------------------------- model hyper-params (small, synthetic) -----------------------
CODE_VOCAB = 12
CODE_DIM = 32
NUM_SPKRS = 4
SPKR_DIM = 16
NUM_LANGS = 3
LANG_DIM = 16
MODEL_IN = CODE_DIM + SPKR_DIM + LANG_DIM   # 64
HIDDEN = 64
UP_K, UP_STRIDE, UP_PAD = 4, 2, 1
RES_KERNELS = (3, 5)
RES_CH = HIDDEN // 2                        # 32 channels after upsampling
PCH = 2 * RES_CH                            # packed [even|odd] channel width = 64

HALO_IN = 8            # code frames of halo needed on each side of a tile (3 + 1 + 2 + 2)
DEFAULT_TILE_C = 2048  # code frames per grid step (multiple of 64; review item: amortize step cost)


def _round_up(a, b):
    return -(-a // b) * b


# ----------------------------- one-time Mosaic feature probes -------------------------------
_FEATURE_CACHE = {}


def _mosaic_supports(feature):
    """Tiny one-time probe kernels so optional Mosaic features degrade gracefully.

    'lane_dense_out': (N, 2) -> (N//64, 128) value reshape (lane-growing relayout).
    'vector_cond'   : lax.cond with vector-valued results (scf.if yields).
    Either failing only disables that micro-optimization; the main kernel still runs."""
    if feature in _FEATURE_CACHE:
        return _FEATURE_CACHE[feature]
    ok = False
    try:
        if feature == "lane_dense_out":
            def k(x_ref, o_ref):
                o_ref[...] = x_ref[...].reshape(4, 128)

            x = jnp.arange(512, dtype=jnp.float32).reshape(256, 2)
            y = pl.pallas_call(
                k, out_shape=jax.ShapeDtypeStruct((4, 128), jnp.float32))(x)
            ok = bool(jnp.array_equal(y, x.reshape(4, 128)))
        elif feature == "vector_cond":
            def k(x_ref, o_ref):
                pred = pl.program_id(0) < 1
                o_ref[...] = lax.cond(pred, lambda u: u * 2.0, lambda u: u + 1.0,
                                      x_ref[...])

            x = jnp.ones((8, 128), jnp.float32)
            y = pl.pallas_call(
                k, grid=(1,),
                in_specs=[pl.BlockSpec((8, 128), lambda i: (0, 0))],
                out_specs=pl.BlockSpec((8, 128), lambda i: (0, 0)),
                out_shape=jax.ShapeDtypeStruct((8, 128), jnp.float32))(x)
            ok = bool(jnp.array_equal(y, 2.0 * x))
    except Exception:
        ok = False
    _FEATURE_CACHE[feature] = ok
    return ok


# ----------------------------- fused generator kernel --------------------------------------
def _vocoder_kernel(x_ref, wpre_ref, bpre_ref, wup_ref, bup_ref,
                    wl1_ref, bl1_ref, wl2_ref, bl2_ref, wpost_ref, bpost_ref,
                    o_ref, *, tile_c, seq_len, lane_dense, skip_interior_masks):
    """One code-time tile of the whole generator.

    x_ref : (1, tile_c + 16, 64) bf16 embedded input with halo (zeros outside [0, seq_len)).
    o_ref : lane_dense -> (1, tile_c//64, 128) f32 rows of 128 interleaved waveform samples;
            otherwise  -> (1, tile_c, 2) f32 packed [even|odd] waveform frames.
    """
    f32, bf16 = jnp.float32, jnp.bfloat16
    n1 = tile_c + 10   # conv_pre output frames    [base-5, base+tile_c+5)
    n2 = tile_c + 8    # upsampled packed frames   [base-4, base+tile_c+4)
    n3 = tile_c + 6    # resblock layer-1 frames   [base-3, base+tile_c+3)
    n4 = tile_c + 4    # resblock layer-2 frames   [base-2, base+tile_c+2)
    n5 = tile_c        # conv_post/output frames   [base,   base+tile_c)

    base = pl.program_id(0) * tile_c
    # Tile touches the sequence boundary iff any frame of the widest intermediate (c1,
    # frames [base-5, base+tile_c+5)) lies outside [0, seq_len).
    boundary = jnp.logical_or(base < 5, base + tile_c + 5 > seq_len)

    def lrelu(v):
        return jnp.where(v >= 0, v, LRELU_SLOPE * v)

    def edge_mask(v, start):
        # Zero rows whose global code frame is outside [0, seq_len) - this reproduces the
        # zero padding every PyTorch conv applies at the true sequence boundaries.
        n = v.shape[0]

        def _zero_oob(u):
            fr = lax.broadcasted_iota(jnp.int32, (n, 1), 0) + (base + start)
            return jnp.where(jnp.logical_and(fr >= 0, fr < seq_len), u, 0.0)

        if skip_interior_masks:
            # Interior tiles take the (near-free) identity branch; only the first/last
            # tiles pay for the boundary zero-mask selects.  (review: mask gating)
            return lax.cond(boundary, _zero_oob, lambda u: u, v)
        return _zero_oob(v)

    def conv(a, w_ref, b_ref, n):
        # Per-tap accumulating matmuls: no materialized im2col / activation concatenation.
        # (review: eliminate the concat copies that saturate the vector-store slot)
        acc = jnp.dot(a[0:n, :], w_ref[0], preferred_element_type=f32)
        for k in range(1, w_ref.shape[0]):
            acc = acc + jnp.dot(a[k:k + n, :], w_ref[k], preferred_element_type=f32)
        return acc + b_ref[...]

    x = x_ref[0]                                                    # (tile_c+16, 64) bf16

    # conv_pre (K=7) + LeakyReLU.
    a1 = edge_mask(lrelu(conv(x, wpre_ref, bpre_ref, n1)), -5).astype(bf16)       # (n1, 64)

    # ConvTranspose1d (K=4, stride=2, pad=1) as 3 polyphase taps.  Output columns
    # [0:32] = even waveform samples, [32:64] = odd samples of each packed frame.
    h = edge_mask(conv(a1, wup_ref, bup_ref, n2), -4)                             # (n2, 64) f32

    # MRF residual blocks, both branches (K=3, K=5) merged in the weights.
    # layer 1: cols [0:64] = K=3 branch, [64:128] = K=5 branch.
    t1 = edge_mask(conv(lrelu(h).astype(bf16), wl1_ref, bl1_ref, n3), -3)         # (n3, 128)
    # layer 2: tap-major merged weight -> directly yields xt_k3 + xt_k5 from the full
    # 128-lane activation (no lane split / concat; review item).
    t2 = conv(lrelu(t1).astype(bf16), wl2_ref, bl2_ref, n4)                       # (n4, 64)
    h2 = edge_mask(h[2:2 + n4, :] + 0.5 * t2, -2)                                 # mean of residuals

    # conv_post (K=7, Cout=1) + tanh -> packed [even|odd] waveform frames.
    wav = jnp.tanh(conv(lrelu(h2).astype(bf16), wpost_ref, bpost_ref, n5))        # (n5, 2)

    if lane_dense:
        # Row-major (frame, phase) order IS the interleaved waveform order, so packing 64
        # frames per 128-lane row keeps the wrapper reshape trivial while making the output
        # block lane-dense (unmasked vst, dense HBM writeback, tiny output VMEM).
        o_ref[0] = wav.reshape(n5 * 2 // 128, 128).astype(o_ref.dtype)
    else:
        o_ref[0] = wav.astype(o_ref.dtype)


# ----------------------------- parameters (deterministic init) -----------------------------
def init_params(key):
    ks = jax.random.split(key, 20)

    def nrm(k, shape, scale):
        return (scale * jax.random.normal(k, shape)).astype(jnp.float32)

    W, B, E = 0.08, 0.02, 0.3
    p = {
        "code_emb": nrm(ks[0], (CODE_VOCAB, CODE_DIM), E),
        "spkr_emb": nrm(ks[1], (NUM_SPKRS, SPKR_DIM), E),
        "lang_emb": nrm(ks[2], (NUM_LANGS, LANG_DIM), E),
        "conv_pre_w": nrm(ks[3], (7, MODEL_IN, HIDDEN), W),          # (K, Cin, Cout)
        "conv_pre_b": nrm(ks[4], (HIDDEN,), B),
        "up_w": nrm(ks[5], (HIDDEN, RES_CH, UP_K), W),               # torch ConvTranspose1d (Cin, Cout, K)
        "up_b": nrm(ks[6], (RES_CH,), B),
        "conv_post_w": nrm(ks[7], (7, RES_CH, 1), W),
        "conv_post_b": nrm(ks[8], (1,), B),
    }
    idx = 9
    for i, K in enumerate(RES_KERNELS):
        p[f"res{i}_w1"] = nrm(ks[idx], (K, RES_CH, RES_CH), W); idx += 1
        p[f"res{i}_b1"] = nrm(ks[idx], (RES_CH,), B); idx += 1
        p[f"res{i}_w2"] = nrm(ks[idx], (K, RES_CH, RES_CH), W); idx += 1
        p[f"res{i}_b2"] = nrm(ks[idx], (RES_CH,), B); idx += 1
    return p


def _pack_phase_conv_taps(w, halo):
    """Pack an odd-K stride-1 waveform conv (K, Cin, Cout) into per-tap matmul weights acting
    on the packed [even|odd] frame layout.  Result: (2*halo+1, 2*Cin, 2*Cout); tap s is the
    packed-frame offset (s - halo); cols [0:Cout] = even output phase, [Cout:] = odd."""
    w = np.asarray(w, np.float32)
    K, cin, cout = w.shape
    p = (K - 1) // 2
    S = 2 * halo + 1
    Wt = np.zeros((S, 2 * cin, 2 * cout), np.float32)
    for phi_out in (0, 1):
        for k in range(K):
            j = phi_out + k - p               # waveform-time offset of the tap
            delta, phi_in = j // 2, j % 2     # packed frame offset / input phase
            Wt[delta + halo,
               phi_in * cin:(phi_in + 1) * cin,
               phi_out * cout:(phi_out + 1) * cout] += w[k]
    return Wt


def prepare_kernel_params(params, dtype=jnp.bfloat16):
    """Build kernel-layout weights ONCE: per-tap stacks, polyphase-packed, branch-merged."""
    f32 = jnp.float32

    # Polyphase ConvTranspose1d: even = x[m] W1 + x[m-1] W3, odd = x[m] W2 + x[m+1] W0.
    # Tap s (s in 0..2) multiplies packed frame (m - 1 + s); cols = [even | odd].
    up_w = np.asarray(params["up_w"], np.float32)                       # (64, 32, 4)
    W0, W1, W2, W3 = [up_w[:, :, k] for k in range(UP_K)]
    Z = np.zeros_like(W0)
    w_up = np.stack([np.concatenate([W3, Z], 1),
                     np.concatenate([W1, W2], 1),
                     np.concatenate([Z, W0], 1)], 0)                    # (3, 64, 64)

    # Resblock layer 1: both branches side-by-side on the output lanes.
    l1_0 = _pack_phase_conv_taps(params["res0_w1"], 1)                  # (3, 64, 64)
    l1_1 = _pack_phase_conv_taps(params["res1_w1"], 1)                  # (3, 64, 64)
    w_l1 = np.concatenate([l1_0, l1_1], axis=2)                         # (3, 64, 128)

    # Resblock layer 2: TAP-MAJOR merge (rows [0:64] act on branch-0 lanes, [64:128] on
    # branch-1 lanes of the layer-1 output) so the kernel needs no lane split.
    l2_0 = _pack_phase_conv_taps(params["res0_w2"], 1)                  # (3, 64, 64)
    l2_1 = _pack_phase_conv_taps(params["res1_w2"], 1)                  # (3, 64, 64)
    w_l2 = np.concatenate([l2_0, l2_1], axis=1)                         # (3, 128, 64)

    w_post = _pack_phase_conv_taps(params["conv_post_w"], 2)            # (5, 64, 2)

    return {
        "w_pre": jnp.asarray(params["conv_pre_w"], dtype),                          # (7, 64, 64)
        "b_pre": jnp.asarray(params["conv_pre_b"], f32).reshape(1, HIDDEN),
        "w_up": jnp.asarray(w_up, dtype),                                           # (3, 64, 64)
        "b_up": jnp.tile(jnp.asarray(params["up_b"], f32), 2).reshape(1, PCH),
        "w_l1": jnp.asarray(w_l1, dtype),                                           # (3, 64, 128)
        "b_l1": jnp.concatenate([jnp.tile(params["res0_b1"], 2),
                                 jnp.tile(params["res1_b1"], 2)]).astype(f32).reshape(1, 2 * PCH),
        "w_l2": jnp.asarray(w_l2, dtype),                                           # (3, 128, 64)
        "b_l2": jnp.tile(params["res0_b2"] + params["res1_b2"], 2).astype(f32).reshape(1, PCH),
        "w_post": jnp.asarray(w_post, dtype),                                       # (5, 64, 2)
        "b_post": jnp.tile(params["conv_post_b"], 2).astype(f32).reshape(1, 2),
    }


# ----------------------------- CodeGenerator forward ---------------------------------------
def _resident(arr):
    # weight stays VMEM-resident across the grid (constant block index).
    return pl.BlockSpec(arr.shape, lambda t: (0,) * arr.ndim)


def code_generator_forward(params, kparams, x_dict, dur_prediction=False, tile_c=None):
    # TODO(synk): duration predictor (data-dependent repeat_interleave) has no clean
    #             static-shape Pallas equivalent; dur_prediction=True uses the no-duration path.
    code = x_dict["code"]        # (1, T) int32
    spkr = x_dict["spkr"]        # (1, 1) int32
    lang = x_dict["lang"]        # (1, 1) int32
    T = int(code.shape[1])

    if tile_c is None:
        # Cap at DEFAULT_TILE_C, keep a multiple of 64, and guarantee >= 2 tiles on long
        # sequences so both v7x TensorCores get work via the "parallel" grid axis.
        tile_c = min(DEFAULT_TILE_C, _round_up(pl.cdiv(T, 2), 64))
    tile_c = max(64, _round_up(int(tile_c), 64))
    nt = pl.cdiv(T, tile_c)
    tin = tile_c + 2 * HALO_IN

    lane_dense = _mosaic_supports("lane_dense_out")
    use_cond = _mosaic_supports("vector_cond")

    # Gather the (code-rate, tiny) input per tile with an 8-frame halo; zero rows outside
    # [0, T) reproduce conv_pre's zero padding, so no jnp.pad of activations is ever needed.
    pos = jnp.arange(nt, dtype=jnp.int32)[:, None] * tile_c \
        + jnp.arange(tin, dtype=jnp.int32)[None, :] - HALO_IN                  # (nt, tin)
    valid = jnp.logical_and(pos >= 0, pos < T)
    ids = jnp.take(code[0], jnp.clip(pos, 0, T - 1), axis=0)                   # (nt, tin)
    c = jnp.take(params["code_emb"], ids, axis=0)                              # (nt, tin, 32)
    sl = jnp.concatenate([jnp.take(params["spkr_emb"], spkr[0, 0], axis=0),
                          jnp.take(params["lang_emb"], lang[0, 0], axis=0)], axis=0)
    sl = jnp.broadcast_to(sl[None, None, :], (nt, tin, SPKR_DIM + LANG_DIM))
    emb = jnp.concatenate([c, sl], axis=-1)                                    # (nt, tin, 64)
    emb = jnp.where(valid[..., None], emb, 0.0).astype(jnp.bfloat16)

    kernel = functools.partial(_vocoder_kernel, tile_c=tile_c, seq_len=T,
                               lane_dense=lane_dense, skip_interior_masks=use_cond)

    if lane_dense:
        out_shape = jax.ShapeDtypeStruct((nt, tile_c * 2 // 128, 128), jnp.float32)
        out_spec = pl.BlockSpec((1, tile_c * 2 // 128, 128), lambda t: (t, 0, 0))
    else:
        out_shape = jax.ShapeDtypeStruct((nt, tile_c, 2), jnp.float32)
        out_spec = pl.BlockSpec((1, tile_c, 2), lambda t: (t, 0, 0))

    wav_tiles = pl.pallas_call(
        kernel,
        out_shape=out_shape,
        grid=(nt,),
        in_specs=[
            pl.BlockSpec((1, tin, MODEL_IN), lambda t: (t, 0, 0)),
            _resident(kparams["w_pre"]), _resident(kparams["b_pre"]),
            _resident(kparams["w_up"]), _resident(kparams["b_up"]),
            _resident(kparams["w_l1"]), _resident(kparams["b_l1"]),
            _resident(kparams["w_l2"]), _resident(kparams["b_l2"]),
            _resident(kparams["w_post"]), _resident(kparams["b_post"]),
        ],
        out_specs=out_spec,
        compiler_params=pltpu.CompilerParams(
            dimension_semantics=("parallel",),        # shard tiles across TensorCores
            vmem_limit_bytes=32 * 1024 * 1024),
    )(emb, kparams["w_pre"], kparams["b_pre"], kparams["w_up"], kparams["b_up"],
      kparams["w_l1"], kparams["b_l1"], kparams["w_l2"], kparams["b_l2"],
      kparams["w_post"], kparams["b_post"])

    # Row-major flatten of either output layout is already the interleaved waveform order;
    # restore the PyTorch NCW (B, 1, 2T) shape with one cheap XLA reshape + slice.
    wav = wav_tiles.reshape(1, 1, -1)[:, :, :UP_STRIDE * T]
    return wav


# ----------------------------- Vocoder wrapper (mirrors the nn.Module forward) --------------
class PallasVocoder:
    def __init__(self, params, kernel_params, lang_spkr_idx_map):
        self.params = params
        self.kparams = kernel_params
        self.lang_spkr_idx_map = lang_spkr_idx_map

    def __call__(self, code, lang, spkr=None, dur_prediction=False, tile_c=None):
        x = {"code": jnp.asarray(code, jnp.int32).reshape(1, -1)}
        entry = self.lang_spkr_idx_map[lang]
        lang_idx = entry["lang_idx"]
        spkr_list = entry["spkrs"]
        # NOTE: mirrors the original module's `if not spkr:` (so spkr=0/None both fall back
        #       to the default speaker, exactly as the reference PyTorch code does).
        if not spkr:
            spkr = -1
        spkr = spkr_list[0] if spkr == -1 else spkr
        x["spkr"] = jnp.asarray([[spkr]], jnp.int32)
        x["lang"] = jnp.asarray([[lang_idx]], jnp.int32)
        return code_generator_forward(self.params, self.kparams, x, dur_prediction,
                                      tile_c=tile_c)


# ----------------------------- pure-JAX reference (PyTorch-faithful, f32) -------------------
def _reference_forward(params, code, spkr_idx, lang_idx):
    T = code.shape[1]
    c = jnp.take(params["code_emb"], code, axis=0)
    s = jnp.broadcast_to(params["spkr_emb"][spkr_idx][None, None, :], (1, T, SPKR_DIM))
    l = jnp.broadcast_to(params["lang_emb"][lang_idx][None, None, :], (1, T, LANG_DIM))
    h = jnp.concatenate([c, s, l], axis=-1)

    def lrelu(v):
        return jnp.where(v >= 0, v, LRELU_SLOPE * v)

    def conv(x, w, b, pad):
        K = w.shape[0]
        xp = jnp.pad(x, ((0, 0), (pad, pad), (0, 0)))
        tout = xp.shape[1] - (K - 1)
        acc = jnp.zeros((x.shape[0], tout, w.shape[2]), jnp.float32)
        for k in range(K):
            acc = acc + jnp.einsum("btc,cd->btd", xp[:, k:k + tout, :], w[k])
        return acc + b[None, None, :]

    h = conv(h, params["conv_pre_w"], params["conv_pre_b"], 3)
    hl = lrelu(h)
    # ConvTranspose1d via zero-insertion + flipped kernel (PyTorch semantics).
    xu = jnp.zeros((1, UP_STRIDE * T - 1, HIDDEN), jnp.float32).at[:, ::UP_STRIDE, :].set(hl)
    wt = jnp.flip(params["up_w"], axis=-1).transpose(2, 0, 1)
    h = conv(xu, wt, params["up_b"], UP_K - 1 - UP_PAD)
    xs = jnp.zeros_like(h)
    for i, K in enumerate(RES_KERNELS):
        xt = conv(lrelu(h), params[f"res{i}_w1"], params[f"res{i}_b1"], (K - 1) // 2)
        xt = conv(lrelu(xt), params[f"res{i}_w2"], params[f"res{i}_b2"], (K - 1) // 2)
        xs = xs + h + xt
    h = xs / float(len(RES_KERNELS))
    wav = jnp.tanh(conv(lrelu(h), params["conv_post_w"], params["conv_post_b"], 3))
    return jnp.transpose(wav, (0, 2, 1))


# ----------------------------- demo -----------------------------------------------------------
if __name__ == "__main__":
    key = jax.random.PRNGKey(0)
    params = init_params(key)
    kparams = prepare_kernel_params(params)
    lang_spkr_idx_map = {"eng": {"lang_idx": 0, "spkrs": [1, 2]}}
    vocoder = PallasVocoder(params, kparams, lang_spkr_idx_map)

    # case 1: tiny sequence (single boundary tile), default-speaker path.
    code = [3, 1, 4, 1, 5, 9, 2, 6]
    wav = jax.block_until_ready(vocoder(code, "eng", spkr=None, dur_prediction=False))
    assert wav.shape == (1, 1, UP_STRIDE * len(code)), wav.shape
    assert bool(jnp.all(jnp.isfinite(wav)))
    ref = _reference_forward(params, jnp.asarray(code, jnp.int32).reshape(1, -1), 1, 0)
    scale = float(jnp.max(jnp.abs(ref)))
    err = float(jnp.max(jnp.abs(wav - ref)))
    assert err <= 0.04 * scale + 4e-3, (err, scale)

    # case 2: longer sequence -> first / interior / last tiles, cross-tile halos, tail padding.
    code2 = [int(v) for v in jax.random.randint(jax.random.PRNGKey(1), (180,), 0, CODE_VOCAB)]
    wav2 = jax.block_until_ready(vocoder(code2, "eng", spkr=2, dur_prediction=False, tile_c=64))
    assert wav2.shape == (1, 1, UP_STRIDE * len(code2)), wav2.shape
    assert bool(jnp.all(jnp.isfinite(wav2)))
    ref2 = _reference_forward(params, jnp.asarray(code2, jnp.int32).reshape(1, -1), 2, 0)
    scale2 = float(jnp.max(jnp.abs(ref2)))
    err2 = float(jnp.max(jnp.abs(wav2 - ref2)))
    assert err2 <= 0.04 * scale2 + 4e-3, (err2, scale2)

    print("KERNEL_OK")
</pallas_src>

<mosaic_0001>
module attributes {stable_mosaic.version = 11 : i64} {
  func.func @k(%arg0: memref<256x2xf32, #tpu.memory_space<vmem>>, %arg1: memref<4x128xf32, #tpu.memory_space<vmem>>) attributes {dimension_semantics = [], scalar_prefetch = 0 : i64, scratch_operands = 0 : i64, tpu.core_type = #tpu.core_type<tc>} {
    %c0 = arith.constant 0 : index
    %c0_0 = arith.constant 0 : index
    %0 = vector.load %arg0[%c0, %c0_0] : memref<256x2xf32, #tpu.memory_space<vmem>>, vector<256x2xf32>
    %1 = vector.shape_cast %0 : vector<256x2xf32> to vector<4x128xf32>
    %c0_1 = arith.constant 0 : index
    %c0_2 = arith.constant 0 : index
    %2 = vector.load %arg1[%c0_1, %c0_2] : memref<4x128xf32, #tpu.memory_space<vmem>>, vector<4x128xf32>
    tpu.vector_store %arg1[%c0_1, %c0_2], %1 {strides = array<i32>} : memref<4x128xf32, #tpu.memory_space<vmem>>, vector<4x128xf32>,
    return
  }
}

module attributes {stable_mosaic.version = 11 : i64} {
  func.func @k(%arg0: i32, %arg1: memref<8x128xf32, #tpu.memory_space<vmem>>, %arg2: memref<8x128xf32, #tpu.memory_space<vmem>>) attributes {dimension_semantics = [#tpu.dimension_semantics<arbitrary>], iteration_bounds = array<i64: 1>, scalar_prefetch = 0 : i64, scratch_operands = 0 : i64, tpu.core_type = #tpu.core_type<tc>, window_params = [{pipeline_mode = #tpu.pipeline_mode<synchronous>, transform_indices = @transform_0, window_bounds = array<i64: 8, 128>}, {pipeline_mode = #tpu.pipeline_mode<synchronous>, transform_indices = @transform_1, window_bounds = array<i64: 8, 128>}]} {
    %c1_i32 = arith.constant 1 : i32
    %0 = arith.cmpi slt, %arg0, %c1_i32 : i32
    %c0 = arith.constant 0 : index
    %c0_0 = arith.constant 0 : index
    %1 = vector.load %arg1[%c0, %c0_0] : memref<8x128xf32, #tpu.memory_space<vmem>>, vector<8x128xf32>
    %2 = arith.extui %0 : i1 to i32
    %c0_i32 = arith.constant 0 : i32
    %3 = arith.cmpi ne, %2, %c0_i32 : i32
    %4 = scf.if %3 -> (vector<8x128xf32>) {
      %cst = arith.constant 2.000000e+00 : f32
      %6 = vector.broadcast %cst : f32 to vector<8x128xf32>
      %7 = arith.mulf %1, %6 : vector<8x128xf32>
      scf.yield %7 : vector<8x128xf32>
    } else {
      %cst = arith.constant 1.000000e+00 : f32
      %6 = vector.broadcast %cst : f32 to vector<8x128xf32>
      %7 = arith.addf %1, %6 : vector<8x128xf32>
      scf.yield %7 : vector<8x128xf32>
    }
    %c0_1 = arith.constant 0 : index
    %c0_2 = arith.constant 0 : index
    %5 = vector.load %arg2[%c0_1, %c0_2] : memref<8x128xf32, #tpu.memory_space<vmem>>, vector<8x128xf32>
    tpu.vector_store %arg2[%c0_1, %c0_2], %4 {strides = array<i32>} : memref<8x128xf32, #tpu.memory_space<vmem>>, vector<8x128xf32>,
    return
  }
  func.func @transform_0(%arg0: i32) -> (i32, i32) {
    %c0_i32 = arith.constant 0 : i32
    %c0_i32_0 = arith.constant 0 : i32
    %c0_i32_1 = arith.constant 0 : i32
    return %c0_i32, %c0_i32_0 : i32, i32
  }
  func.func @transform_1(%arg0: i32) -> (i32, i32) {
    %c0_i32 = arith.constant 0 : i32
    %c0_i32_0 = arith.constant 0 : i32
    %c0_i32_1 = arith.constant 0 : i32
    return %c0_i32, %c0_i32_0 : i32, i32
  }
}

module attributes {stable_mosaic.version = 11 : i64} {
  func.func @_vocoder_kernel(%arg0: i32, %arg1: memref<1x80x64xbf16, #tpu.memory_space<vmem>>, %arg2: memref<7x64x64xbf16, #tpu.memory_space<vmem>>, %arg3: memref<1x64xf32, #tpu.memory_space<vmem>>, %arg4: memref<3x64x64xbf16, #tpu.memory_space<vmem>>, %arg5: memref<1x64xf32, #tpu.memory_space<vmem>>, %arg6: memref<3x64x128xbf16, #tpu.memory_space<vmem>>, %arg7: memref<1x128xf32, #tpu.memory_space<vmem>>, %arg8: memref<3x128x64xbf16, #tpu.memory_space<vmem>>, %arg9: memref<1x64xf32, #tpu.memory_space<vmem>>, %arg10: memref<5x64x2xbf16, #tpu.memory_space<vmem>>, %arg11: memref<1x2xf32, #tpu.memory_space<vmem>>, %arg12: memref<1x64x2xf32, #tpu.memory_space<vmem>>) attributes {dimension_semantics = [#tpu.dimension_semantics<parallel>], iteration_bounds = array<i64: 1>, scalar_prefetch = 0 : i64, scratch_operands = 0 : i64, tpu.core_type = #tpu.core_type<tc>, window_params = [{transform_indices = @transform_0, window_bounds = array<i64: 1, 80, 64>}, {pipeline_mode = #tpu.pipeline_mode<synchronous>, transform_indices = @transform_1, window_bounds = array<i64: 7, 64, 64>}, {pipeline_mode = #tpu.pipeline_mode<synchronous>, transform_indices = @transform_2, window_bounds = array<i64: 1, 64>}, {pipeline_mode = #tpu.pipeline_mode<synchronous>, transform_indices = @transform_3, window_bounds = array<i64: 3, 64, 64>}, {pipeline_mode = #tpu.pipeline_mode<synchronous>, transform_indices = @transform_4, window_bounds = array<i64: 1, 64>}, {pipeline_mode = #tpu.pipeline_mode<synchronous>, transform_indices = @transform_5, window_bounds = array<i64: 3, 64, 128>}, {pipeline_mode = #tpu.pipeline_mode<synchronous>, transform_indices = @transform_6, window_bounds = array<i64: 1, 128>}, {pipeline_mode = #tpu.pipeline_mode<synchronous>, transform_indices = @transform_7, window_bounds = array<i64: 3, 128, 64>}, {pipeline_mode = #tpu.pipeline_mode<synchronous>, transform_indices = @transform_8, window_bounds = array<i64: 1, 64>}, {pipeline_mode = #tpu.pipeline_mode<synchronous>, transform_indices = @transform_9, window_bounds = array<i64: 5, 64, 2>}, {pipeline_mode = #tpu.pipeline_mode<synchronous>, transform_indices = @transform_10, window_bounds = array<i64: 1, 2>}, {transform_indices = @transform_11, window_bounds = array<i64: 1, 64, 2>}]} {
    %c64_i32 = arith.constant 64 : i32
    %0 = arith.muli %arg0, %c64_i32 : i32
    %c0 = arith.constant 0 : index
    %c0_0 = arith.constant 0 : index
    %c0_1 = arith.constant 0 : index
    %1 = vector.load %arg1[%c0, %c0_0, %c0_1] : memref<1x80x64xbf16, #tpu.memory_space<vmem>>, vector<1x80x64xbf16>
    %2 = vector.shape_cast %1 : vector<1x80x64xbf16> to vector<80x64xbf16>
    %3 = vector.extract_strided_slice %2 {offsets = [0, 0], sizes = [74, 64], strides = [1, 1]} : vector<80x64xbf16> to vector<74x64xbf16>
    %c0_2 = arith.constant 0 : index
    %c0_3 = arith.constant 0 : index
    %c0_4 = arith.constant 0 : index
    %4 = vector.load %arg2[%c0_2, %c0_3, %c0_4] : memref<7x64x64xbf16, #tpu.memory_space<vmem>>, vector<1x64x64xbf16>
    %5 = vector.shape_cast %4 : vector<1x64x64xbf16> to vector<64x64xbf16>
    %cst = arith.constant dense<0.000000e+00> : vector<74x64xf32>
    %6 = tpu.matmul %3, %5, %cst {dimension_numbers = #tpu.dot_dimension_numbers<[1], [0], [0], [1], [0, 0, 1, 1], [], []>} : vector<74x64xbf16>, vector<64x64xbf16>, vector<74x64xf32> -> vector<74x64xf32>
    %7 = vector.extract_strided_slice %2 {offsets = [1, 0], sizes = [74, 64], strides = [1, 1]} : vector<80x64xbf16> to vector<74x64xbf16>
    %c1 = arith.constant 1 : index
    %c0_5 = arith.constant 0 : index
    %c0_6 = arith.constant 0 : index
    %8 = vector.load %arg2[%c1, %c0_5, %c0_6] : memref<7x64x64xbf16, #tpu.memory_space<vmem>>, vector<1x64x64xbf16>
    %9 = vector.shape_cast %8 : vector<1x64x64xbf16> to vector<64x64xbf16>
    %cst_7 = arith.constant dense<0.000000e+00> : vector<74x64xf32>
    %10 = tpu.matmul %7, %9, %cst_7 {dimension_numbers = #tpu.dot_dimension_numbers<[1], [0], [0], [1], [0, 0, 1, 1], [], []>} : vector<74x64xbf16>, vector<64x64xbf16>, vector<74x64xf32> -> vector<74x64xf32>
    %11 = arith.addf %6, %10 : vector<74x64xf32>
    %12 = vector.extract_strided_slice %2 {offsets = [2, 0], sizes = [74, 64], strides = [1, 1]} : vector<80x64xbf16> to vector<74x64xbf16>
    %c2 = arith.constant 2 : index
    %c0_8 = arith.constant 0 : index
    %c0_9 = arith.constant 0 : index
    %13 = vector.load %arg2[%c2, %c0_8, %c0_9] : memref<7x64x64xbf16, #tpu.memory_space<vmem>>, vector<1x64x64xbf16>
    %14 = vector.shape_cast %13 : vector<1x64x64xbf16> to vector<64x64xbf16>
    %cst_10 = arith.constant dense<0.000000e+00> : vector<74x64xf32>
    %15 = tpu.matmul %12, %14, %cst_10 {dimension_numbers = #tpu.dot_dimension_numbers<[1], [0], [0], [1], [0, 0, 1, 1], [], []>} : vector<74x64xbf16>, vector<64x64xbf16>, vector<74x64xf32> -> vector<74x64xf32>
    %16 = arith.addf %11, %15 : vector<74x64xf32>
    %17 = vector.extract_strided_slice %2 {offsets = [3, 0], sizes = [74, 64], strides = [1, 1]} : vector<80x64xbf16> to vector<74x64xbf16>
    %c3 = arith.constant 3 : index
    %c0_11 = arith.constant 0 : index
    %c0_12 = arith.constant 0 : index
    %18 = vector.load %arg2[%c3, %c0_11, %c0_12] : memref<7x64x64xbf16, #tpu.memory_space<vmem>>, vector<1x64x64xbf16>
    %19 = vector.shape_cast %18 : vector<1x64x64xbf16> to vector<64x64xbf16>
    %cst_13 = arith.constant dense<0.000000e+00> : vector<74x64xf32>
    %20 = tpu.matmul %17, %19, %cst_13 {dimension_numbers = #tpu.dot_dimension_numbers<[1], [0], [0], [1], [0, 0, 1, 1], [], []>} : vector<74x64xbf16>, vector<64x64xbf16>, vector<74x64xf32> -> vector<74x64xf32>
    %21 = arith.addf %16, %20 : vector<74x64xf32>
    %22 = vector.extract_strided_slice %2 {offsets = [4, 0], sizes = [74, 64], strides = [1, 1]} : vector<80x64xbf16> to vector<74x64xbf16>
    %c4 = arith.constant 4 : index
    %c0_14 = arith.constant 0 : index
    %c0_15 = arith.constant 0 : index
    %23 = vector.load %arg2[%c4, %c0_14, %c0_15] : memref<7x64x64xbf16, #tpu.memory_space<vmem>>, vector<1x64x64xbf16>
    %24 = vector.shape_cast %23 : vector<1x64x64xbf16> to vector<64x64xbf16>
    %cst_16 = arith.constant dense<0.000000e+00> : vector<74x64xf32>
    %25 = tpu.matmul %22, %24, %cst_16 {dimension_numbers = #tpu.dot_dimension_numbers<[1], [0], [0], [1], [0, 0, 1, 1], [], []>} : vector<74x64xbf16>, vector<64x64xbf16>, vector<74x64xf32> -> vector<74x64xf32>
    %26 = arith.addf %21, %25 : vector<74x64xf32>
    %27 = vector.extract_strided_slice %2 {offsets = [5, 0], sizes = [74, 64], strides = [1, 1]} : vector<80x64xbf16> to vector<74x64xbf16>
    %c5 = arith.constant 5 : index
    %c0_17 = arith.constant 0 : index
    %c0_18 = arith.constant 0 : index
    %28 = vector.load %arg2[%c5, %c0_17, %c0_18] : memref<7x64x64xbf16, #tpu.memory_space<vmem>>, vector<1x64x64xbf16>
    %29 = vector.shape_cast %28 : vector<1x64x64xbf16> to vector<64x64xbf16>
    %cst_19 = arith.constant dense<0.000000e+00> : vector<74x64xf32>
    %30 = tpu.matmul %27, %29, %cst_19 {dimension_numbers = #tpu.dot_dimension_numbers<[1], [0], [0], [1], [0, 0, 1, 1], [], []>} : vector<74x64xbf16>, vector<64x64xbf16>, vector<74x64xf32> -> vector<74x64xf32>
    %31 = arith.addf %26, %30 : vector<74x64xf32>
    %32 = vector.extract_strided_slice %2 {offsets = [6, 0], sizes = [74, 64], strides = [1, 1]} : vector<80x64xbf16> to vector<74x64xbf16>
    %c6 = arith.constant 6 : index
    %c0_20 = arith.constant 0 : index
    %c0_21 = arith.constant 0 : index
    %33 = vector.load %arg2[%c6, %c0_20, %c0_21] : memref<7x64x64xbf16, #tpu.memory_space<vmem>>, vector<1x64x64xbf16>
    %34 = vector.shape_cast %33 : vector<1x64x64xbf16> to vector<64x64xbf16>
    %cst_22 = arith.constant dense<0.000000e+00> : vector<74x64xf32>
    %35 = tpu.matmul %32, %34, %cst_22 {dimension_numbers = #tpu.dot_dimension_numbers<[1], [0], [0], [1], [0, 0, 1, 1], [], []>} : vector<74x64xbf16>, vector<64x64xbf16>, vector<74x64xf32> -> vector<74x64xf32>
    %36 = arith.addf %31, %35 : vector<74x64xf32>
    %c0_23 = arith.constant 0 : index
    %c0_24 = arith.constant 0 : index
    %37 = vector.load %arg3[%c0_23, %c0_24] : memref<1x64xf32, #tpu.memory_space<vmem>>, vector<1x64xf32>
    %38 = vector.broadcast %37 : vector<1x64xf32> to vector<74x64xf32>
    %39 = arith.addf %36, %38 : vector<74x64xf32>
    %cst_25 = arith.constant 0.000000e+00 : f32
    %40 = vector.broadcast %cst_25 : f32 to vector<74x64xf32>
    %41 = arith.cmpf oge, %39, %40 : vector<74x64xf32>
    %cst_26 = arith.constant 1.000000e-01 : f32
    %42 = vector.broadcast %cst_26 : f32 to vector<74x64xf32>
    %43 = arith.mulf %42, %39 : vector<74x64xf32>
    %44 = arith.select %41, %39, %43 : vector<74x64xi1>, vector<74x64xf32>
    %45 = tpu.iota {dimensions = array<i32: 0>} : vector<74x1xi32>
    %c-5_i32 = arith.constant -5 : i32
    %46 = arith.addi %0, %c-5_i32 : i32
    %47 = vector.broadcast %46 : i32 to vector<74x1xi32>
    %48 = arith.addi %45, %47 : vector<74x1xi32>
    %c0_i32 = arith.constant 0 : i32
    %49 = vector.broadcast %c0_i32 : i32 to vector<74x1xi32>
    %50 = arith.cmpi sge, %48, %49 : vector<74x1xi32>
    %c8_i32 = arith.constant 8 : i32
    %51 = vector.broadcast %c8_i32 : i32 to vector<74x1xi32>
    %52 = arith.cmpi slt, %48, %51 : vector<74x1xi32>
    %53 = arith.andi %50, %52 : vector<74x1xi1>
    %cst_27 = arith.constant 0.000000e+00 : f32
    %54 = vector.shape_cast %53 : vector<74x1xi1> to vector<74x1xi1>
    %55 = vector.broadcast %54 : vector<74x1xi1> to vector<74x64xi1>
    %56 = vector.broadcast %cst_27 : f32 to vector<74x64xf32>
    %57 = arith.select %55, %44, %56 : vector<74x64xi1>, vector<74x64xf32>
    %58 = arith.truncf %57 : vector<74x64xf32> to vector<74x64xbf16>
    %59 = vector.extract_strided_slice %58 {offsets = [0, 0], sizes = [72, 64], strides = [1, 1]} : vector<74x64xbf16> to vector<72x64xbf16>
    %c0_28 = arith.constant 0 : index
    %c0_29 = arith.constant 0 : index
    %c0_30 = arith.constant 0 : index
    %60 = vector.load %arg4[%c0_28, %c0_29, %c0_30] : memref<3x64x64xbf16, #tpu.memory_space<vmem>>, vector<1x64x64xbf16>
    %61 = vector.shape_cast %60 : vector<1x64x64xbf16> to vector<64x64xbf16>
    %cst_31 = arith.constant dense<0.000000e+00> : vector<72x64xf32>
    %62 = tpu.matmul %59, %61, %cst_31 {dimension_numbers = #tpu.dot_dimension_numbers<[1], [0], [0], [1], [0, 0, 1, 1], [], []>} : vector<72x64xbf16>, vector<64x64xbf16>, vector<72x64xf32> -> vector<72x64xf32>
    %63 = vector.extract_strided_slice %58 {offsets = [1, 0], sizes = [72, 64], strides = [1, 1]} : vector<74x64xbf16> to vector<72x64xbf16>
    %c1_32 = arith.constant 1 : index
    %c0_33 = arith.constant 0 : index
    %c0_34 = arith.constant 0 : index
    %64 = vector.load %arg4[%c1_32, %c0_33, %c0_34] : memref<3x64x64xbf16, #tpu.memory_space<vmem>>, vector<1x64x64xbf16>
    %65 = vector.shape_cast %64 : vector<1x64x64xbf16> to vector<64x64xbf16>
    %cst_35 = arith.constant dense<0.000000e+00> : vector<72x64xf32>
    %66 = tpu.matmul %63, %65, %cst_35 {dimension_numbers = #tpu.dot_dimension_numbers<[1], [0], [0], [1], [0, 0, 1, 1], [], []>} : vector<72x64xbf16>, vector<64x64xbf16>, vector<72x64xf32> -> vector<72x64xf32>
    %67 = arith.addf %62, %66 : vector<72x64xf32>
    %68 = vector.extract_strided_slice %58 {offsets = [2, 0], sizes = [72, 64], strides = [1, 1]} : vector<74x64xbf16> to vector<72x64xbf16>
    %c2_36 = arith.constant 2 : index
    %c0_37 = arith.constant 0 : index
    %c0_38 = arith.constant 0 : index
    %69 = vector.load %arg4[%c2_36, %c0_37, %c0_38] : memref<3x64x64xbf16, #tpu.memory_space<vmem>>, vector<1x64x64xbf16>
    %70 = vector.shape_cast %69 : vector<1x64x64xbf16> to vector<64x64xbf16>
    %cst_39 = arith.constant dense<0.000000e+00> : vector<72x64xf32>
    %71 = tpu.matmul %68, %70, %cst_39 {dimension_numbers = #tpu.dot_dimension_numbers<[1], [0], [0], [1], [0, 0, 1, 1], [], []>} : vector<72x64xbf16>, vector<64x64xbf16>, vector<72x64xf32> -> vector<72x64xf32>
    %72 = arith.addf %67, %71 : vector<72x64xf32>
    %c0_40 = arith.constant 0 : index
    %c0_41 = arith.constant 0 : index
    %73 = vector.load %arg5[%c0_40, %c0_41] : memref<1x64xf32, #tpu.memory_space<vmem>>, vector<1x64xf32>
    %74 = vector.broadcast %73 : vector<1x64xf32> to vector<72x64xf32>
    %75 = arith.addf %72, %74 : vector<72x64xf32>
    %76 = tpu.iota {dimensions = array<i32: 0>} : vector<72x1xi32>
    %c-4_i32 = arith.constant -4 : i32
    %77 = arith.addi %0, %c-4_i32 : i32
    %78 = vector.broadcast %77 : i32 to vector<72x1xi32>
    %79 = arith.addi %76, %78 : vector<72x1xi32>
    %c0_i32_42 = arith.constant 0 : i32
    %80 = vector.broadcast %c0_i32_42 : i32 to vector<72x1xi32>
    %81 = arith.cmpi sge, %79, %80 : vector<72x1xi32>
    %c8_i32_43 = arith.constant 8 : i32
    %82 = vector.broadcast %c8_i32_43 : i32 to vector<72x1xi32>
    %83 = arith.cmpi slt, %79, %82 : vector<72x1xi32>
    %84 = arith.andi %81, %83 : vector<72x1xi1>
    %cst_44 = arith.constant 0.000000e+00 : f32
    %85 = vector.shape_cast %84 : vector<72x1xi1> to vector<72x1xi1>
    %86 = vector.broadcast %85 : vector<72x1xi1> to vector<72x64xi1>
    %87 = vector.broadcast %cst_44 : f32 to vector<72x64xf32>
    %88 = arith.select %86, %75, %87 : vector<72x64xi1>, vector<72x64xf32>
    %cst_45 = arith.constant 0.000000e+00 : f32
    %89 = vector.broadcast %cst_45 : f32 to vector<72x64xf32>
    %90 = arith.cmpf oge, %88, %89 : vector<72x64xf32>
    %cst_46 = arith.constant 1.000000e-01 : f32
    %91 = vector.broadcast %cst_46 : f32 to vector<72x64xf32>
    %92 = arith.mulf %91, %88 : vector<72x64xf32>
    %93 = arith.select %90, %88, %92 : vector<72x64xi1>, vector<72x64xf32>
    %94 = arith.truncf %93 : vector<72x64xf32> to vector<72x64xbf16>
    %95 = vector.extract_strided_slice %94 {offsets = [0, 0], sizes = [70, 64], strides = [1, 1]} : vector<72x64xbf16> to vector<70x64xbf16>
    %c0_47 = arith.constant 0 : index
    %c0_48 = arith.constant 0 : index
    %c0_49 = arith.constant 0 : index
    %96 = vector.load %arg6[%c0_47, %c0_48, %c0_49] : memref<3x64x128xbf16, #tpu.memory_space<vmem>>, vector<1x64x128xbf16>
    %97 = vector.shape_cast %96 : vector<1x64x128xbf16> to vector<64x128xbf16>
    %cst_50 = arith.constant dense<0.000000e+00> : vector<70x128xf32>
    %98 = tpu.matmul %95, %97, %cst_50 {dimension_numbers = #tpu.dot_dimension_numbers<[1], [0], [0], [1], [0, 0, 1, 1], [], []>} : vector<70x64xbf16>, vector<64x128xbf16>, vector<70x128xf32> -> vector<70x128xf32>
    %99 = vector.extract_strided_slice %94 {offsets = [1, 0], sizes = [70, 64], strides = [1, 1]} : vector<72x64xbf16> to vector<70x64xbf16>
    %c1_51 = arith.constant 1 : index
    %c0_52 = arith.constant 0 : index
    %c0_53 = arith.constant 0 : index
    %100 = vector.load %arg6[%c1_51, %c0_52, %c0_53] : memref<3x64x128xbf16, #tpu.memory_space<vmem>>, vector<1x64x128xbf16>
    %101 = vector.shape_cast %100 : vector<1x64x128xbf16> to vector<64x128xbf16>
    %cst_54 = arith.constant dense<0.000000e+00> : vector<70x128xf32>
    %102 = tpu.matmul %99, %101, %cst_54 {dimension_numbers = #tpu.dot_dimension_numbers<[1], [0], [0], [1], [0, 0, 1, 1], [], []>} : vector<70x64xbf16>, vector<64x128xbf16>, vector<70x128xf32> -> vector<70x128xf32>
    %103 = arith.addf %98, %102 : vector<70x128xf32>
    %104 = vector.extract_strided_slice %94 {offsets = [2, 0], sizes = [70, 64], strides = [1, 1]} : vector<72x64xbf16> to vector<70x64xbf16>
    %c2_55 = arith.constant 2 : index
    %c0_56 = arith.constant 0 : index
    %c0_57 = arith.constant 0 : index
    %105 = vector.load %arg6[%c2_55, %c0_56, %c0_57] : memref<3x64x128xbf16, #tpu.memory_space<vmem>>, vector<1x64x128xbf16>
    %106 = vector.shape_cast %105 : vector<1x64x128xbf16> to vector<64x128xbf16>
    %cst_58 = arith.constant dense<0.000000e+00> : vector<70x128xf32>
    %107 = tpu.matmul %104, %106, %cst_58 {dimension_numbers = #tpu.dot_dimension_numbers<[1], [0], [0], [1], [0, 0, 1, 1], [], []>} : vector<70x64xbf16>, vector<64x128xbf16>, vector<70x128xf32> -> vector<70x128xf32>
    %108 = arith.addf %103, %107 : vector<70x128xf32>
    %c0_59 = arith.constant 0 : index
    %c0_60 = arith.constant 0 : index
    %109 = vector.load %arg7[%c0_59, %c0_60] : memref<1x128xf32, #tpu.memory_space<vmem>>, vector<1x128xf32>
    %110 = vector.broadcast %109 : vector<1x128xf32> to vector<70x128xf32>
    %111 = arith.addf %108, %110 : vector<70x128xf32>
    %112 = tpu.iota {dimensions = array<i32: 0>} : vector<70x1xi32>
    %c-3_i32 = arith.constant -3 : i32
    %113 = arith.addi %0, %c-3_i32 : i32
    %114 = vector.broadcast %113 : i32 to vector<70x1xi32>
    %115 = arith.addi %112, %114 : vector<70x1xi32>
    %c0_i32_61 = arith.constant 0 : i32
    %116 = vector.broadcast %c0_i32_61 : i32 to vector<70x1xi32>
    %117 = arith.cmpi sge, %115, %116 : vector<70x1xi32>
    %c8_i32_62 = arith.constant 8 : i32
    %118 = vector.broadcast %c8_i32_62 : i32 to vector<70x1xi32>
    %119 = arith.cmpi slt, %115, %118 : vector<70x1xi32>
    %120 = arith.andi %117, %119 : vector<70x1xi1>
    %cst_63 = arith.constant 0.000000e+00 : f32
    %121 = vector.shape_cast %120 : vector<70x1xi1> to vector<70x1xi1>
    %122 = vector.broadcast %121 : vector<70x1xi1> to vector<70x128xi1>
    %123 = vector.broadcast %cst_63 : f32 to vector<70x128xf32>
    %124 = arith.select %122, %111, %123 : vector<70x128xi1>, vector<70x128xf32>
    %cst_64 = arith.constant 0.000000e+00 : f32
    %125 = vector.broadcast %cst_64 : f32 to vector<70x128xf32>
    %126 = arith.cmpf oge, %124, %125 : vector<70x128xf32>
    %cst_65 = arith.constant 1.000000e-01 : f32
    %127 = vector.broadcast %cst_65 : f32 to vector<70x128xf32>
    %128 = arith.mulf %127, %124 : vector<70x128xf32>
    %129 = arith.select %126, %124, %128 : vector<70x128xi1>, vector<70x128xf32>
    %130 = arith.truncf %129 : vector<70x128xf32> to vector<70x128xbf16>
    %131 = vector.extract_strided_slice %130 {offsets = [0, 0], sizes = [68, 128], strides = [1, 1]} : vector<70x128xbf16> to vector<68x128xbf16>
    %c0_66 = arith.constant 0 : index
    %c0_67 = arith.constant 0 : index
    %c0_68 = arith.constant 0 : index
    %132 = vector.load %arg8[%c0_66, %c0_67, %c0_68] : memref<3x128x64xbf16, #tpu.memory_space<vmem>>, vector<1x128x64xbf16>
    %133 = vector.shape_cast %132 : vector<1x128x64xbf16> to vector<128x64xbf16>
    %cst_69 = arith.constant dense<0.000000e+00> : vector<68x64xf32>
    %134 = tpu.matmul %131, %133, %cst_69 {dimension_numbers = #tpu.dot_dimension_numbers<[1], [0], [0], [1], [0, 0, 1, 1], [], []>} : vector<68x128xbf16>, vector<128x64xbf16>, vector<68x64xf32> -> vector<68x64xf32>
    %135 = vector.extract_strided_slice %130 {offsets = [1, 0], sizes = [68, 128], strides = [1, 1]} : vector<70x128xbf16> to vector<68x128xbf16>
    %c1_70 = arith.constant 1 : index
    %c0_71 = arith.constant 0 : index
    %c0_72 = arith.constant 0 : index
    %136 = vector.load %arg8[%c1_70, %c0_71, %c0_72] : memref<3x128x64xbf16, #tpu.memory_space<vmem>>, vector<1x128x64xbf16>
    %137 = vector.shape_cast %136 : vector<1x128x64xbf16> to vector<128x64xbf16>
    %cst_73 = arith.constant dense<0.000000e+00> : vector<68x64xf32>
    %138 = tpu.matmul %135, %137, %cst_73 {dimension_numbers = #tpu.dot_dimension_numbers<[1], [0], [0], [1], [0, 0, 1, 1], [], []>} : vector<68x128xbf16>, vector<128x64xbf16>, vector<68x64xf32> -> vector<68x64xf32>
    %139 = arith.addf %134, %138 : vector<68x64xf32>
    %140 = vector.extract_strided_slice %130 {offsets = [2, 0], sizes = [68, 128], strides = [1, 1]} : vector<70x128xbf16> to vector<68x128xbf16>
    %c2_74 = arith.constant 2 : index
    %c0_75 = arith.constant 0 : index
    %c0_76 = arith.constant 0 : index
    %141 = vector.load %arg8[%c2_74, %c0_75, %c0_76] : memref<3x128x64xbf16, #tpu.memory_space<vmem>>, vector<1x128x64xbf16>
    %142 = vector.shape_cast %141 : vector<1x128x64xbf16> to vector<128x64xbf16>
    %cst_77 = arith.constant dense<0.000000e+00> : vector<68x64xf32>
    %143 = tpu.matmul %140, %142, %cst_77 {dimension_numbers = #tpu.dot_dimension_numbers<[1], [0], [0], [1], [0, 0, 1, 1], [], []>} : vector<68x128xbf16>, vector<128x64xbf16>, vector<68x64xf32> -> vector<68x64xf32>
    %144 = arith.addf %139, %143 : vector<68x64xf32>
    %c0_78 = arith.constant 0 : index
    %c0_79 = arith.constant 0 : index
    %145 = vector.load %arg9[%c0_78, %c0_79] : memref<1x64xf32, #tpu.memory_space<vmem>>, vector<1x64xf32>
    %146 = vector.broadcast %145 : vector<1x64xf32> to vector<68x64xf32>
    %147 = arith.addf %144, %146 : vector<68x64xf32>
    %148 = vector.extract_strided_slice %88 {offsets = [2, 0], sizes = [68, 64], strides = [1, 1]} : vector<72x64xf32> to vector<68x64xf32>
    %cst_80 = arith.constant 5.000000e-01 : f32
    %149 = vector.broadcast %cst_80 : f32 to vector<68x64xf32>
    %150 = arith.mulf %149, %147 : vector<68x64xf32>
    %151 = arith.addf %148, %150 : vector<68x64xf32>
    %152 = tpu.iota {dimensions = array<i32: 0>} : vector<68x1xi32>
    %c-2_i32 = arith.constant -2 : i32
    %153 = arith.addi %0, %c-2_i32 : i32
    %154 = vector.broadcast %153 : i32 to vector<68x1xi32>
    %155 = arith.addi %152, %154 : vector<68x1xi32>
    %c0_i32_81 = arith.constant 0 : i32
    %156 = vector.broadcast %c0_i32_81 : i32 to vector<68x1xi32>
    %157 = arith.cmpi sge, %155, %156 : vector<68x1xi32>
    %c8_i32_82 = arith.constant 8 : i32
    %158 = vector.broadcast %c8_i32_82 : i32 to vector<68x1xi32>
    %159 = arith.cmpi slt, %155, %158 : vector<68x1xi32>
    %160 = arith.andi %157, %159 : vector<68x1xi1>
    %cst_83 = arith.constant 0.000000e+00 : f32
    %161 = vector.shape_cast %160 : vector<68x1xi1> to vector<68x1xi1>
    %162 = vector.broadcast %161 : vector<68x1xi1> to vector<68x64xi1>
    %163 = vector.broadcast %cst_83 : f32 to vector<68x64xf32>
    %164 = arith.select %162, %151, %163 : vector<68x64xi1>, vector<68x64xf32>
    %cst_84 = arith.constant 0.000000e+00 : f32
    %165 = vector.broadcast %cst_84 : f32 to vector<68x64xf32>
    %166 = arith.cmpf oge, %164, %165 : vector<68x64xf32>
    %cst_85 = arith.constant 1.000000e-01 : f32
    %167 = vector.broadcast %cst_85 : f32 to vector<68x64xf32>
    %168 = arith.mulf %167, %164 : vector<68x64xf32>
    %169 = arith.select %166, %164, %168 : vector<68x64xi1>, vector<68x64xf32>
    %170 = arith.truncf %169 : vector<68x64xf32> to vector<68x64xbf16>
    %171 = vector.extract_strided_slice %170 {offsets = [0, 0], sizes = [64, 64], strides = [1, 1]} : vector<68x64xbf16> to vector<64x64xbf16>
    %c0_86 = arith.constant 0 : index
    %c0_87 = arith.constant 0 : index
    %c0_88 = arith.constant 0 : index
    %172 = vector.load %arg10[%c0_86, %c0_87, %c0_88] : memref<5x64x2xbf16, #tpu.memory_space<vmem>>, vector<1x64x2xbf16>
    %173 = vector.shape_cast %172 : vector<1x64x2xbf16> to vector<64x2xbf16>
    %cst_89 = arith.constant dense<0.000000e+00> : vector<64x2xf32>
    %174 = tpu.matmul %171, %173, %cst_89 {dimension_numbers = #tpu.dot_dimension_numbers<[1], [0], [0], [1], [0, 0, 1, 1], [], []>} : vector<64x64xbf16>, vector<64x2xbf16>, vector<64x2xf32> -> vector<64x2xf32>
    %175 = vector.extract_strided_slice %170 {offsets = [1, 0], sizes = [64, 64], strides = [1, 1]} : vector<68x64xbf16> to vector<64x64xbf16>
    %c1_90 = arith.constant 1 : index
    %c0_91 = arith.constant 0 : index
    %c0_92 = arith.constant 0 : index
    %176 = vector.load %arg10[%c1_90, %c0_91, %c0_92] : memref<5x64x2xbf16, #tpu.memory_space<vmem>>, vector<1x64x2xbf16>
    %177 = vector.shape_cast %176 : vector<1x64x2xbf16> to vector<64x2xbf16>
    %cst_93 = arith.constant dense<0.000000e+00> : vector<64x2xf32>
    %178 = tpu.matmul %175, %177, %cst_93 {dimension_numbers = #tpu.dot_dimension_numbers<[1], [0], [0], [1], [0, 0, 1, 1], [], []>} : vector<64x64xbf16>, vector<64x2xbf16>, vector<64x2xf32> -> vector<64x2xf32>
    %179 = arith.addf %174, %178 : vector<64x2xf32>
    %180 = vector.extract_strided_slice %170 {offsets = [2, 0], sizes = [64, 64], strides = [1, 1]} : vector<68x64xbf16> to vector<64x64xbf16>
    %c2_94 = arith.constant 2 : index
    %c0_95 = arith.constant 0 : index
    %c0_96 = arith.constant 0 : index
    %181 = vector.load %arg10[%c2_94, %c0_95, %c0_96] : memref<5x64x2xbf16, #tpu.memory_space<vmem>>, vector<1x64x2xbf16>
    %182 = vector.shape_cast %181 : vector<1x64x2xbf16> to vector<64x2xbf16>
    %cst_97 = arith.constant dense<0.000000e+00> : vector<64x2xf32>
    %183 = tpu.matmul %180, %182, %cst_97 {dimension_numbers = #tpu.dot_dimension_numbers<[1], [0], [0], [1], [0, 0, 1, 1], [], []>} : vector<64x64xbf16>, vector<64x2xbf16>, vector<64x2xf32> -> vector<64x2xf32>
    %184 = arith.addf %179, %183 : vector<64x2xf32>
    %185 = vector.extract_strided_slice %170 {offsets = [3, 0], sizes = [64, 64], strides = [1, 1]} : vector<68x64xbf16> to vector<64x64xbf16>
    %c3_98 = arith.constant 3 : index
    %c0_99 = arith.constant 0 : index
    %c0_100 = arith.constant 0 : index
    %186 = vector.load %arg10[%c3_98, %c0_99, %c0_100] : memref<5x64x2xbf16, #tpu.memory_space<vmem>>, vector<1x64x2xbf16>
    %187 = vector.shape_cast %186 : vector<1x64x2xbf16> to vector<64x2xbf16>
    %cst_101 = arith.constant dense<0.000000e+00> : vector<64x2xf32>
    %188 = tpu.matmul %185, %187, %cst_101 {dimension_numbers = #tpu.dot_dimension_numbers<[1], [0], [0], [1], [0, 0, 1, 1], [], []>} : vector<64x64xbf16>, vector<64x2xbf16>, vector<64x2xf32> -> vector<64x2xf32>
    %189 = arith.addf %184, %188 : vector<64x2xf32>
    %190 = vector.extract_strided_slice %170 {offsets = [4, 0], sizes = [64, 64], strides = [1, 1]} : vector<68x64xbf16> to vector<64x64xbf16>
    %c4_102 = arith.constant 4 : index
    %c0_103 = arith.constant 0 : index
    %c0_104 = arith.constant 0 : index
    %191 = vector.load %arg10[%c4_102, %c0_103, %c0_104] : memref<5x64x2xbf16, #tpu.memory_space<vmem>>, vector<1x64x2xbf16>
    %192 = vector.shape_cast %191 : vector<1x64x2xbf16> to vector<64x2xbf16>
    %cst_105 = arith.constant dense<0.000000e+00> : vector<64x2xf32>
    %193 = tpu.matmul %190, %192, %cst_105 {dimension_numbers = #tpu.dot_dimension_numbers<[1], [0], [0], [1], [0, 0, 1, 1], [], []>} : vector<64x64xbf16>, vector<64x2xbf16>, vector<64x2xf32> -> vector<64x2xf32>
    %194 = arith.addf %189, %193 : vector<64x2xf32>
    %c0_106 = arith.constant 0 : index
    %c0_107 = arith.constant 0 : index
    %195 = vector.load %arg11[%c0_106, %c0_107] : memref<1x2xf32, #tpu.memory_space<vmem>>, vector<1x2xf32>
    %196 = vector.broadcast %195 : vector<1x2xf32> to vector<64x2xf32>
    %197 = arith.addf %194, %196 : vector<64x2xf32>
    %198 = math.tanh %197 : vector<64x2xf32>
    %c0_108 = arith.constant 0 : index
    %c0_109 = arith.constant 0 : index
    %c0_110 = arith.constant 0 : index
    %199 = vector.load %arg12[%c0_108, %c0_109, %c0_110] : memref<1x64x2xf32, #tpu.memory_space<vmem>>, vector<1x64x2xf32>
    %200 = vector.shape_cast %199 : vector<1x64x2xf32> to vector<64x2xf32>
    %201 = vector.shape_cast %198 : vector<64x2xf32> to vector<1x64x2xf32>
    tpu.vector_store %arg12[%c0_108, %c0_109, %c0_110], %201 {strides = array<i32>} : memref<1x64x2xf32, #tpu.memory_space<vmem>>, vector<1x64x2xf32>,
    return
  }
  func.func @transform_0(%arg0: i32) -> (i32, i32, i32) {
    %c0_i32 = arith.constant 0 : i32
    %c0_i32_0 = arith.constant 0 : i32
    %c0_i32_1 = arith.constant 0 : i32
    return %arg0, %c0_i32, %c0_i32_0 : i32, i32, i32
  }
  func.func @transform_1(%arg0: i32) -> (i32, i32, i32) {
    %c0_i32 = arith.constant 0 : i32
    %c0_i32_0 = arith.constant 0 : i32
    %c0_i32_1 = arith.constant 0 : i32
    %c0_i32_2 = arith.constant 0 : i32
    return %c0_i32, %c0_i32_0, %c0_i32_1 : i32, i32, i32
  }
  func.func @transform_2(%arg0: i32) -> (i32, i32) {
    %c0_i32 = arith.constant 0 : i32
    %c0_i32_0 = arith.constant 0 : i32
    %c0_i32_1 = arith.constant 0 : i32
    return %c0_i32, %c0_i32_0 : i32, i32
  }
  func.func @transform_3(%arg0: i32) -> (i32, i32, i32) {
    %c0_i32 = arith.constant 0 : i32
    %c0_i32_0 = arith.constant 0 : i32
    %c0_i32_1 = arith.constant 0 : i32
    %c0_i32_2 = arith.constant 0 : i32
    return %c0_i32, %c0_i32_0, %c0_i32_1 : i32, i32, i32
  }
  func.func @transform_4(%arg0: i32) -> (i32, i32) {
    %c0_i32 = arith.constant 0 : i32
    %c0_i32_0 = arith.constant 0 : i32
    %c0_i32_1 = arith.constant 0 : i32
    return %c0_i32, %c0_i32_0 : i32, i32
  }
  func.func @transform_5(%arg0: i32) -> (i32, i32, i32) {
    %c0_i32 = arith.constant 0 : i32
    %c0_i32_0 = arith.constant 0 : i32
    %c0_i32_1 = arith.constant 0 : i32
    %c0_i32_2 = arith.constant 0 : i32
    return %c0_i32, %c0_i32_0, %c0_i32_1 : i32, i32, i32
  }
  func.func @transform_6(%arg0: i32) -> (i32, i32) {
    %c0_i32 = arith.constant 0 : i32
    %c0_i32_0 = arith.constant 0 : i32
    %c0_i32_1 = arith.constant 0 : i32
    return %c0_i32, %c0_i32_0 : i32, i32
  }
  func.func @transform_7(%arg0: i32) -> (i32, i32, i32) {
    %c0_i32 = arith.constant 0 : i32
    %c0_i32_0 = arith.constant 0 : i32
    %c0_i32_1 = arith.constant 0 : i32
    %c0_i32_2 = arith.constant 0 : i32
    return %c0_i32, %c0_i32_0, %c0_i32_1 : i32, i32, i32
  }
  func.func @transform_8(%arg0: i32) -> (i32, i32) {
    %c0_i32 = arith.constant 0 : i32
    %c0_i32_0 = arith.constant 0 : i32
    %c0_i32_1 = arith.constant 0 : i32
    return %c0_i32, %c0_i32_0 : i32, i32
  }
  func.func @transform_9(%arg0: i32) -> (i32, i32, i32) {
    %c0_i32 = arith.constant 0 : i32
    %c0_i32_0 = arith.constant 0 : i32
    %c0_i32_1 = arith.constant 0 : i32
    %c0_i32_2 = arith.constant 0 : i32
    return %c0_i32, %c0_i32_0, %c0_i32_1 : i32, i32, i32
  }
  func.func @transform_10(%arg0: i32) -> (i32, i32) {
    %c0_i32 = arith.constant 0 : i32
    %c0_i32_0 = arith.constant 0 : i32
    %c0_i32_1 = arith.constant 0 : i32
    return %c0_i32, %c0_i32_0 : i32, i32
  }
  func.func @transform_11(%arg0: i32) -> (i32, i32, i32) {
    %c0_i32 = arith.constant 0 : i32
    %c0_i32_0 = arith.constant 0 : i32
    %c0_i32_1 = arith.constant 0 : i32
    return %arg0, %c0_i32, %c0_i32_0 : i32, i32, i32
  }
}

</mosaic_0001>

<llo_original>
// kernel: tpu_custom_call.1
$region0: #{tpu_custom_call.1}
  #allocation0 [shape = 'u32[]', space=smem, size = 0x4, offset = 0x4, fixed_abs, tag = 'smem constant byte address 0x4 - core index']
  #allocation1 [shape = 'u32[144,128]{1,0:T(1,128)}', space=vmem, size = 0x12000, scoped, tag = 'internal scratch']
  %s0 = inlined_call_operand.hbm [shape: f32[8,128], index: 0, kind: input, shape index: {}]
  %s1 = inlined_call_operand.hbm [shape: f32[8,128], index: 1, kind: output, shape index: {}]
  %s2 = sld [smem:[#allocation0]]
  $region26: #{tpu_custom_call.1} parent=0
    _
  %s4 = ssub.s32 1, %s2
  %s5 = scalar_select 0, %s4, %s2
  $region1: #{tpu_custom_call.1} parent=0
    #allocation2 [shape = 'u8[4096]{0}', space=vmem, size = 0x1000, scoped, tag = 'input window, operand 0, single buffered']
    #allocation3 [shape = 's32[1]{0}', space=sflag, size = 0x4, scoped, tag = 'scoped memory for tpu_custom_call.1']
    #allocation4 [shape = 's32[1]{0}', space=sflag, size = 0x4, scoped, tag = 'scoped memory for tpu_custom_call.1']
    #allocation5 [shape = 'u8[4096]{0}', space=vmem, size = 0x1000, scoped, tag = 'output window, operand 0, single buffered']
    %6 = vsyncpa [#allocation3], 0
    %7 = vsyncpa [#allocation4], 0
    // Predicated region
    $region2: #{tpu_custom_call.1} parent=1 // pred_check
      _
    $region3: #{tpu_custom_call.1} parent=1 // pred_check_branch
      %9 = sbr.rel (0) target = $region5
    $region4: #{tpu_custom_call.1} parent=1 // pred_region
      %s11 = ssub.s32 128, 128
      %12 = vsyncadd [#allocation3], %s11
      %s14 = sshll.u32 [#allocation2], 4
      %s15 = int_to_ptr.vmem [resolvable:$true] %s14
      %17 = dma.hbm_to_vmem [thread:$0]  %s0, 128, %s15, [#allocation3]
    $region5: #{tpu_custom_call.1} parent=1 // pred_fallthru
      _
    // Predicated region
    $region6: #{tpu_custom_call.1} parent=1 // pred_check
      _
    $region7: #{tpu_custom_call.1} parent=1 // pred_check_branch
      %19 = sbr.rel (0) target = $region9
    $region8: #{tpu_custom_call.1} parent=1 // pred_region
      %20 = dma.done [#allocation3], 128
    $region9: #{tpu_custom_call.1} parent=1 // pred_fallthru
      _
    %p21 = scmp.lt.s32.totalorder 0, 1
    %v22 = vld [vmem:[#allocation2] sm:$0xff]
    // Predicated region
    $region10: #{tpu_custom_call.1} parent=1 // pred_check
      %p23 = pneg %p21
    $region11: #{tpu_custom_call.1} parent=1 // pred_check_branch
      %25 = sbr.rel (%p23) target = $region13
    $region12: #{tpu_custom_call.1} parent=1 // pred_region
      %v26 = vmul.f32 %v22, 2.0
    $region13: #{tpu_custom_call.1} parent=1 // pred_fallthru
      %v27 = vphi 0, %v26
    %p28 = pneg %p21
    // Predicated region
    $region14: #{tpu_custom_call.1} parent=1 // pred_check
      _
    $region15: #{tpu_custom_call.1} parent=1 // pred_check_branch
      %30 = sbr.rel (%p21) target = $region17
    $region16: #{tpu_custom_call.1} parent=1 // pred_region
      %v31 = vadd.f32 %v22, 1.0
    $region17: #{tpu_custom_call.1} parent=1 // pred_fallthru
      %v32 = vphi %v27, %v31
    %33 = vst [vmem:[#allocation5] sm:$0xff] %v32
    // Predicated region
    $region18: #{tpu_custom_call.1} parent=1 // pred_check
      _
    $region19: #{tpu_custom_call.1} parent=1 // pred_check_branch
      %35 = sbr.rel (0) target = $region21
    $region20: #{tpu_custom_call.1} parent=1 // pred_region
      %s37 = ssub.s32 128, 128
      %38 = vsyncadd [#allocation4], %s37
      %s40 = sshll.u32 [#allocation5], 4
      %s41 = int_to_ptr.vmem [resolvable:$true] %s40
      %43 = dma.vmem_to_hbm [thread:$0]  %s41, 128, %s1, [#allocation4]
    $region21: #{tpu_custom_call.1} parent=1 // pred_fallthru
      _
    // Predicated region
    $region22: #{tpu_custom_call.1} parent=1 // pred_check
      _
    $region23: #{tpu_custom_call.1} parent=1 // pred_check_branch
      %45 = sbr.rel (0) target = $region25
    $region24: #{tpu_custom_call.1} parent=1 // pred_region
      %46 = dma.done [#allocation4], 128
    $region25: #{tpu_custom_call.1} parent=1 // pred_fallthru
      _
    %47 = vsyncpa [#allocation3], 1
    %48 = vsyncpa [#allocation4], 1

// kernel: tpu_custom_call.1
$region0: #{tpu_custom_call.1}
  #allocation0 [shape = 'u32[]', space=smem, size = 0x4, offset = 0x4, fixed_abs, tag = 'smem constant byte address 0x4 - core index']
  #allocation1 [shape = 'u32[144,128]{1,0:T(1,128)}', space=vmem, size = 0x12000, scoped, tag = 'internal scratch']
  %s0 = inlined_call_operand.vmem [shape: bf16[1,80,64], index: 0, kind: input, shape index: {}]
  %s1 = inlined_call_operand.vmem [shape: bf16[7,64,64], index: 1, kind: input, shape index: {}]
  %s2 = inlined_call_operand.vmem [shape: f32[1,64], index: 2, kind: input, shape index: {}]
  %s3 = inlined_call_operand.vmem [shape: bf16[3,64,64], index: 3, kind: input, shape index: {}]
  %s4 = inlined_call_operand.vmem [shape: f32[1,64], index: 4, kind: input, shape index: {}]
  %s5 = inlined_call_operand.vmem [shape: bf16[3,64,128], index: 5, kind: input, shape index: {}]
  %s6 = inlined_call_operand.vmem [shape: f32[1,128], index: 6, kind: input, shape index: {}]
  %s7 = inlined_call_operand.vmem [shape: bf16[3,128,64], index: 7, kind: input, shape index: {}]
  %s8 = inlined_call_operand.vmem [shape: f32[1,64], index: 8, kind: input, shape index: {}]
  %s9 = inlined_call_operand.vmem [shape: bf16[5,64,2], index: 9, kind: input, shape index: {}]
  %s10 = inlined_call_operand.vmem [shape: f32[1,2], index: 10, kind: input, shape index: {}]
  %s11 = inlined_call_operand.vmem [shape: f32[1,64,2], index: 11, kind: output, shape index: {}]
  %s12 = sld [smem:[#allocation0]]
  $region54: #{tpu_custom_call.1} parent=0
    _
  %s14 = ssub.s32 1, %s12
  %s15 = scalar_select 0, %s14, %s12
  // Predicated region
  $region2: #{tpu_custom_call.1} parent=0 // pred_check
    _
  $region3: #{tpu_custom_call.1} parent=0 // pred_check_branch
    %17 = sbr.rel (0) target = $region5
  $region4: #{tpu_custom_call.1} parent=0 // pred_region
    _
  $region5: #{tpu_custom_call.1} parent=0 // pred_fallthru
    _
  // Predicated region
  $region6: #{tpu_custom_call.1} parent=0 // pred_check
    _
  $region7: #{tpu_custom_call.1} parent=0 // pred_check_branch
    %19 = sbr.rel (0) target = $region9
  $region8: #{tpu_custom_call.1} parent=0 // pred_region
    _
  $region9: #{tpu_custom_call.1} parent=0 // pred_fallthru
    _
  // Predicated region
  $region10: #{tpu_custom_call.1} parent=0 // pred_check
    _
  $region11: #{tpu_custom_call.1} parent=0 // pred_check_branch
    %21 = sbr.rel (0) target = $region13
  $region12: #{tpu_custom_call.1} parent=0 // pred_region
    _
  $region13: #{tpu_custom_call.1} parent=0 // pred_fallthru
    _
  // Predicated region
  $region14: #{tpu_custom_call.1} parent=0 // pred_check
    _
  $region15: #{tpu_custom_call.1} parent=0 // pred_check_branch
    %23 = sbr.rel (0) target = $region17
  $region16: #{tpu_custom_call.1} parent=0 // pred_region
    _
  $region17: #{tpu_custom_call.1} parent=0 // pred_fallthru
    _
  // Predicated region
  $region18: #{tpu_custom_call.1} parent=0 // pred_check
    _
  $region19: #{tpu_custom_call.1} parent=0 // pred_check_branch
    %25 = sbr.rel (0) target = $region21
  $region20: #{tpu_custom_call.1} parent=0 // pred_region
    _
  $region21: #{tpu_custom_call.1} parent=0 // pred_fallthru
    _
  // Predicated region
  $region22: #{tpu_custom_call.1} parent=0 // pred_check
    _
  $region23: #{tpu_custom_call.1} parent=0 // pred_check_branch
    %27 = sbr.rel (0) target = $region25
  $region24: #{tpu_custom_call.1} parent=0 // pred_region
    _
  $region25: #{tpu_custom_call.1} parent=0 // pred_fallthru
    _
  // Predicated region
  $region26: #{tpu_custom_call.1} parent=0 // pred_check
    _
  $region27: #{tpu_custom_call.1} parent=0 // pred_check_branch
    %29 = sbr.rel (0) target = $region29
  $region28: #{tpu_custom_call.1} parent=0 // pred_region
    _
  $region29: #{tpu_custom_call.1} parent=0 // pred_fallthru
    _
  // Predicated region
  $region30: #{tpu_custom_call.1} parent=0 // pred_check
    _
  $region31: #{tpu_custom_call.1} parent=0 // pred_check_branch
    %31 = sbr.rel (0) target = $region33
  $region32: #{tpu_custom_call.1} parent=0 // pred_region
    _
  $region33: #{tpu_custom_call.1} parent=0 // pred_fallthru
    _
  // Predicated region
  $region34: #{tpu_custom_call.1} parent=0 // pred_check
    _
  $region35: #{tpu_custom_call.1} parent=0 // pred_check_branch
    %33 = sbr.rel (0) target = $region37
  $region36: #{tpu_custom_call.1} parent=0 // pred_region
    _
  $region37: #{tpu_custom_call.1} parent=0 // pred_fallthru
    _
  // Predicated region
  $region38: #{tpu_custom_call.1} parent=0 // pred_check
    _
  $region39: #{tpu_custom_call.1} parent=0 // pred_check_branch
    %35 = sbr.rel (0) target = $region41
  $region40: #{tpu_custom_call.1} parent=0 // pred_region
    _
  $region41: #{tpu_custom_call.1} parent=0 // pred_fallthru
    _
  // Predicated region
  $region42: #{tpu_custom_call.1} parent=0 // pred_check
    _
  $region43: #{tpu_custom_call.1} parent=0 // pred_check_branch
    %37 = sbr.rel (0) target = $region45
  $region44: #{tpu_custom_call.1} parent=0 // pred_region
    _
  $region45: #{tpu_custom_call.1} parent=0 // pred_fallthru
    _
  %s39 = smul.u32 0, 64
  %v40 = vld [vmem:[%s0] sm:$0xf]
  %v41 = vld [vmem:[%s0 + $0x4] sm:$0xf]
  %v42 = vld [vmem:[%s0 + $0x8] sm:$0xf]
  %v43 = vld [vmem:[%s0 + $0xc] sm:$0xf]
  %v44 = vld [vmem:[%s0 + $0x10] sm:$0xf]
  %v45 = vld [vmem:[%s0 + $0x14] sm:$0xf]
  %v46 = vld [vmem:[%s0 + $0x18] sm:$0xf]
  %v47 = vld [vmem:[%s0 + $0x1c] sm:$0xf]
  %v48 = vld [vmem:[%s0 + $0x20] sm:$0xf]
  %v49 = vld [vmem:[%s0 + $0x24] sm:$0xf]
  %v50 = vld [vmem:[%s1] sm:$0xf]
  %v51 = vld [vmem:[%s1 + $0x4] sm:$0xf]
  %v52 = vld [vmem:[%s1 + $0x8] sm:$0xf]
  %v53 = vld [vmem:[%s1 + $0xc] sm:$0xf]
  %v54 = vld [vmem:[%s1 + $0x10] sm:$0xf]
  %v55 = vld [vmem:[%s1 + $0x14] sm:$0xf]
  %v56 = vld [vmem:[%s1 + $0x18] sm:$0xf]
  %v57 = vld [vmem:[%s1 + $0x1c] sm:$0xf]
  %s58 = scalar_lea.vmem %s1, 32
  %v59 = vld [vmem:[%s58] sm:$0xf]
  %v60 = vld [vmem:[%s58 + $0x4] sm:$0xf]
  %v61 = vld [vmem:[%s58 + $0x8] sm:$0xf]
  %v62 = vld [vmem:[%s58 + $0xc] sm:$0xf]
  %v63 = vld [vmem:[%s58 + $0x10] sm:$0xf]
  %v64 = vld [vmem:[%s58 + $0x14] sm:$0xf]
  %v65 = vld [vmem:[%s58 + $0x18] sm:$0xf]
  %v66 = vld [vmem:[%s58 + $0x1c] sm:$0xf]
  %v77 = vunpack.c.l.b16 %v40
  %v78 = vunpack.c.l.b16 %v41
  %v79 = vunpack.c.l.b16 %v42
  %v80 = vunpack.c.l.b16 %v43
  %v81 = vunpack.c.l.b16 %v44
  %v82 = vunpack.c.l.b16 %v45
  %v83 = vunpack.c.l.b16 %v46
  %v84 = vunpack.c.l.b16 %v47
  %v85 = vunpack.c.l.b16 %v48
  %v86 = vunpack.c.l.b16 %v49
  %v87 = vpack.c.b16 %v78, %v77
  %v88 = vpack.c.b16 %v80, %v79
  %v89 = vpack.c.b16 %v82, %v81
  %v90 = vpack.c.b16 %v84, %v83
  %v91 = vpack.c.b16 %v86, %v85
  %vm92 = vsmask.f32 7424
  %v94 = vshrl.u32 %v87, 16
  %v96 = vshll.u32 %v87, 16
  %v98 = vrot.slane %v96, 1
  %v99 = vor.u32 %v94, %v98
  %v101 = vshll.u32 %v88, 16
  %v103 = vrot.slane %v101, 1
  %v104 = vsel %vm92, %v99, %v103
  %v105 = vshrl.u32 %v88, 16
  %v107 = vor.u32 %v105, %v103
  %v109 = vshll.u32 %v89, 16
  %v111 = vrot.slane %v109, 1
  %v112 = vsel %vm92, %v107, %v111
  %v113 = vshrl.u32 %v89, 16
  %v115 = vor.u32 %v113, %v111
  %v117 = vshll.u32 %v90, 16
  %v119 = vrot.slane %v117, 1
  %v120 = vsel %vm92, %v115, %v119
  %v121 = vshrl.u32 %v90, 16
  %v123 = vor.u32 %v121, %v119
  %v125 = vshll.u32 %v91, 16
  %v127 = vrot.slane %v125, 1
  %v128 = vsel %vm92, %v123, %v127
  %v129 = vshrl.u32 %v91, 16
  %v131 = vor.u32 %v129, %v127
  %v140 = vunpack.c.l.b16 %v59
  %v141 = vunpack.c.l.b16 %v60
  %v142 = vunpack.c.l.b16 %v61
  %v143 = vunpack.c.l.b16 %v62
  %v144 = vunpack.c.l.b16 %v63
  %v145 = vunpack.c.l.b16 %v64
  %v146 = vunpack.c.l.b16 %v65
  %v147 = vunpack.c.l.b16 %v66
  %v148 = vpack.c.b16 %v141, %v140
  %v149 = vpack.c.b16 %v143, %v142
  %v150 = vpack.c.b16 %v145, %v144
  %v151 = vpack.c.b16 %v147, %v146
  %vm156 = vcmask 523264
  %v158 = vsel %vm156, %v104, 0
  %v161 = vsel %vm156, %v112, 0
  %v164 = vsel %vm156, %v120, 0
  %v167 = vsel %vm156, %v128, 0
  %v170 = vsel %vm156, %v131, 0
  %172 = vmatprep.subr.bf16.mxu0 0
  %173 = vmatpush1.bf16.msra.mxu0 %v148
  %174 = vmatprep.subr.bf16.mxu0 0
  %175 = vmatpush1.bf16.msra.mxu0 %v149
  %176 = vmatprep.subr.bf16.mxu0 0
  %177 = vmatpush1.bf16.msra.mxu0 %v150
  %178 = vmatprep.subr.bf16.mxu0 0
  %179 = vmatpush1.bf16.msra.mxu0 %v151
  %180 = vmatprep.subr.bf16.mxu0 0
  %181 = vmatpush1.bf16.msra.mxu0 0
  %182 = vmatprep.subr.bf16.mxu0 0
  %183 = vmatpush1.bf16.msra.mxu0 0
  %184 = vmatprep.subr.bf16.mxu0 0
  %185 = vmatpush1.bf16.msra.mxu0 0
  %186 = vmatprep.subr.bf16.mxu0 0
  %187 = vmatpush1.bf16.msra.mxu0 0
  %188 = vmatprep.subr.bf16.mxu0 0
  %189 = vmatpush1.bf16.msra.mxu0 0
  %190 = vmatprep.subr.bf16.mxu0 0
  %191 = vmatpush1.bf16.msra.mxu0 0
  %192 = vmatprep.subr.bf16.mxu0 0
  %193 = vmatpush1.bf16.msra.mxu0 0
  %194 = vmatprep.subr.bf16.mxu0 0
  %195 = vmatpush1.bf16.msra.mxu0 0
  %196 = vmatprep.subr.bf16.mxu0 0
  %197 = vmatpush1.bf16.msra.mxu0 0
  %198 = vmatprep.subr.bf16.mxu0 0
  %199 = vmatpush1.bf16.msra.mxu0 0
  %200 = vmatprep.subr.bf16.mxu0 0
  %201 = vmatpush1.bf16.msra.mxu0 0
  %202 = vmatprep.subr.bf16.mxu0 0
  %203 = vmatpush1.bf16.msra.mxu0 0
  %204 = vmatprep.mubr.bf16.mxu0 0
  %205 = vmatmul.mubr.bf16.gmra.mrb[0].mxu0 %v158
  %v206 = vpop.f32.mrb[0].mxu0
  %v207 = vadd.f32 0.0, %v206
  %v208 = vpop.f32.mrb[0].mxu0
  %v209 = vpop.f32.mrb[0].mxu0
  %v210 = vadd.f32 0.0, %v209
  %v211 = vpop.f32.mrb[0].mxu0
  %212 = vmatprep.mubr.bf16.mxu0 0
  %213 = vmatmul.mubr.bf16.gmra.mrb[0].mxu0 %v161
  %v214 = vpop.f32.mrb[0].mxu0
  %v215 = vadd.f32 0.0, %v214
  %v216 = vpop.f32.mrb[0].mxu0
  %v217 = vpop.f32.mrb[0].mxu0
  %v218 = vadd.f32 0.0, %v217
  %v219 = vpop.f32.mrb[0].mxu0
  %220 = vmatprep.mubr.bf16.mxu0 0
  %221 = vmatmul.mubr.bf16.gmra.mrb[0].mxu0 %v164
  %v222 = vpop.f32.mrb[0].mxu0
  %v223 = vadd.f32 0.0, %v222
  %v224 = vpop.f32.mrb[0].mxu0
  %v225 = vpop.f32.mrb[0].mxu0
  %v226 = vadd.f32 0.0, %v225
  %v227 = vpop.f32.mrb[0].mxu0
  %228 = vmatprep.mubr.bf16.mxu0 0
  %229 = vmatmul.mubr.bf16.gmra.mrb[0].mxu0 %v167
  %v230 = vpop.f32.mrb[0].mxu0
  %v231 = vadd.f32 0.0, %v230
  %v232 = vpop.f32.mrb[0].mxu0
  %v233 = vpop.f32.mrb[0].mxu0
  %v234 = vadd.f32 0.0, %v233
  %v235 = vpop.f32.mrb[0].mxu0
  %236 = vmatprep.mubr.bf16.mxu0 0
  %237 = vmatmul.mubr.bf16.gmra.mrb[0].mxu0 %v170
  %v238 = vpop.f32.mrb[0].mxu0
  %v239 = vadd.f32 0.0, %v238
  %v240 = vpop.f32.mrb[0].mxu0
  %v241 = vpop.f32.mrb[0].mxu0
  %v242 = vadd.f32 0.0, %v241
  %v243 = vpop.f32.mrb[0].mxu0
  %244 = vdwg.mxu0
  %v253 = vunpack.c.l.b16 %v50
  %v254 = vunpack.c.l.b16 %v51
  %v255 = vunpack.c.l.b16 %v52
  %v256 = vunpack.c.l.b16 %v53
  %v257 = vunpack.c.l.b16 %v54
  %v258 = vunpack.c.l.b16 %v55
  %v259 = vunpack.c.l.b16 %v56
  %v260 = vunpack.c.l.b16 %v57
  %v261 = vpack.c.b16 %v254, %v253
  %v262 = vpack.c.b16 %v256, %v255
  %v263 = vpack.c.b16 %v258, %v257
  %v264 = vpack.c.b16 %v260, %v259
  %v269 = vsel %vm156, %v87, 0
  %v271 = vsel %vm156, %v88, 0
  %v273 = vsel %vm156, %v89, 0
  %v275 = vsel %vm156, %v90, 0
  %v277 = vsel %vm156, %v91, 0
  %279 = vmatprep.subr.bf16.mxu0 0
  %280 = vmatpush1.bf16.msra.mxu0 %v261
  %281 = vmatprep.subr.bf16.mxu0 0
  %282 = vmatpush1.bf16.msra.mxu0 %v262
  %283 = vmatprep.subr.bf16.mxu0 0
  %284 = vmatpush1.bf16.msra.mxu0 %v263
  %285 = vmatprep.subr.bf16.mxu0 0
  %286 = vmatpush1.bf16.msra.mxu0 %v264
  %287 = vmatprep.subr.bf16.mxu0 0
  %288 = vmatpush1.bf16.msra.mxu0 0
  %289 = vmatprep.subr.bf16.mxu0 0
  %290 = vmatpush1.bf16.msra.mxu0 0
  %291 = vmatprep.subr.bf16.mxu0 0
  %292 = vmatpush1.bf16.msra.mxu0 0
  %293 = vmatprep.subr.bf16.mxu0 0
  %294 = vmatpush1.bf16.msra.mxu0 0
  %295 = vmatprep.subr.bf16.mxu0 0
  %296 = vmatpush1.bf16.msra.mxu0 0
  %297 = vmatprep.subr.bf16.mxu0 0
  %298 = vmatpush1.bf16.msra.mxu0 0
  %299 = vmatprep.subr.bf16.mxu0 0
  %300 = vmatpush1.bf16.msra.mxu0 0
  %301 = vmatprep.subr.bf16.mxu0 0
  %302 = vmatpush1.bf16.msra.mxu0 0
  %303 = vmatprep.subr.bf16.mxu0 0
  %304 = vmatpush1.bf16.msra.mxu0 0
  %305 = vmatprep.subr.bf16.mxu0 0
  %306 = vmatpush1.bf16.msra.mxu0 0
  %307 = vmatprep.subr.bf16.mxu0 0
  %308 = vmatpush1.bf16.msra.mxu0 0
  %309 = vmatprep.subr.bf16.mxu0 0
  %310 = vmatpush1.bf16.msra.mxu0 0
  %311 = vmatprep.mubr.bf16.mxu0 0
  %312 = vmatmul.mubr.bf16.gmra.mrb[0].mxu0 %v269
  %v313 = vpop.f32.mrb[0].mxu0
  %v314 = vadd.f32 %v207, %v313
  %v315 = vpop.f32.mrb[0].mxu0
  %v316 = vpop.f32.mrb[0].mxu0
  %v317 = vadd.f32 %v210, %v316
  %v318 = vpop.f32.mrb[0].mxu0
  %319 = vmatprep.mubr.bf16.mxu0 0
  %320 = vmatmul.mubr.bf16.gmra.mrb[0].mxu0 %v271
  %v321 = vpop.f32.mrb[0].mxu0
  %v322 = vadd.f32 %v215, %v321
  %v323 = vpop.f32.mrb[0].mxu0
  %v324 = vpop.f32.mrb[0].mxu0
  %v325 = vadd.f32 %v218, %v324
  %v326 = vpop.f32.mrb[0].mxu0
  %327 = vmatprep.mubr.bf16.mxu0 0
  %328 = vmatmul.mubr.bf16.gmra.mrb[0].mxu0 %v273
  %v329 = vpop.f32.mrb[0].mxu0
  %v330 = vadd.f32 %v223, %v329
  %v331 = vpop.f32.mrb[0].mxu0
  %v332 = vpop.f32.mrb[0].mxu0
  %v333 = vadd.f32 %v226, %v332
  %v334 = vpop.f32.mrb[0].mxu0
  %335 = vmatprep.mubr.bf16.mxu0 0
  %336 = vmatmul.mubr.bf16.gmra.mrb[0].mxu0 %v275
  %v337 = vpop.f32.mrb[0].mxu0
  %v338 = vadd.f32 %v231, %v337
  %v339 = vpop.f32.mrb[0].mxu0
  %v340 = vpop.f32.mrb[0].mxu0
  %v341 = vadd.f32 %v234, %v340
  %v342 = vpop.f32.mrb[0].mxu0
  %343 = vmatprep.mubr.bf16.mxu0 0
  %344 = vmatmul.mubr.bf16.gmra.mrb[0].mxu0 %v277
  %v345 = vpop.f32.mrb[0].mxu0
  %v346 = vadd.f32 %v239, %v345
  %v347 = vpop.f32.mrb[0].mxu0
  %v348 = vpop.f32.mrb[0].mxu0
  %v349 = vadd.f32 %v242, %v348
  %v350 = vpop.f32.mrb[0].mxu0
  %351 = vdwg.mxu0
  %s352 = scalar_lea.vmem %s1, 64
  %v353 = vld [vmem:[%s352] sm:$0xf]
  %v354 = vld [vmem:[%s352 + $0x4] sm:$0xf]
  %v355 = vld [vmem:[%s352 + $0x8] sm:$0xf]
  %v356 = vld [vmem:[%s352 + $0xc] sm:$0xf]
  %v357 = vld [vmem:[%s352 + $0x10] sm:$0xf]
  %v358 = vld [vmem:[%s352 + $0x14] sm:$0xf]
  %v359 = vld [vmem:[%s352 + $0x18] sm:$0xf]
  %v360 = vld [vmem:[%s352 + $0x1c] sm:$0xf]
  %vm361 = vcmask 1046528
  %v362 = vrot.slane %v87, 1
  %v363 = vrot.slane %v88, 1
  %v364 = vsel %vm361, %v362, %v363
  %v365 = vrot.slane %v89, 1
  %v366 = vsel %vm361, %v363, %v365
  %v367 = vrot.slane %v90, 1
  %v368 = vsel %vm361, %v365, %v367
  %v369 = vrot.slane %v91, 1
  %v370 = vsel %vm361, %v367, %v369
  %v379 = vunpack.c.l.b16 %v353
  %v380 = vunpack.c.l.b16 %v354
  %v381 = vunpack.c.l.b16 %v355
  %v382 = vunpack.c.l.b16 %v356
  %v383 = vunpack.c.l.b16 %v357
  %v384 = vunpack.c.l.b16 %v358
  %v385 = vunpack.c.l.b16 %v359
  %v386 = vunpack.c.l.b16 %v360
  %v387 = vpack.c.b16 %v380, %v379
  %v388 = vpack.c.b16 %v382, %v381
  %v389 = vpack.c.b16 %v384, %v383
  %v390 = vpack.c.b16 %v386, %v385
  %v396 = vsel %vm156, %v364, 0
  %v399 = vsel %vm156, %v366, 0
  %v402 = vsel %vm156, %v368, 0
  %v405 = vsel %vm156, %v370, 0
  %v408 = vsel %vm156, %v369, 0
  %410 = vmatprep.subr.bf16.mxu0 0
  %411 = vmatpush1.bf16.msra.mxu0 %v387
  %412 = vmatprep.subr.bf16.mxu0 0
  %413 = vmatpush1.bf16.msra.mxu0 %v388
  %414 = vmatprep.subr.bf16.mxu0 0
  %415 = vmatpush1.bf16.msra.mxu0 %v389
  %416 = vmatprep.subr.bf16.mxu0 0
  %417 = vmatpush1.bf16.msra.mxu0 %v390
  %418 = vmatprep.subr.bf16.mxu0 0
  %419 = vmatpush1.bf16.msra.mxu0 0
  %420 = vmatprep.subr.bf16.mxu0 0
  %421 = vmatpush1.bf16.msra.mxu0 0
  %422 = vmatprep.subr.bf16.mxu0 0
  %423 = vmatpush1.bf16.msra.mxu0 0
  %424 = vmatprep.subr.bf16.mxu0 0
  %425 = vmatpush1.bf16.msra.mxu0 0
  %426 = vmatprep.subr.bf16.mxu0 0
  %427 = vmatpush1.bf16.msra.mxu0 0
  %428 = vmatprep.subr.bf16.mxu0 0
  %429 = vmatpush1.bf16.msra.mxu0 0
  %430 = vmatprep.subr.bf16.mxu0 0
  %431 = vmatpush1.bf16.msra.mxu0 0
  %432 = vmatprep.subr.bf16.mxu0 0
  %433 = vmatpush1.bf16.msra.mxu0 0
  %434 = vmatprep.subr.bf16.mxu0 0
  %435 = vmatpush1.bf16.msra.mxu0 0
  %436 = vmatprep.subr.bf16.mxu0 0
  %437 = vmatpush1.bf16.msra.mxu0 0
  %438 = vmatprep.subr.bf16.mxu0 0
  %439 = vmatpush1.bf16.msra.mxu0 0
  %440 = vmatprep.subr.bf16.mxu0 0
  %441 = vmatpush1.bf16.msra.mxu0 0
  %442 = vmatprep.mubr.bf16.mxu0 0
  %443 = vmatmul.mubr.bf16.gmra.mrb[0].mxu0 %v396
  %v444 = vpop.f32.mrb[0].mxu0
  %v445 = vadd.f32 0.0, %v444
  %v446 = vpop.f32.mrb[0].mxu0
  %v447 = vpop.f32.mrb[0].mxu0
  %v448 = vadd.f32 0.0, %v447
  %v449 = vpop.f32.mrb[0].mxu0
  %450 = vmatprep.mubr.bf16.mxu0 0
  %451 = vmatmul.mubr.bf16.gmra.mrb[0].mxu0 %v399
  %v452 = vpop.f32.mrb[0].mxu0
  %v453 = vadd.f32 0.0, %v452
  %v454 = vpop.f32.mrb[0].mxu0
  %v455 = vpop.f32.mrb[0].mxu0
  %v456 = vadd.f32 0.0, %v455
  %v457 = vpop.f32.mrb[0].mxu0
  %458 = vmatprep.mubr.bf16.mxu0 0
  %459 = vmatmul.mubr.bf16.gmra.mrb[0].mxu0 %v402
  %v460 = vpop.f32.mrb[0].mxu0
  %v461 = vadd.f32 0.0, %v460
  %v462 = vpop.f32.mrb[0].mxu0
  %v463 = vpop.f32.mrb[0].mxu0
  %v464 = vadd.f32 0.0, %v463
  %v465 = vpop.f32.mrb[0].mxu0
  %466 = vmatprep.mubr.bf16.mxu0 0
  %467 = vmatmul.mubr.bf16.gmra.mrb[0].mxu0 %v405
  %v468 = vpop.f32.mrb[0].mxu0
  %v469 = vadd.f32 0.0, %v468
  %v470 = vpop.f32.mrb[0].mxu0
  %v471 = vpop.f32.mrb[0].mxu0
  %v472 = vadd.f32 0.0, %v471
  %v473 = vpop.f32.mrb[0].mxu0
  %474 = vmatprep.mubr.bf16.mxu0 0
  %475 = vmatmul.mubr.bf16.gmra.mrb[0].mxu0 %v408
  %v476 = vpop.f32.mrb[0].mxu0
  %v477 = vadd.f32 0.0, %v476
  %v478 = vpop.f32.mrb[0].mxu0
  %v479 = vpop.f32.mrb[0].mxu0
  %v480 = vadd.f32 0.0, %v479
  %v481 = vpop.f32.mrb[0].mxu0
  %482 = vdwg.mxu0
  %v483 = vadd.f32 %v314, %v445
  %v484 = vadd.f32 %v317, %v448
  %v485 = vadd.f32 %v322, %v453
  %v486 = vadd.f32 %v325, %v456
  %v487 = vadd.f32 %v330, %v461
  %v488 = vadd.f32 %v333, %v464
  %v489 = vadd.f32 %v338, %v469
  %v490 = vadd.f32 %v341, %v472
  %v491 = vadd.f32 %v346, %v477
  %v492 = vadd.f32 %v349, %v480
  %s493 = scalar_lea.vmem %s1, 96
  %v494 = vld [vmem:[%s493] sm:$0xf]
  %v495 = vld [vmem:[%s493 + $0x4] sm:$0xf]
  %v496 = vld [vmem:[%s493 + $0x8] sm:$0xf]
  %v497 = vld [vmem:[%s493 + $0xc] sm:$0xf]
  %v498 = vld [vmem:[%s493 + $0x10] sm:$0xf]
  %v499 = vld [vmem:[%s493 + $0x14] sm:$0xf]
  %v500 = vld [vmem:[%s493 + $0x18] sm:$0xf]
  %v501 = vld [vmem:[%s493 + $0x1c] sm:$0xf]
  %vm502 = vsmask.f32 6400
  %v503 = vrot.slane %v94, 1
  %v504 = vrot.slane %v96, 2
  %v505 = vor.u32 %v503, %v504
  %v506 = vrot.slane %v105, 1
  %v507 = vrot.slane %v101, 2
  %v508 = vor.u32 %v506, %v507
  %v509 = vsel %vm502, %v505, %v508
  %v510 = vrot.slane %v113, 1
  %v511 = vrot.slane %v109, 2
  %v512 = vor.u32 %v510, %v511
  %v513 = vsel %vm502, %v508, %v512
  %v514 = vrot.slane %v121, 1
  %v515 = vrot.slane %v117, 2
  %v516 = vor.u32 %v514, %v515
  %v517 = vsel %vm502, %v512, %v516
  %v518 = vrot.slane %v129, 1
  %v519 = vrot.slane %v125, 2
  %v520 = vor.u32 %v518, %v519
  %v521 = vsel %vm502, %v516, %v520
  %v530 = vunpack.c.l.b16 %v494
  %v531 = vunpack.c.l.b16 %v495
  %v532 = vunpack.c.l.b16 %v496
  %v533 = vunpack.c.l.b16 %v497
  %v534 = vunpack.c.l.b16 %v498
  %v535 = vunpack.c.l.b16 %v499
  %v536 = vunpack.c.l.b16 %v500
  %v537 = vunpack.c.l.b16 %v501
  %v538 = vpack.c.b16 %v531, %v530
  %v539 = vpack.c.b16 %v533, %v532
  %v540 = vpack.c.b16 %v535, %v534
  %v541 = vpack.c.b16 %v537, %v536
  %v547 = vsel %vm156, %v509, 0
  %v550 = vsel %vm156, %v513, 0
  %v553 = vsel %vm156, %v517, 0
  %v556 = vsel %vm156, %v521, 0
  %v559 = vsel %vm156, %v520, 0
  %561 = vmatprep.subr.bf16.mxu0 0
  %562 = vmatpush1.bf16.msra.mxu0 %v538
  %563 = vmatprep.subr.bf16.mxu0 0
  %564 = vmatpush1.bf16.msra.mxu0 %v539
  %565 = vmatprep.subr.bf16.mxu0 0
  %566 = vmatpush1.bf16.msra.mxu0 %v540
  %567 = vmatprep.subr.bf16.mxu0 0
  %568 = vmatpush1.bf16.msra.mxu0 %v541
  %569 = vmatprep.subr.bf16.mxu0 0
  %570 = vmatpush1.bf16.msra.mxu0 0
  %571 = vmatprep.subr.bf16.mxu0 0
  %572 = vmatpush1.bf16.msra.mxu0 0
  %573 = vmatprep.subr.bf16.mxu0 0
  %574 = vmatpush1.bf16.msra.mxu0 0
  %575 = vmatprep.subr.bf16.mxu0 0
  %576 = vmatpush1.bf16.msra.mxu0 0
  %577 = vmatprep.subr.bf16.mxu0 0
  %578 = vmatpush1.bf16.msra.mxu0 0
  %579 = vmatprep.subr.bf16.mxu0 0
  %580 = vmatpush1.bf16.msra.mxu0 0
  %581 = vmatprep.subr.bf16.mxu0 0
  %582 = vmatpush1.bf16.msra.mxu0 0
  %583 = vmatprep.subr.bf16.mxu0 0
  %584 = vmatpush1.bf16.msra.mxu0 0
  %585 = vmatprep.subr.bf16.mxu0 0
  %586 = vmatpush1.bf16.msra.mxu0 0
  %587 = vmatprep.subr.bf16.mxu0 0
  %588 = vmatpush1.bf16.msra.mxu0 0
  %589 = vmatprep.subr.bf16.mxu0 0
  %590 = vmatpush1.bf16.msra.mxu0 0
  %591 = vmatprep.subr.bf16.mxu0 0
  %592 = vmatpush1.bf16.msra.mxu0 0
  %593 = vmatprep.mubr.bf16.mxu0 0
  %594 = vmatmul.mubr.bf16.gmra.mrb[0].mxu0 %v547
  %v595 = vpop.f32.mrb[0].mxu0
  %v596 = vadd.f32 0.0, %v595
  %v597 = vpop.f32.mrb[0].mxu0
  %v598 = vpop.f32.mrb[0].mxu0
  %v599 = vadd.f32 0.0, %v598
  %v600 = vpop.f32.mrb[0].mxu0
  %601 = vmatprep.mubr.bf16.mxu0 0
  %602 = vmatmul.mubr.bf16.gmra.mrb[0].mxu0 %v550
  %v603 = vpop.f32.mrb[0].mxu0
  %v604 = vadd.f32 0.0, %v603
  %v605 = vpop.f32.mrb[0].mxu0
  %v606 = vpop.f32.mrb[0].mxu0
  %v607 = vadd.f32 0.0, %v606
  %v608 = vpop.f32.mrb[0].mxu0
  %609 = vmatprep.mubr.bf16.mxu0 0
  %610 = vmatmul.mubr.bf16.gmra.mrb[0].mxu0 %v553
  %v611 = vpop.f32.mrb[0].mxu0
  %v612 = vadd.f32 0.0, %v611
  %v613 = vpop.f32.mrb[0].mxu0
  %v614 = vpop.f32.mrb[0].mxu0
  %v615 = vadd.f32 0.0, %v614
  %v616 = vpop.f32.mrb[0].mxu0
  %617 = vmatprep.mubr.bf16.mxu0 0
  %618 = vmatmul.mubr.bf16.gmra.mrb[0].mxu0 %v556
  %v619 = vpop.f32.mrb[0].mxu0
  %v620 = vadd.f32 0.0, %v619
  %v621 = vpop.f32.mrb[0].mxu0
  %v622 = vpop.f32.mrb[0].mxu0
  %v623 = vadd.f32 0.0, %v622
  %v624 = vpop.f32.mrb[0].mxu0
  %625 = vmatprep.mubr.bf16.mxu0 0
  %626 = vmatmul.mubr.bf16.gmra.mrb[0].mxu0 %v559
  %v627 = vpop.f32.mrb[0].mxu0
  %v628 = vadd.f32 0.0, %v627
  %v629 = vpop.f32.mrb[0].mxu0
  %v630 = vpop.f32.mrb[0].mxu0
  %v631 = vadd.f32 0.0, %v630
  %v632 = vpop.f32.mrb[0].mxu0
  %633 = vdwg.mxu0
  %v634 = vadd.f32 %v483, %v596
  %v635 = vadd.f32 %v484, %v599
  %v636 = vadd.f32 %v485, %v604
  %v637 = vadd.f32 %v486, %v607
  %v638 = vadd.f32 %v487, %v612
  %v639 = vadd.f32 %v488, %v615
  %v640 = vadd.f32 %v489, %v620
  %v641 = vadd.f32 %v490, %v623
  %v642 = vadd.f32 %v491, %v628
  %v643 = vadd.f32 %v492, %v631
  %s644 = scalar_lea.vmem %s1, 128
  %v645 = vld [vmem:[%s644] sm:$0xf]
  %v646 = vld [vmem:[%s644 + $0x4] sm:$0xf]
  %v647 = vld [vmem:[%s644 + $0x8] sm:$0xf]
  %v648 = vld [vmem:[%s644 + $0xc] sm:$0xf]
  %v649 = vld [vmem:[%s644 + $0x10] sm:$0xf]
  %v650 = vld [vmem:[%s644 + $0x14] sm:$0xf]
  %v651 = vld [vmem:[%s644 + $0x18] sm:$0xf]
  %v652 = vld [vmem:[%s644 + $0x1c] sm:$0xf]
  %vm653 = vcmask 1045504
  %v654 = vrot.slane %v87, 2
  %v655 = vrot.slane %v88, 2
  %v656 = vsel %vm653, %v654, %v655
  %v657 = vrot.slane %v89, 2
  %v658 = vsel %vm653, %v655, %v657
  %v659 = vrot.slane %v90, 2
  %v660 = vsel %vm653, %v657, %v659
  %v661 = vrot.slane %v91, 2
  %v662 = vsel %vm653, %v659, %v661
  %v671 = vunpack.c.l.b16 %v645
  %v672 = vunpack.c.l.b16 %v646
  %v673 = vunpack.c.l.b16 %v647
  %v674 = vunpack.c.l.b16 %v648
  %v675 = vunpack.c.l.b16 %v649
  %v676 = vunpack.c.l.b16 %v650
  %v677 = vunpack.c.l.b16 %v651
  %v678 = vunpack.c.l.b16 %v652
  %v679 = vpack.c.b16 %v672, %v671
  %v680 = vpack.c.b16 %v674, %v673
  %v681 = vpack.c.b16 %v676, %v675
  %v682 = vpack.c.b16 %v678, %v677
  %v688 = vsel %vm156, %v656, 0
  %v691 = vsel %vm156, %v658, 0
  %v694 = vsel %vm156, %v660, 0
  %v697 = vsel %vm156, %v662, 0
  %v700 = vsel %vm156, %v661, 0
  %702 = vmatprep.subr.bf16.mxu0 0
  %703 = vmatpush1.bf16.msra.mxu0 %v679
  %704 = vmatprep.subr.bf16.mxu0 0
  %705 = vmatpush1.bf16.msra.mxu0 %v680
  %706 = vmatprep.subr.bf16.mxu0 0
  %707 = vmatpush1.bf16.msra.mxu0 %v681
  %708 = vmatprep.subr.bf16.mxu0 0
  %709 = vmatpush1.bf16.msra.mxu0 %v682
  %710 = vmatprep.subr.bf16.mxu0 0
  %711 = vmatpush1.bf16.msra.mxu0 0
  %712 = vmatprep.subr.bf16.mxu0 0
  %713 = vmatpush1.bf16.msra.mxu0 0
  %714 = vmatprep.subr.bf16.mxu0 0
  %715 = vmatpush1.bf16.msra.mxu0 0
  %716 = vmatprep.subr.bf16.mxu0 0
  %717 = vmatpush1.bf16.msra.mxu0 0
  %718 = vmatprep.subr.bf16.mxu0 0
  %719 = vmatpush1.bf16.msra.mxu0 0
  %720 = vmatprep.subr.bf16.mxu0 0
  %721 = vmatpush1.bf16.msra.mxu0 0
  %722 = vmatprep.subr.bf16.mxu0 0
  %723 = vmatpush1.bf16.msra.mxu0 0
  %724 = vmatprep.subr.bf16.mxu0 0
  %725 = vmatpush1.bf16.msra.mxu0 0
  %726 = vmatprep.subr.bf16.mxu0 0
  %727 = vmatpush1.bf16.msra.mxu0 0
  %728 = vmatprep.subr.bf16.mxu0 0
  %729 = vmatpush1.bf16.msra.mxu0 0
  %730 = vmatprep.subr.bf16.mxu0 0
  %731 = vmatpush1.bf16.msra.mxu0 0
  %732 = vmatprep.subr.bf16.mxu0 0
  %733 = vmatpush1.bf16.msra.mxu0 0
  %734 = vmatprep.mubr.bf16.mxu0 0
  %735 = vmatmul.mubr.bf16.gmra.mrb[0].mxu0 %v688
  %v736 = vpop.f32.mrb[0].mxu0
  %v737 = vadd.f32 0.0, %v736
  %v738 = vpop.f32.mrb[0].mxu0
  %v739 = vpop.f32.mrb[0].mxu0
  %v740 = vadd.f32 0.0, %v739
  %v741 = vpop.f32.mrb[0].mxu0
  %742 = vmatprep.mubr.bf16.mxu0 0
  %743 = vmatmul.mubr.bf16.gmra.mrb[0].mxu0 %v691
  %v744 = vpop.f32.mrb[0].mxu0
  %v745 = vadd.f32 0.0, %v744
  %v746 = vpop.f32.mrb[0].mxu0
  %v747 = vpop.f32.mrb[0].mxu0
  %v748 = vadd.f32 0.0, %v747
  %v749 = vpop.f32.mrb[0].mxu0
  %750 = vmatprep.mubr.bf16.mxu0 0
  %751 = vmatmul.mubr.bf16.gmra.mrb[0].mxu0 %v694
  %v752 = vpop.f32.mrb[0].mxu0
  %v753 = vadd.f32 0.0, %v752
  %v754 = vpop.f32.mrb[0].mxu0
  %v755 = vpop.f32.mrb[0].mxu0
  %v756 = vadd.f32 0.0, %v755
  %v757 = vpop.f32.mrb[0].mxu0
  %758 = vmatprep.mubr.bf16.mxu0 0
  %759 = vmatmul.mubr.bf16.gmra.mrb[0].mxu0 %v697
  %v760 = vpop.f32.mrb[0].mxu0
  %v761 = vadd.f32 0.0, %v760
  %v762 = vpop.f32.mrb[0].mxu0
  %v763 = vpop.f32.mrb[0].mxu0
  %v764 = vadd.f32 0.0, %v763
  %v765 = vpop.f32.mrb[0].mxu0
  %766 = vmatprep.mubr.bf16.mxu0 0
  %767 = vmatmul.mubr.bf16.gmra.mrb[0].mxu0 %v700
  %v768 = vpop.f32.mrb[0].mxu0
  %v769 = vadd.f32 0.0, %v768
  %v770 = vpop.f32.mrb[0].mxu0
  %v771 = vpop.f32.mrb[0].mxu0
  %v772 = vadd.f32 0.0, %v771
  %v773 = vpop.f32.mrb[0].mxu0
  %774 = vdwg.mxu0
  %v775 = vadd.f32 %v634, %v737
  %v776 = vadd.f32 %v635, %v740
  %v777 = vadd.f32 %v636, %v745
  %v778 = vadd.f32 %v637, %v748
  %v779 = vadd.f32 %v638, %v753
  %v780 = vadd.f32 %v639, %v756
  %v781 = vadd.f32 %v640, %v761
  %v782 = vadd.f32 %v641, %v764
  %v783 = vadd.f32 %v642, %v769
  %v784 = vadd.f32 %v643, %v772
  %s785 = scalar_lea.vmem %s1, 160
  %v786 = vld [vmem:[%s785] sm:$0xf]
  %v787 = vld [vmem:[%s785 + $0x4] sm:$0xf]
  %v788 = vld [vmem:[%s785 + $0x8] sm:$0xf]
  %v789 = vld [vmem:[%s785 + $0xc] sm:$0xf]
  %v790 = vld [vmem:[%s785 + $0x10] sm:$0xf]
  %v791 = vld [vmem:[%s785 + $0x14] sm:$0xf]
  %v792 = vld [vmem:[%s785 + $0x18] sm:$0xf]
  %v793 = vld [vmem:[%s785 + $0x1c] sm:$0xf]
  %vm794 = vsmask.f32 5376
  %v795 = vrot.slane %v94, 2
  %v796 = vrot.slane %v96, 3
  %v797 = vor.u32 %v795, %v796
  %v798 = vrot.slane %v105, 2
  %v799 = vrot.slane %v101, 3
  %v800 = vor.u32 %v798, %v799
  %v801 = vsel %vm794, %v797, %v800
  %v802 = vrot.slane %v113, 2
  %v803 = vrot.slane %v109, 3
  %v804 = vor.u32 %v802, %v803
  %v805 = vsel %vm794, %v800, %v804
  %v806 = vrot.slane %v121, 2
  %v807 = vrot.slane %v117, 3
  %v808 = vor.u32 %v806, %v807
  %v809 = vsel %vm794, %v804, %v808
  %v810 = vrot.slane %v129, 2
  %v811 = vrot.slane %v125, 3
  %v812 = vor.u32 %v810, %v811
  %v813 = vsel %vm794, %v808, %v812
  %v822 = vunpack.c.l.b16 %v786
  %v823 = vunpack.c.l.b16 %v787
  %v824 = vunpack.c.l.b16 %v788
  %v825 = vunpack.c.l.b16 %v789
  %v826 = vunpack.c.l.b16 %v790
  %v827 = vunpack.c.l.b16 %v791
  %v828 = vunpack.c.l.b16 %v792
  %v829 = vunpack.c.l.b16 %v793
  %v830 = vpack.c.b16 %v823, %v822
  %v831 = vpack.c.b16 %v825, %v824
  %v832 = vpack.c.b16 %v827, %v826
  %v833 = vpack.c.b16 %v829, %v828
  %v839 = vsel %vm156, %v801, 0
  %v842 = vsel %vm156, %v805, 0
  %v845 = vsel %vm156, %v809, 0
  %v848 = vsel %vm156, %v813, 0
  %v851 = vsel %vm156, %v812, 0
  %853 = vmatprep.subr.bf16.mxu0 0
  %854 = vmatpush1.bf16.msra.mxu0 %v830
  %855 = vmatprep.subr.bf16.mxu0 0
  %856 = vmatpush1.bf16.msra.mxu0 %v831
  %857 = vmatprep.subr.bf16.mxu0 0
  %858 = vmatpush1.bf16.msra.mxu0 %v832
  %859 = vmatprep.subr.bf16.mxu0 0
  %860 = vmatpush1.bf16.msra.mxu0 %v833
  %861 = vmatprep.subr.bf16.mxu0 0
  %862 = vmatpush1.bf16.msra.mxu0 0
  %863 = vmatprep.subr.bf16.mxu0 0
  %864 = vmatpush1.bf16.msra.mxu0 0
  %865 = vmatprep.subr.bf16.mxu0 0
  %866 = vmatpush1.bf16.msra.mxu0 0
  %867 = vmatprep.subr.bf16.mxu0 0
  %868 = vmatpush1.bf16.msra.mxu0 0
  %869 = vmatprep.subr.bf16.mxu0 0
  %870 = vmatpush1.bf16.msra.mxu0 0
  %871 = vmatprep.subr.bf16.mxu0 0
  %872 = vmatpush1.bf16.msra.mxu0 0
  %873 = vmatprep.subr.bf16.mxu0 0
  %874 = vmatpush1.bf16.msra.mxu0 0
  %875 = vmatprep.subr.bf16.mxu0 0
  %876 = vmatpush1.bf16.msra.mxu0 0
  %877 = vmatprep.subr.bf16.mxu0 0
  %878 = vmatpush1.bf16.msra.mxu0 0
  %879 = vmatprep.subr.bf16.mxu0 0
  %880 = vmatpush1.bf16.msra.mxu0 0
  %881 = vmatprep.subr.bf16.mxu0 0
  %882 = vmatpush1.bf16.msra.mxu0 0
  %883 = vmatprep.subr.bf16.mxu0 0
  %884 = vmatpush1.bf16.msra.mxu0 0
  %885 = vmatprep.mubr.bf16.mxu0 0
  %886 = vmatmul.mubr.bf16.gmra.mrb[0].mxu0 %v839
  %v887 = vpop.f32.mrb[0].mxu0
  %v888 = vadd.f32 0.0, %v887
  %v889 = vpop.f32.mrb[0].mxu0
  %v890 = vpop.f32.mrb[0].mxu0
  %v891 = vadd.f32 0.0, %v890
  %v892 = vpop.f32.mrb[0].mxu0
  %893 = vmatprep.mubr.bf16.mxu0 0
  %894 = vmatmul.mubr.bf16.gmra.mrb[0].mxu0 %v842
  %v895 = vpop.f32.mrb[0].mxu0
  %v896 = vadd.f32 0.0, %v895
  %v897 = vpop.f32.mrb[0].mxu0
  %v898 = vpop.f32.mrb[0].mxu0
  %v899 = vadd.f32 0.0, %v898
  %v900 = vpop.f32.mrb[0].mxu0
  %901 = vmatprep.mubr.bf16.mxu0 0
  %902 = vmatmul.mubr.bf16.gmra.mrb[0].mxu0 %v845
  %v903 = vpop.f32.mrb[0].mxu0
  %v904 = vadd.f32 0.0, %v903
  %v905 = vpop.f32.mrb[0].mxu0
  %v906 = vpop.f32.mrb[0].mxu0
  %v907 = vadd.f32 0.0, %v906
  %v908 = vpop.f32.mrb[0].mxu0
  %909 = vmatprep.mubr.bf16.mxu0 0
  %910 = vmatmul.mubr.bf16.gmra.mrb[0].mxu0 %v848
  %v911 = vpop.f32.mrb[0].mxu0
  %v912 = vadd.f32 0.0, %v911
  %v913 = vpop.f32.mrb[0].mxu0
  %v914 = vpop.f32.mrb[0].mxu0
  %v915 = vadd.f32 0.0, %v914
  %v916 = vpop.f32.mrb[0].mxu0
  %917 = vmatprep.mubr.bf16.mxu0 0
  %918 = vmatmul.mubr.bf16.gmra.mrb[0].mxu0 %v851
  %v919 = vpop.f32.mrb[0].mxu0
  %v920 = vadd.f32 0.0, %v919
  %v921 = vpop.f32.mrb[0].mxu0
  %v922 = vpop.f32.mrb[0].mxu0
  %v923 = vadd.f32 0.0, %v922
  %v924 = vpop.f32.mrb[0].mxu0
  %925 = vdwg.mxu0
  %v926 = vadd.f32 %v775, %v888
  %v927 = vadd.f32 %v776, %v891
  %v928 = vadd.f32 %v777, %v896
  %v929 = vadd.f32 %v778, %v899
  %v930 = vadd.f32 %v779, %v904
  %v931 = vadd.f32 %v780, %v907
  %v932 = vadd.f32 %v781, %v912
  %v933 = vadd.f32 %v782, %v915
  %v934 = vadd.f32 %v783, %v920
  %v935 = vadd.f32 %v784, %v923
  %s936 = scalar_lea.vmem %s1, 192
  %v937 = vld [vmem:[%s936] sm:$0xf]
  %v938 = vld [vmem:[%s936 + $0x4] sm:$0xf]
  %v939 = vld [vmem:[%s936 + $0x8] sm:$0xf]
  %v940 = vld [vmem:[%s936 + $0xc] sm:$0xf]
  %v941 = vld [vmem:[%s936 + $0x10] sm:$0xf]
  %v942 = vld [vmem:[%s936 + $0x14] sm:$0xf]
  %v943 = vld [vmem:[%s936 + $0x18] sm:$0xf]
  %v944 = vld [vmem:[%s936 + $0x1c] sm:$0xf]
  %vm945 = vcmask 1044480
  %v946 = vrot.slane %v87, 3
  %v947 = vrot.slane %v88, 3
  %v948 = vsel %vm945, %v946, %v947
  %v949 = vrot.slane %v89, 3
  %v950 = vsel %vm945, %v947, %v949
  %v951 = vrot.slane %v90, 3
  %v952 = vsel %vm945, %v949, %v951
  %v953 = vrot.slane %v91, 3
  %v954 = vsel %vm945, %v951, %v953
  %v963 = vunpack.c.l.b16 %v937
  %v964 = vunpack.c.l.b16 %v938
  %v965 = vunpack.c.l.b16 %v939
  %v966 = vunpack.c.l.b16 %v940
  %v967 = vunpack.c.l.b16 %v941
  %v968 = vunpack.c.l.b16 %v942
  %v969 = vunpack.c.l.b16 %v943
  %v970 = vunpack.c.l.b16 %v944
  %v971 = vpack.c.b16 %v964, %v963
  %v972 = vpack.c.b16 %v966, %v965
  %v973 = vpack.c.b16 %v968, %v967
  %v974 = vpack.c.b16 %v970, %v969
  %v980 = vsel %vm156, %v948, 0
  %v983 = vsel %vm156, %v950, 0
  %v986 = vsel %vm156, %v952, 0
  %v989 = vsel %vm156, %v954, 0
  %v992 = vsel %vm156, %v953, 0
  %994 = vmatprep.subr.bf16.mxu0 0
  %995 = vmatpush1.bf16.msra.mxu0 %v971
  %996 = vmatprep.subr.bf16.mxu0 0
  %997 = vmatpush1.bf16.msra.mxu0 %v972
  %998 = vmatprep.subr.bf16.mxu0 0
  %999 = vmatpush1.bf16.msra.mxu0 %v973
  %1000 = vmatprep.subr.bf16.mxu0 0
  %1001 = vmatpush1.bf16.msra.mxu0 %v974
  %1002 = vmatprep.subr.bf16.mxu0 0
  %1003 = vmatpush1.bf16.msra.mxu0 0
  %1004 = vmatprep.subr.bf16.mxu0 0
  %1005 = vmatpush1.bf16.msra.mxu0 0
  %1006 = vmatprep.subr.bf16.mxu0 0
  %1007 = vmatpush1.bf16.msra.mxu0 0
  %1008 = vmatprep.subr.bf16.mxu0 0
  %1009 = vmatpush1.bf16.msra.mxu0 0
  %1010 = vmatprep.subr.bf16.mxu0 0
  %1011 = vmatpush1.bf16.msra.mxu0 0
  %1012 = vmatprep.subr.bf16.mxu0 0
  %1013 = vmatpush1.bf16.msra.mxu0 0
  %1014 = vmatprep.subr.bf16.mxu0 0
  %1015 = vmatpush1.bf16.msra.mxu0 0
  %1016 = vmatprep.subr.bf16.mxu0 0
  %1017 = vmatpush1.bf16.msra.mxu0 0
  %1018 = vmatprep.subr.bf16.mxu0 0
  %1019 = vmatpush1.bf16.msra.mxu0 0
  %1020 = vmatprep.subr.bf16.mxu0 0
  %1021 = vmatpush1.bf16.msra.mxu0 0
  %1022 = vmatprep.subr.bf16.mxu0 0
  %1023 = vmatpush1.bf16.msra.mxu0 0
  %1024 = vmatprep.subr.bf16.mxu0 0
  %1025 = vmatpush1.bf16.msra.mxu0 0
  %1026 = vmatprep.mubr.bf16.mxu0 0
  %1027 = vmatmul.mubr.bf16.gmra.mrb[0].mxu0 %v980
  %v1028 = vpop.f32.mrb[0].mxu0
  %v1029 = vadd.f32 0.0, %v1028
  %v1030 = vpop.f32.mrb[0].mxu0
  %v1031 = vpop.f32.mrb[0].mxu0
  %v1032 = vadd.f32 0.0, %v1031
  %v1033 = vpop.f32.mrb[0].mxu0
  %1034 = vmatprep.mubr.bf16.mxu0 0
  %1035 = vmatmul.mubr.bf16.gmra.mrb[0].mxu0 %v983
  %v1036 = vpop.f32.mrb[0].mxu0
  %v1037 = vadd.f32 0.0, %v1036
  %v1038 = vpop.f32.mrb[0].mxu0
  %v1039 = vpop.f32.mrb[0].mxu0
  %v1040 = vadd.f32 0.0, %v1039
  %v1041 = vpop.f32.mrb[0].mxu0
  %1042 = vmatprep.mubr.bf16.mxu0 0
  %1043 = vmatmul.mubr.bf16.gmra.mrb[0].mxu0 %v986
  %v1044 = vpop.f32.mrb[0].mxu0
  %v1045 = vadd.f32 0.0, %v1044
  %v1046 = vpop.f32.mrb[0].mxu0
  %v1047 = vpop.f32.mrb[0].mxu0
  %v1048 = vadd.f32 0.0, %v1047
  %v1049 = vpop.f32.mrb[0].mxu0
  %1050 = vmatprep.mubr.bf16.mxu0 0
  %1051 = vmatmul.mubr.bf16.gmra.mrb[0].mxu0 %v989
  %v1052 = vpop.f32.mrb[0].mxu0
  %v1053 = vadd.f32 0.0, %v1052
  %v1054 = vpop.f32.mrb[0].mxu0
  %v1055 = vpop.f32.mrb[0].mxu0
  %v1056 = vadd.f32 0.0, %v1055
  %v1057 = vpop.f32.mrb[0].mxu0
  %1058 = vmatprep.mubr.bf16.mxu0 0
  %1059 = vmatmul.mubr.bf16.gmra.mrb[0].mxu0 %v992
  %v1060 = vpop.f32.mrb[0].mxu0
  %v1061 = vadd.f32 0.0, %v1060
  %v1062 = vpop.f32.mrb[0].mxu0
  %v1063 = vpop.f32.mrb[0].mxu0
  %v1064 = vadd.f32 0.0, %v1063
  %v1065 = vpop.f32.mrb[0].mxu0
  %1066 = vdwg.mxu0
  %v1067 = vadd.f32 %v926, %v1029
  %v1068 = vadd.f32 %v927, %v1032
  %v1069 = vadd.f32 %v928, %v1037
  %v1070 = vadd.f32 %v929, %v1040
  %v1071 = vadd.f32 %v930, %v1045
  %v1072 = vadd.f32 %v931, %v1048
  %v1073 = vadd.f32 %v932, %v1053
  %v1074 = vadd.f32 %v933, %v1056
  %v1075 = vadd.f32 %v934, %v1061
  %v1076 = vadd.f32 %v935, %v1064
  %v1077 = vld [vmem:[%s2] sm:$0x1]
  %v1079 = vlaneseq
  %v1080 = vshrl.u32 %v1079, 7
  %v1081 = vsub.s32 0, %v1080
  %v1082 = vrot.slane %v1077, %v1081
  %v1084 = vadd.f32 %v1067, %v1082
  %v1085 = vadd.f32 %v1068, %v1082
  %v1086 = vadd.f32 %v1069, %v1082
  %v1087 = vadd.f32 %v1070, %v1082
  %v1088 = vadd.f32 %v1071, %v1082
  %v1089 = vadd.f32 %v1072, %v1082
  %v1090 = vadd.f32 %v1073, %v1082
  %v1091 = vadd.f32 %v1074, %v1082
  %v1092 = vadd.f32 %v1075, %v1082
  %v1093 = vadd.f32 %v1076, %v1082
  %vm1094 = vcmp.ge.f32.partialorder %v1084, 0.0
  %vm1095 = vcmp.ge.f32.partialorder %v1085, 0.0
  %vm1096 = vcmp.ge.f32.partialorder %v1086, 0.0
  %vm1097 = vcmp.ge.f32.partialorder %v1087, 0.0
  %vm1098 = vcmp.ge.f32.partialorder %v1088, 0.0
  %vm1099 = vcmp.ge.f32.partialorder %v1089, 0.0
  %vm1100 = vcmp.ge.f32.partialorder %v1090, 0.0
  %vm1101 = vcmp.ge.f32.partialorder %v1091, 0.0
  %vm1102 = vcmp.ge.f32.partialorder %v1092, 0.0
  %vm1103 = vcmp.ge.f32.partialorder %v1093, 0.0
  %v1104 = vmul.f32 %v1084, 0.1
  %v1105 = vmul.f32 %v1085, 0.1
  %v1106 = vmul.f32 %v1086, 0.1
  %v1107 = vmul.f32 %v1087, 0.1
  %v1108 = vmul.f32 %v1088, 0.1
  %v1109 = vmul.f32 %v1089, 0.1
  %v1110 = vmul.f32 %v1090, 0.1
  %v1111 = vmul.f32 %v1091, 0.1
  %v1112 = vmul.f32 %v1092, 0.1
  %v1113 = vmul.f32 %v1093, 0.1
  %v1114 = vsel %vm1094, %v1084, %v1104
  %v1115 = vsel %vm1095, %v1085, %v1105
  %v1116 = vsel %vm1096, %v1086, %v1106
  %v1117 = vsel %vm1097, %v1087, %v1107
  %v1118 = vsel %vm1098, %v1088, %v1108
  %v1119 = vsel %vm1099, %v1089, %v1109
  %v1120 = vsel %vm1100, %v1090, %v1110
  %v1121 = vsel %vm1101, %v1091, %v1111
  %v1122 = vsel %vm1102, %v1092, %v1112
  %v1123 = vsel %vm1103, %v1093, %v1113
  %v1124 = vlaneseq
  %v1125 = vshrl.u32 %v1124, 7
  %v1126 = vadd.s32 %v1125, 8
  %v1127 = vadd.s32 %v1125, 16
  %v1128 = vadd.s32 %v1125, 24
  %v1129 = vadd.s32 %v1125, 32
  %v1130 = vadd.s32 %v1125, 40
  %v1131 = vadd.s32 %v1125, 48
  %v1132 = vadd.s32 %v1125, 56
  %v1133 = vadd.s32 %v1125, 64
  %v1134 = vadd.s32 %v1125, 72
  %s1135 = sadd.s32 %s39, 4294967291
  %v1136 = vstv %s1135
  %v1137 = vadd.s32 %v1125, %v1136
  %v1138 = vadd.s32 %v1126, %v1136
  %v1139 = vadd.s32 %v1127, %v1136
  %v1140 = vadd.s32 %v1128, %v1136
  %v1141 = vadd.s32 %v1129, %v1136
  %v1142 = vadd.s32 %v1130, %v1136
  %v1143 = vadd.s32 %v1131, %v1136
  %v1144 = vadd.s32 %v1132, %v1136
  %v1145 = vadd.s32 %v1133, %v1136
  %v1146 = vadd.s32 %v1134, %v1136
  %vm1147 = vcmp.ge.s32.totalorder %v1137, 0
  %vm1148 = vcmp.ge.s32.totalorder %v1138, 0
  %vm1149 = vcmp.ge.s32.totalorder %v1139, 0
  %vm1150 = vcmp.ge.s32.totalorder %v1140, 0
  %vm1151 = vcmp.ge.s32.totalorder %v1141, 0
  %vm1152 = vcmp.ge.s32.totalorder %v1142, 0
  %vm1153 = vcmp.ge.s32.totalorder %v1143, 0
  %vm1154 = vcmp.ge.s32.totalorder %v1144, 0
  %vm1155 = vcmp.ge.s32.totalorder %v1145, 0
  %vm1156 = vcmp.ge.s32.totalorder %v1146, 0
  %vm1157 = vcmp.lt.s32.totalorder %v1137, 8
  %vm1158 = vcmp.lt.s32.totalorder %v1138, 8
  %vm1159 = vcmp.lt.s32.totalorder %v1139, 8
  %vm1160 = vcmp.lt.s32.totalorder %v1140, 8
  %vm1161 = vcmp.lt.s32.totalorder %v1141, 8
  %vm1162 = vcmp.lt.s32.totalorder %v1142, 8
  %vm1163 = vcmp.lt.s32.totalorder %v1143, 8
  %vm1164 = vcmp.lt.s32.totalorder %v1144, 8
  %vm1165 = vcmp.lt.s32.totalorder %v1145, 8
  %vm1166 = vcmp.lt.s32.totalorder %v1146, 8
  %vm1167 = vmand %vm1147, %vm1157
  %vm1168 = vmand %vm1148, %vm1158
  %vm1169 = vmand %vm1149, %vm1159
  %vm1170 = vmand %vm1150, %vm1160
  %vm1171 = vmand %vm1151, %vm1161
  %vm1172 = vmand %vm1152, %vm1162
  %vm1173 = vmand %vm1153, %vm1163
  %vm1174 = vmand %vm1154, %vm1164
  %vm1175 = vmand %vm1155, %vm1165
  %vm1176 = vmand %vm1156, %vm1166
  %v1177 = vsel %vm1167, 1, 0
  %v1178 = vsel %vm1168, 1, 0
  %v1179 = vsel %vm1169, 1, 0
  %v1180 = vsel %vm1170, 1, 0
  %v1181 = vsel %vm1171, 1, 0
  %v1182 = vsel %vm1172, 1, 0
  %v1183 = vsel %vm1173, 1, 0
  %v1184 = vsel %vm1174, 1, 0
  %v1185 = vsel %vm1175, 1, 0
  %v1186 = vsel %vm1176, 1, 0
  %vm1187 = vcmp.eq.s32.totalorder %v1177, 1
  %vm1188 = vcmp.eq.s32.totalorder %v1178, 1
  %vm1189 = vcmp.eq.s32.totalorder %v1179, 1
  %vm1190 = vcmp.eq.s32.totalorder %v1180, 1
  %vm1191 = vcmp.eq.s32.totalorder %v1181, 1
  %vm1192 = vcmp.eq.s32.totalorder %v1182, 1
  %vm1193 = vcmp.eq.s32.totalorder %v1183, 1
  %vm1194 = vcmp.eq.s32.totalorder %v1184, 1
  %vm1195 = vcmp.eq.s32.totalorder %v1185, 1
  %vm1196 = vcmp.eq.s32.totalorder %v1186, 1
  %v1197 = vsel %vm1187, %v1114, 0.0
  %v1198 = vsel %vm1188, %v1115, 0.0
  %v1199 = vsel %vm1189, %v1116, 0.0
  %v1200 = vsel %vm1190, %v1117, 0.0
  %v1201 = vsel %vm1191, %v1118, 0.0
  %v1202 = vsel %vm1192, %v1119, 0.0
  %v1203 = vsel %vm1193, %v1120, 0.0
  %v1204 = vsel %vm1194, %v1121, 0.0
  %v1205 = vsel %vm1195, %v1122, 0.0
  %v1206 = vsel %vm1196, %v1123, 0.0
  %v1207 = vpack.c.bf16 %v1198, %v1197
  %v1208 = vpack.c.bf16 %v1200, %v1199
  %v1209 = vpack.c.bf16 %v1202, %v1201
  %v1210 = vpack.c.bf16 %v1204, %v1203
  %v1211 = vpack.c.bf16 %v1206, %v1205
  %v1212 = vld [vmem:[%s3] sm:$0xf]
  %v1213 = vld [vmem:[%s3 + $0x4] sm:$0xf]
  %v1214 = vld [vmem:[%s3 + $0x8] sm:$0xf]
  %v1215 = vld [vmem:[%s3 + $0xc] sm:$0xf]
  %v1216 = vld [vmem:[%s3 + $0x10] sm:$0xf]
  %v1217 = vld [vmem:[%s3 + $0x14] sm:$0xf]
  %v1218 = vld [vmem:[%s3 + $0x18] sm:$0xf]
  %v1219 = vld [vmem:[%s3 + $0x1c] sm:$0xf]
  %s1220 = scalar_lea.vmem %s3, 32
  %v1221 = vld [vmem:[%s1220] sm:$0xf]
  %v1222 = vld [vmem:[%s1220 + $0x4] sm:$0xf]
  %v1223 = vld [vmem:[%s1220 + $0x8] sm:$0xf]
  %v1224 = vld [vmem:[%s1220 + $0xc] sm:$0xf]
  %v1225 = vld [vmem:[%s1220 + $0x10] sm:$0xf]
  %v1226 = vld [vmem:[%s1220 + $0x14] sm:$0xf]
  %v1227 = vld [vmem:[%s1220 + $0x18] sm:$0xf]
  %v1228 = vld [vmem:[%s1220 + $0x1c] sm:$0xf]
  %v1230 = vshrl.u32 %v1207, 16
  %v1232 = vshll.u32 %v1207, 16
  %v1234 = vrot.slane %v1232, 1
  %v1235 = vor.u32 %v1230, %v1234
  %v1237 = vshll.u32 %v1208, 16
  %v1239 = vrot.slane %v1237, 1
  %v1240 = vsel %vm92, %v1235, %v1239
  %v1241 = vshrl.u32 %v1208, 16
  %v1243 = vor.u32 %v1241, %v1239
  %v1245 = vshll.u32 %v1209, 16
  %v1247 = vrot.slane %v1245, 1
  %v1248 = vsel %vm92, %v1243, %v1247
  %v1249 = vshrl.u32 %v1209, 16
  %v1251 = vor.u32 %v1249, %v1247
  %v1253 = vshll.u32 %v1210, 16
  %v1255 = vrot.slane %v1253, 1
  %v1256 = vsel %vm92, %v1251, %v1255
  %v1257 = vshrl.u32 %v1210, 16
  %v1259 = vor.u32 %v1257, %v1255
  %v1261 = vshll.u32 %v1211, 16
  %v1263 = vrot.slane %v1261, 1
  %v1264 = vsel %vm92, %v1259, %v1263
  %v1265 = vshrl.u32 %v1211, 16
  %v1267 = vor.u32 %v1265, %v1263
  %v1276 = vunpack.c.l.b16 %v1221
  %v1277 = vunpack.c.l.b16 %v1222
  %v1278 = vunpack.c.l.b16 %v1223
  %v1279 = vunpack.c.l.b16 %v1224
  %v1280 = vunpack.c.l.b16 %v1225
  %v1281 = vunpack.c.l.b16 %v1226
  %v1282 = vunpack.c.l.b16 %v1227
  %v1283 = vunpack.c.l.b16 %v1228
  %v1284 = vpack.c.b16 %v1277, %v1276
  %v1285 = vpack.c.b16 %v1279, %v1278
  %v1286 = vpack.c.b16 %v1281, %v1280
  %v1287 = vpack.c.b16 %v1283, %v1282
  %v1293 = vsel %vm156, %v1240, 0
  %v1296 = vsel %vm156, %v1248, 0
  %v1299 = vsel %vm156, %v1256, 0
  %v1302 = vsel %vm156, %v1264, 0
  %v1305 = vsel %vm156, %v1267, 0
  %1307 = vmatprep.subr.bf16.mxu0 0
  %1308 = vmatpush1.bf16.msra.mxu0 %v1284
  %1309 = vmatprep.subr.bf16.mxu0 0
  %1310 = vmatpush1.bf16.msra.mxu0 %v1285
  %1311 = vmatprep.subr.bf16.mxu0 0
  %1312 = vmatpush1.bf16.msra.mxu0 %v1286
  %1313 = vmatprep.subr.bf16.mxu0 0
  %1314 = vmatpush1.bf16.msra.mxu0 %v1287
  %1315 = vmatprep.subr.bf16.mxu0 0
  %1316 = vmatpush1.bf16.msra.mxu0 0
  %1317 = vmatprep.subr.bf16.mxu0 0
  %1318 = vmatpush1.bf16.msra.mxu0 0
  %1319 = vmatprep.subr.bf16.mxu0 0
  %1320 = vmatpush1.bf16.msra.mxu0 0
  %1321 = vmatprep.subr.bf16.mxu0 0
  %1322 = vmatpush1.bf16.msra.mxu0 0
  %1323 = vmatprep.subr.bf16.mxu0 0
  %1324 = vmatpush1.bf16.msra.mxu0 0
  %1325 = vmatprep.subr.bf16.mxu0 0
  %1326 = vmatpush1.bf16.msra.mxu0 0
  %1327 = vmatprep.subr.bf16.mxu0 0
  %1328 = vmatpush1.bf16.msra.mxu0 0
  %1329 = vmatprep.subr.bf16.mxu0 0
  %1330 = vmatpush1.bf16.msra.mxu0 0
  %1331 = vmatprep.subr.bf16.mxu0 0
  %1332 = vmatpush1.bf16.msra.mxu0 0
  %1333 = vmatprep.subr.bf16.mxu0 0
  %1334 = vmatpush1.bf16.msra.mxu0 0
  %1335 = vmatprep.subr.bf16.mxu0 0
  %1336 = vmatpush1.bf16.msra.mxu0 0
  %1337 = vmatprep.subr.bf16.mxu0 0
  %1338 = vmatpush1.bf16.msra.mxu0 0
  %1339 = vmatprep.mubr.bf16.mxu0 0
  %1340 = vmatmul.mubr.bf16.gmra.mrb[0].mxu0 %v1293
  %v1341 = vpop.f32.mrb[0].mxu0
  %v1342 = vadd.f32 0.0, %v1341
  %v1343 = vpop.f32.mrb[0].mxu0
  %v1344 = vpop.f32.mrb[0].mxu0
  %v1345 = vadd.f32 0.0, %v1344
  %v1346 = vpop.f32.mrb[0].mxu0
  %1347 = vmatprep.mubr.bf16.mxu0 0
  %1348 = vmatmul.mubr.bf16.gmra.mrb[0].mxu0 %v1296
  %v1349 = vpop.f32.mrb[0].mxu0
  %v1350 = vadd.f32 0.0, %v1349
  %v1351 = vpop.f32.mrb[0].mxu0
  %v1352 = vpop.f32.mrb[0].mxu0
  %v1353 = vadd.f32 0.0, %v1352
  %v1354 = vpop.f32.mrb[0].mxu0
  %1355 = vmatprep.mubr.bf16.mxu0 0
  %1356 = vmatmul.mubr.bf16.gmra.mrb[0].mxu0 %v1299
  %v1357 = vpop.f32.mrb[0].mxu0
  %v1358 = vadd.f32 0.0, %v1357
  %v1359 = vpop.f32.mrb[0].mxu0
  %v1360 = vpop.f32.mrb[0].mxu0
  %v1361 = vadd.f32 0.0, %v1360
  %v1362 = vpop.f32.mrb[0].mxu0
  %1363 = vmatprep.mubr.bf16.mxu0 0
  %1364 = vmatmul.mubr.bf16.gmra.mrb[0].mxu0 %v1302
  %v1365 = vpop.f32.mrb[0].mxu0
  %v1366 = vadd.f32 0.0, %v1365
  %v1367 = vpop.f32.mrb[0].mxu0
  %v1368 = vpop.f32.mrb[0].mxu0
  %v1369 = vadd.f32 0.0, %v1368
  %v1370 = vpop.f32.mrb[0].mxu0
  %1371 = vmatprep.mubr.bf16.mxu0 0
  %1372 = vmatmul.mubr.bf16.gmra.mrb[0].mxu0 %v1305
  %v1373 = vpop.f32.mrb[0].mxu0
  %v1374 = vadd.f32 0.0, %v1373
  %v1375 = vpop.f32.mrb[0].mxu0
  %v1376 = vpop.f32.mrb[0].mxu0
  %v1377 = vpop.f32.mrb[0].mxu0
  %1378 = vdwg.mxu0
  %v1387 = vunpack.c.l.b16 %v1212
  %v1388 = vunpack.c.l.b16 %v1213
  %v1389 = vunpack.c.l.b16 %v1214
  %v1390 = vunpack.c.l.b16 %v1215
  %v1391 = vunpack.c.l.b16 %v1216
  %v1392 = vunpack.c.l.b16 %v1217
  %v1393 = vunpack.c.l.b16 %v1218
  %v1394 = vunpack.c.l.b16 %v1219
  %v1395 = vpack.c.b16 %v1388, %v1387
  %v1396 = vpack.c.b16 %v1390, %v1389
  %v1397 = vpack.c.b16 %v1392, %v1391
  %v1398 = vpack.c.b16 %v1394, %v1393
  %v1403 = vsel %vm156, %v1207, 0
  %v1405 = vsel %vm156, %v1208, 0
  %v1407 = vsel %vm156, %v1209, 0
  %v1409 = vsel %vm156, %v1210, 0
  %v1411 = vsel %vm156, %v1211, 0
  %1413 = vmatprep.subr.bf16.mxu0 0
  %1414 = vmatpush1.bf16.msra.mxu0 %v1395
  %1415 = vmatprep.subr.bf16.mxu0 0
  %1416 = vmatpush1.bf16.msra.mxu0 %v1396
  %1417 = vmatprep.subr.bf16.mxu0 0
  %1418 = vmatpush1.bf16.msra.mxu0 %v1397
  %1419 = vmatprep.subr.bf16.mxu0 0
  %1420 = vmatpush1.bf16.msra.mxu0 %v1398
  %1421 = vmatprep.subr.bf16.mxu0 0
  %1422 = vmatpush1.bf16.msra.mxu0 0
  %1423 = vmatprep.subr.bf16.mxu0 0
  %1424 = vmatpush1.bf16.msra.mxu0 0
  %1425 = vmatprep.subr.bf16.mxu0 0
  %1426 = vmatpush1.bf16.msra.mxu0 0
  %1427 = vmatprep.subr.bf16.mxu0 0
  %1428 = vmatpush1.bf16.msra.mxu0 0
  %1429 = vmatprep.subr.bf16.mxu0 0
  %1430 = vmatpush1.bf16.msra.mxu0 0
  %1431 = vmatprep.subr.bf16.mxu0 0
  %1432 = vmatpush1.bf16.msra.mxu0 0
  %1433 = vmatprep.subr.bf16.mxu0 0
  %1434 = vmatpush1.bf16.msra.mxu0 0
  %1435 = vmatprep.subr.bf16.mxu0 0
  %1436 = vmatpush1.bf16.msra.mxu0 0
  %1437 = vmatprep.subr.bf16.mxu0 0
  %1438 = vmatpush1.bf16.msra.mxu0 0
  %1439 = vmatprep.subr.bf16.mxu0 0
  %1440 = vmatpush1.bf16.msra.mxu0 0
  %1441 = vmatprep.subr.bf16.mxu0 0
  %1442 = vmatpush1.bf16.msra.mxu0 0
  %1443 = vmatprep.subr.bf16.mxu0 0
  %1444 = vmatpush1.bf16.msra.mxu0 0
  %1445 = vmatprep.mubr.bf16.mxu0 0
  %1446 = vmatmul.mubr.bf16.gmra.mrb[0].mxu0 %v1403
  %v1447 = vpop.f32.mrb[0].mxu0
  %v1448 = vadd.f32 %v1342, %v1447
  %v1449 = vpop.f32.mrb[0].mxu0
  %v1450 = vpop.f32.mrb[0].mxu0
  %v1451 = vadd.f32 %v1345, %v1450
  %v1452 = vpop.f32.mrb[0].mxu0
  %1453 = vmatprep.mubr.bf16.mxu0 0
  %1454 = vmatmul.mubr.bf16.gmra.mrb[0].mxu0 %v1405
  %v1455 = vpop.f32.mrb[0].mxu0
  %v1456 = vadd.f32 %v1350, %v1455
  %v1457 = vpop.f32.mrb[0].mxu0
  %v1458 = vpop.f32.mrb[0].mxu0
  %v1459 = vadd.f32 %v1353, %v1458
  %v1460 = vpop.f32.mrb[0].mxu0
  %1461 = vmatprep.mubr.bf16.mxu0 0
  %1462 = vmatmul.mubr.bf16.gmra.mrb[0].mxu0 %v1407
  %v1463 = vpop.f32.mrb[0].mxu0
  %v1464 = vadd.f32 %v1358, %v1463
  %v1465 = vpop.f32.mrb[0].mxu0
  %v1466 = vpop.f32.mrb[0].mxu0
  %v1467 = vadd.f32 %v1361, %v1466
  %v1468 = vpop.f32.mrb[0].mxu0
  %1469 = vmatprep.mubr.bf16.mxu0 0
  %1470 = vmatmul.mubr.bf16.gmra.mrb[0].mxu0 %v1409
  %v1471 = vpop.f32.mrb[0].mxu0
  %v1472 = vadd.f32 %v1366, %v1471
  %v1473 = vpop.f32.mrb[0].mxu0
  %v1474 = vpop.f32.mrb[0].mxu0
  %v1475 = vadd.f32 %v1369, %v1474
  %v1476 = vpop.f32.mrb[0].mxu0
  %1477 = vmatprep.mubr.bf16.mxu0 0
  %1478 = vmatmul.mubr.bf16.gmra.mrb[0].mxu0 %v1411
  %v1479 = vpop.f32.mrb[0].mxu0
  %v1480 = vadd.f32 %v1374, %v1479
  %v1481 = vpop.f32.mrb[0].mxu0
  %v1482 = vpop.f32.mrb[0].mxu0
  %v1483 = vpop.f32.mrb[0].mxu0
  %1484 = vdwg.mxu0
  %s1485 = scalar_lea.vmem %s3, 64
  %v1486 = vld [vmem:[%s1485] sm:$0xf]
  %v1487 = vld [vmem:[%s1485 + $0x4] sm:$0xf]
  %v1488 = vld [vmem:[%s1485 + $0x8] sm:$0xf]
  %v1489 = vld [vmem:[%s1485 + $0xc] sm:$0xf]
  %v1490 = vld [vmem:[%s1485 + $0x10] sm:$0xf]
  %v1491 = vld [vmem:[%s1485 + $0x14] sm:$0xf]
  %v1492 = vld [vmem:[%s1485 + $0x18] sm:$0xf]
  %v1493 = vld [vmem:[%s1485 + $0x1c] sm:$0xf]
  %v1499 = vrot.slane %v1207, 1
  %v1500 = vrot.slane %v1208, 1
  %v1501 = vsel %vm361, %v1499, %v1500
  %v1502 = vrot.slane %v1209, 1
  %v1503 = vsel %vm361, %v1500, %v1502
  %v1504 = vrot.slane %v1210, 1
  %v1505 = vsel %vm361, %v1502, %v1504
  %v1506 = vrot.slane %v1211, 1
  %v1507 = vsel %vm361, %v1504, %v1506
  %v1516 = vunpack.c.l.b16 %v1486
  %v1517 = vunpack.c.l.b16 %v1487
  %v1518 = vunpack.c.l.b16 %v1488
  %v1519 = vunpack.c.l.b16 %v1489
  %v1520 = vunpack.c.l.b16 %v1490
  %v1521 = vunpack.c.l.b16 %v1491
  %v1522 = vunpack.c.l.b16 %v1492
  %v1523 = vunpack.c.l.b16 %v1493
  %v1524 = vpack.c.b16 %v1517, %v1516
  %v1525 = vpack.c.b16 %v1519, %v1518
  %v1526 = vpack.c.b16 %v1521, %v1520
  %v1527 = vpack.c.b16 %v1523, %v1522
  %v1533 = vsel %vm156, %v1501, 0
  %v1536 = vsel %vm156, %v1503, 0
  %v1539 = vsel %vm156, %v1505, 0
  %v1542 = vsel %vm156, %v1507, 0
  %v1545 = vsel %vm156, %v1506, 0
  %1547 = vmatprep.subr.bf16.mxu0 0
  %1548 = vmatpush1.bf16.msra.mxu0 %v1524
  %1549 = vmatprep.subr.bf16.mxu0 0
  %1550 = vmatpush1.bf16.msra.mxu0 %v1525
  %1551 = vmatprep.subr.bf16.mxu0 0
  %1552 = vmatpush1.bf16.msra.mxu0 %v1526
  %1553 = vmatprep.subr.bf16.mxu0 0
  %1554 = vmatpush1.bf16.msra.mxu0 %v1527
  %1555 = vmatprep.subr.bf16.mxu0 0
  %1556 = vmatpush1.bf16.msra.mxu0 0
  %1557 = vmatprep.subr.bf16.mxu0 0
  %1558 = vmatpush1.bf16.msra.mxu0 0
  %1559 = vmatprep.subr.bf16.mxu0 0
  %1560 = vmatpush1.bf16.msra.mxu0 0
  %1561 = vmatprep.subr.bf16.mxu0 0
  %1562 = vmatpush1.bf16.msra.mxu0 0
  %1563 = vmatprep.subr.bf16.mxu0 0
  %1564 = vmatpush1.bf16.msra.mxu0 0
  %1565 = vmatprep.subr.bf16.mxu0 0
  %1566 = vmatpush1.bf16.msra.mxu0 0
  %1567 = vmatprep.subr.bf16.mxu0 0
  %1568 = vmatpush1.bf16.msra.mxu0 0
  %1569 = vmatprep.subr.bf16.mxu0 0
  %1570 = vmatpush1.bf16.msra.mxu0 0
  %1571 = vmatprep.subr.bf16.mxu0 0
  %1572 = vmatpush1.bf16.msra.mxu0 0
  %1573 = vmatprep.subr.bf16.mxu0 0
  %1574 = vmatpush1.bf16.msra.mxu0 0
  %1575 = vmatprep.subr.bf16.mxu0 0
  %1576 = vmatpush1.bf16.msra.mxu0 0
  %1577 = vmatprep.subr.bf16.mxu0 0
  %1578 = vmatpush1.bf16.msra.mxu0 0
  %1579 = vmatprep.mubr.bf16.mxu0 0
  %1580 = vmatmul.mubr.bf16.gmra.mrb[0].mxu0 %v1533
  %v1581 = vpop.f32.mrb[0].mxu0
  %v1582 = vadd.f32 0.0, %v1581
  %v1583 = vpop.f32.mrb[0].mxu0
  %v1584 = vpop.f32.mrb[0].mxu0
  %v1585 = vadd.f32 0.0, %v1584
  %v1586 = vpop.f32.mrb[0].mxu0
  %1587 = vmatprep.mubr.bf16.mxu0 0
  %1588 = vmatmul.mubr.bf16.gmra.mrb[0].mxu0 %v1536
  %v1589 = vpop.f32.mrb[0].mxu0
  %v1590 = vadd.f32 0.0, %v1589
  %v1591 = vpop.f32.mrb[0].mxu0
  %v1592 = vpop.f32.mrb[0].mxu0
  %v1593 = vadd.f32 0.0, %v1592
  %v1594 = vpop.f32.mrb[0].mxu0
  %1595 = vmatprep.mubr.bf16.mxu0 0
  %1596 = vmatmul.mubr.bf16.gmra.mrb[0].mxu0 %v1539
  %v1597 = vpop.f32.mrb[0].mxu0
  %v1598 = vadd.f32 0.0, %v1597
  %v1599 = vpop.f32.mrb[0].mxu0
  %v1600 = vpop.f32.mrb[0].mxu0
  %v1601 = vadd.f32 0.0, %v1600
  %v1602 = vpop.f32.mrb[0].mxu0
  %1603 = vmatprep.mubr.bf16.mxu0 0
  %1604 = vmatmul.mubr.bf16.gmra.mrb[0].mxu0 %v1542
  %v1605 = vpop.f32.mrb[0].mxu0
  %v1606 = vadd.f32 0.0, %v1605
  %v1607 = vpop.f32.mrb[0].mxu0
  %v1608 = vpop.f32.mrb[0].mxu0
  %v1609 = vadd.f32 0.0, %v1608
  %v1610 = vpop.f32.mrb[0].mxu0
  %1611 = vmatprep.mubr.bf16.mxu0 0
  %1612 = vmatmul.mubr.bf16.gmra.mrb[0].mxu0 %v1545
  %v1613 = vpop.f32.mrb[0].mxu0
  %v1614 = vadd.f32 0.0, %v1613
  %v1615 = vpop.f32.mrb[0].mxu0
  %v1616 = vpop.f32.mrb[0].mxu0
  %v1617 = vpop.f32.mrb[0].mxu0
  %1618 = vdwg.mxu0
  %v1619 = vadd.f32 %v1448, %v1582
  %v1620 = vadd.f32 %v1451, %v1585
  %v1621 = vadd.f32 %v1456, %v1590
  %v1622 = vadd.f32 %v1459, %v1593
  %v1623 = vadd.f32 %v1464, %v1598
  %v1624 = vadd.f32 %v1467, %v1601
  %v1625 = vadd.f32 %v1472, %v1606
  %v1626 = vadd.f32 %v1475, %v1609
  %v1627 = vadd.f32 %v1480, %v1614
  %v1628 = vld [vmem:[%s4] sm:$0x1]
  %v1630 = vlaneseq
  %v1631 = vshrl.u32 %v1630, 7
  %v1632 = vsub.s32 0, %v1631
  %v1633 = vrot.slane %v1628, %v1632
  %v1635 = vadd.f32 %v1619, %v1633
  %v1636 = vadd.f32 %v1620, %v1633
  %v1637 = vadd.f32 %v1621, %v1633
  %v1638 = vadd.f32 %v1622, %v1633
  %v1639 = vadd.f32 %v1623, %v1633
  %v1640 = vadd.f32 %v1624, %v1633
  %v1641 = vadd.f32 %v1625, %v1633
  %v1642 = vadd.f32 %v1626, %v1633
  %v1643 = vadd.f32 %v1627, %v1633
  %s1644 = sadd.s32 %s39, 4294967292
  %v1645 = vstv %s1644
  %v1646 = vadd.s32 %v1125, %v1645
  %v1647 = vadd.s32 %v1126, %v1645
  %v1648 = vadd.s32 %v1127, %v1645
  %v1649 = vadd.s32 %v1128, %v1645
  %v1650 = vadd.s32 %v1129, %v1645
  %v1651 = vadd.s32 %v1130, %v1645
  %v1652 = vadd.s32 %v1131, %v1645
  %v1653 = vadd.s32 %v1132, %v1645
  %v1654 = vadd.s32 %v1133, %v1645
  %vm1655 = vcmp.ge.s32.totalorder %v1646, 0
  %vm1656 = vcmp.ge.s32.totalorder %v1647, 0
  %vm1657 = vcmp.ge.s32.totalorder %v1648, 0
  %vm1658 = vcmp.ge.s32.totalorder %v1649, 0
  %vm1659 = vcmp.ge.s32.totalorder %v1650, 0
  %vm1660 = vcmp.ge.s32.totalorder %v1651, 0
  %vm1661 = vcmp.ge.s32.totalorder %v1652, 0
  %vm1662 = vcmp.ge.s32.totalorder %v1653, 0
  %vm1663 = vcmp.ge.s32.totalorder %v1654, 0
  %vm1664 = vcmp.lt.s32.totalorder %v1646, 8
  %vm1665 = vcmp.lt.s32.totalorder %v1647, 8
  %vm1666 = vcmp.lt.s32.totalorder %v1648, 8
  %vm1667 = vcmp.lt.s32.totalorder %v1649, 8
  %vm1668 = vcmp.lt.s32.totalorder %v1650, 8
  %vm1669 = vcmp.lt.s32.totalorder %v1651, 8
  %vm1670 = vcmp.lt.s32.totalorder %v1652, 8
  %vm1671 = vcmp.lt.s32.totalorder %v1653, 8
  %vm1672 = vcmp.lt.s32.totalorder %v1654, 8
  %vm1673 = vmand %vm1655, %vm1664
  %vm1674 = vmand %vm1656, %vm1665
  %vm1675 = vmand %vm1657, %vm1666
  %vm1676 = vmand %vm1658, %vm1667
  %vm1677 = vmand %vm1659, %vm1668
  %vm1678 = vmand %vm1660, %vm1669
  %vm1679 = vmand %vm1661, %vm1670
  %vm1680 = vmand %vm1662, %vm1671
  %vm1681 = vmand %vm1663, %vm1672
  %v1682 = vsel %vm1673, 1, 0
  %v1683 = vsel %vm1674, 1, 0
  %v1684 = vsel %vm1675, 1, 0
  %v1685 = vsel %vm1676, 1, 0
  %v1686 = vsel %vm1677, 1, 0
  %v1687 = vsel %vm1678, 1, 0
  %v1688 = vsel %vm1679, 1, 0
  %v1689 = vsel %vm1680, 1, 0
  %v1690 = vsel %vm1681, 1, 0
  %vm1691 = vcmp.eq.s32.totalorder %v1682, 1
  %vm1692 = vcmp.eq.s32.totalorder %v1683, 1
  %vm1693 = vcmp.eq.s32.totalorder %v1684, 1
  %vm1694 = vcmp.eq.s32.totalorder %v1685, 1
  %vm1695 = vcmp.eq.s32.totalorder %v1686, 1
  %vm1696 = vcmp.eq.s32.totalorder %v1687, 1
  %vm1697 = vcmp.eq.s32.totalorder %v1688, 1
  %vm1698 = vcmp.eq.s32.totalorder %v1689, 1
  %vm1699 = vcmp.eq.s32.totalorder %v1690, 1
  %v1700 = vsel %vm1691, %v1635, 0.0
  %v1701 = vsel %vm1692, %v1636, 0.0
  %v1702 = vsel %vm1693, %v1637, 0.0
  %v1703 = vsel %vm1694, %v1638, 0.0
  %v1704 = vsel %vm1695, %v1639, 0.0
  %v1705 = vsel %vm1696, %v1640, 0.0
  %v1706 = vsel %vm1697, %v1641, 0.0
  %v1707 = vsel %vm1698, %v1642, 0.0
  %v1708 = vsel %vm1699, %v1643, 0.0
  %vm1709 = vcmp.ge.f32.partialorder %v1700, 0.0
  %vm1710 = vcmp.ge.f32.partialorder %v1701, 0.0
  %vm1711 = vcmp.ge.f32.partialorder %v1702, 0.0
  %vm1712 = vcmp.ge.f32.partialorder %v1703, 0.0
  %vm1713 = vcmp.ge.f32.partialorder %v1704, 0.0
  %vm1714 = vcmp.ge.f32.partialorder %v1705, 0.0
  %vm1715 = vcmp.ge.f32.partialorder %v1706, 0.0
  %vm1716 = vcmp.ge.f32.partialorder %v1707, 0.0
  %vm1717 = vcmp.ge.f32.partialorder %v1708, 0.0
  %v1718 = vmul.f32 %v1700, 0.1
  %v1719 = vmul.f32 %v1701, 0.1
  %v1720 = vmul.f32 %v1702, 0.1
  %v1721 = vmul.f32 %v1703, 0.1
  %v1722 = vmul.f32 %v1704, 0.1
  %v1723 = vmul.f32 %v1705, 0.1
  %v1724 = vmul.f32 %v1706, 0.1
  %v1725 = vmul.f32 %v1707, 0.1
  %v1726 = vmul.f32 %v1708, 0.1
  %v1727 = vsel %vm1709, %v1700, %v1718
  %v1728 = vsel %vm1710, %v1701, %v1719
  %v1729 = vsel %vm1711, %v1702, %v1720
  %v1730 = vsel %vm1712, %v1703, %v1721
  %v1731 = vsel %vm1713, %v1704, %v1722
  %v1732 = vsel %vm1714, %v1705, %v1723
  %v1733 = vsel %vm1715, %v1706, %v1724
  %v1734 = vsel %vm1716, %v1707, %v1725
  %v1735 = vsel %vm1717, %v1708, %v1726
  %v1736 = vpack.c.bf16 %v1728, %v1727
  %v1737 = vpack.c.bf16 %v1730, %v1729
  %v1738 = vpack.c.bf16 %v1732, %v1731
  %v1739 = vpack.c.bf16 %v1734, %v1733
  %v1740 = vpack.c.bf16 %v1735, %v1735
  %v1741 = vld [vmem:[%s5] sm:$0xf]
  %v1742 = vld [vmem:[%s5 + $0x4] sm:$0xf]
  %v1743 = vld [vmem:[%s5 + $0x8] sm:$0xf]
  %v1744 = vld [vmem:[%s5 + $0xc] sm:$0xf]
  %v1745 = vld [vmem:[%s5 + $0x10] sm:$0xf]
  %v1746 = vld [vmem:[%s5 + $0x14] sm:$0xf]
  %v1747 = vld [vmem:[%s5 + $0x18] sm:$0xf]
  %v1748 = vld [vmem:[%s5 + $0x1c] sm:$0xf]
  %s1749 = scalar_lea.vmem %s5, 32
  %v1750 = vld [vmem:[%s1749] sm:$0xf]
  %v1751 = vld [vmem:[%s1749 + $0x4] sm:$0xf]
  %v1752 = vld [vmem:[%s1749 + $0x8] sm:$0xf]
  %v1753 = vld [vmem:[%s1749 + $0xc] sm:$0xf]
  %v1754 = vld [vmem:[%s1749 + $0x10] sm:$0xf]
  %v1755 = vld [vmem:[%s1749 + $0x14] sm:$0xf]
  %v1756 = vld [vmem:[%s1749 + $0x18] sm:$0xf]
  %v1757 = vld [vmem:[%s1749 + $0x1c] sm:$0xf]
  %v1759 = vshrl.u32 %v1736, 16
  %v1761 = vshll.u32 %v1736, 16
  %v1763 = vrot.slane %v1761, 1
  %v1764 = vor.u32 %v1759, %v1763
  %v1766 = vshll.u32 %v1737, 16
  %v1768 = vrot.slane %v1766, 1
  %v1769 = vsel %vm92, %v1764, %v1768
  %v1770 = vshrl.u32 %v1737, 16
  %v1772 = vor.u32 %v1770, %v1768
  %v1774 = vshll.u32 %v1738, 16
  %v1776 = vrot.slane %v1774, 1
  %v1777 = vsel %vm92, %v1772, %v1776
  %v1778 = vshrl.u32 %v1738, 16
  %v1780 = vor.u32 %v1778, %v1776
  %v1782 = vshll.u32 %v1739, 16
  %v1784 = vrot.slane %v1782, 1
  %v1785 = vsel %vm92, %v1780, %v1784
  %v1786 = vshrl.u32 %v1739, 16
  %v1788 = vor.u32 %v1786, %v1784
  %v1790 = vshll.u32 %v1740, 16
  %v1792 = vrot.slane %v1790, 1
  %v1793 = vsel %vm92, %v1788, %v1792
  %v1794 = vshrl.u32 %v1740, 16
  %v1796 = vor.u32 %v1794, %v1792
  %v1805 = vunpack.c.l.b16 %v1750
  %v1806 = vunpack.c.l.b16 %v1751
  %v1807 = vunpack.c.l.b16 %v1752
  %v1808 = vunpack.c.l.b16 %v1753
  %v1809 = vunpack.c.l.b16 %v1754
  %v1810 = vunpack.c.l.b16 %v1755
  %v1811 = vunpack.c.l.b16 %v1756
  %v1812 = vunpack.c.l.b16 %v1757
  %v1813 = vpack.c.b16 %v1806, %v1805
  %v1814 = vpack.c.b16 %v1808, %v1807
  %v1815 = vpack.c.b16 %v1810, %v1809
  %v1816 = vpack.c.b16 %v1812, %v1811
  %v1822 = vsel %vm156, %v1769, 0
  %v1825 = vsel %vm156, %v1777, 0
  %v1828 = vsel %vm156, %v1785, 0
  %v1831 = vsel %vm156, %v1793, 0
  %v1834 = vsel %vm156, %v1796, 0
  %1836 = vmatprep.subr.bf16.mxu0 0
  %1837 = vmatpush1.bf16.msra.mxu0 %v1813
  %1838 = vmatprep.subr.bf16.mxu0 0
  %1839 = vmatpush1.bf16.msra.mxu0 %v1814
  %1840 = vmatprep.subr.bf16.mxu0 0
  %1841 = vmatpush1.bf16.msra.mxu0 %v1815
  %1842 = vmatprep.subr.bf16.mxu0 0
  %1843 = vmatpush1.bf16.msra.mxu0 %v1816
  %1844 = vmatprep.subr.bf16.mxu0 0
  %1845 = vmatpush1.bf16.msra.mxu0 0
  %1846 = vmatprep.subr.bf16.mxu0 0
  %1847 = vmatpush1.bf16.msra.mxu0 0
  %1848 = vmatprep.subr.bf16.mxu0 0
  %1849 = vmatpush1.bf16.msra.mxu0 0
  %1850 = vmatprep.subr.bf16.mxu0 0
  %1851 = vmatpush1.bf16.msra.mxu0 0
  %1852 = vmatprep.subr.bf16.mxu0 0
  %1853 = vmatpush1.bf16.msra.mxu0 0
  %1854 = vmatprep.subr.bf16.mxu0 0
  %1855 = vmatpush1.bf16.msra.mxu0 0
  %1856 = vmatprep.subr.bf16.mxu0 0
  %1857 = vmatpush1.bf16.msra.mxu0 0
  %1858 = vmatprep.subr.bf16.mxu0 0
  %1859 = vmatpush1.bf16.msra.mxu0 0
  %1860 = vmatprep.subr.bf16.mxu0 0
  %1861 = vmatpush1.bf16.msra.mxu0 0
  %1862 = vmatprep.subr.bf16.mxu0 0
  %1863 = vmatpush1.bf16.msra.mxu0 0
  %1864 = vmatprep.subr.bf16.mxu0 0
  %1865 = vmatpush1.bf16.msra.mxu0 0
  %1866 = vmatprep.subr.bf16.mxu0 0
  %1867 = vmatpush1.bf16.msra.mxu0 0
  %1868 = vmatprep.mubr.bf16.mxu0 0
  %1869 = vmatmul.mubr.bf16.gmra.mrb[0].mxu0 %v1822
  %v1870 = vpop.f32.mrb[0].mxu0
  %v1871 = vadd.f32 0.0, %v1870
  %v1872 = vpop.f32.mrb[0].mxu0
  %v1873 = vpop.f32.mrb[0].mxu0
  %v1874 = vadd.f32 0.0, %v1873
  %v1875 = vpop.f32.mrb[0].mxu0
  %1876 = vmatprep.mubr.bf16.mxu0 0
  %1877 = vmatmul.mubr.bf16.gmra.mrb[0].mxu0 %v1825
  %v1878 = vpop.f32.mrb[0].mxu0
  %v1879 = vadd.f32 0.0, %v1878
  %v1880 = vpop.f32.mrb[0].mxu0
  %v1881 = vpop.f32.mrb[0].mxu0
  %v1882 = vadd.f32 0.0, %v1881
  %v1883 = vpop.f32.mrb[0].mxu0
  %1884 = vmatprep.mubr.bf16.mxu0 0
  %1885 = vmatmul.mubr.bf16.gmra.mrb[0].mxu0 %v1828
  %v1886 = vpop.f32.mrb[0].mxu0
  %v1887 = vadd.f32 0.0, %v1886
  %v1888 = vpop.f32.mrb[0].mxu0
  %v1889 = vpop.f32.mrb[0].mxu0
  %v1890 = vadd.f32 0.0, %v1889
  %v1891 = vpop.f32.mrb[0].mxu0
  %1892 = vmatprep.mubr.bf16.mxu0 0
  %1893 = vmatmul.mubr.bf16.gmra.mrb[0].mxu0 %v1831
  %v1894 = vpop.f32.mrb[0].mxu0
  %v1895 = vadd.f32 0.0, %v1894
  %v1896 = vpop.f32.mrb[0].mxu0
  %v1897 = vpop.f32.mrb[0].mxu0
  %v1898 = vadd.f32 0.0, %v1897
  %v1899 = vpop.f32.mrb[0].mxu0
  %1900 = vmatprep.mubr.bf16.mxu0 0
  %1901 = vmatmul.mubr.bf16.gmra.mrb[0].mxu0 %v1834
  %v1902 = vpop.f32.mrb[0].mxu0
  %v1903 = vadd.f32 0.0, %v1902
  %v1904 = vpop.f32.mrb[0].mxu0
  %v1905 = vpop.f32.mrb[0].mxu0
  %v1906 = vpop.f32.mrb[0].mxu0
  %1907 = vdwg.mxu0
  %v1916 = vunpack.c.l.b16 %v1741
  %v1917 = vunpack.c.l.b16 %v1742
  %v1918 = vunpack.c.l.b16 %v1743
  %v1919 = vunpack.c.l.b16 %v1744
  %v1920 = vunpack.c.l.b16 %v1745
  %v1921 = vunpack.c.l.b16 %v1746
  %v1922 = vunpack.c.l.b16 %v1747
  %v1923 = vunpack.c.l.b16 %v1748
  %v1924 = vpack.c.b16 %v1917, %v1916
  %v1925 = vpack.c.b16 %v1919, %v1918
  %v1926 = vpack.c.b16 %v1921, %v1920
  %v1927 = vpack.c.b16 %v1923, %v1922
  %v1932 = vsel %vm156, %v1736, 0
  %v1934 = vsel %vm156, %v1737, 0
  %v1936 = vsel %vm156, %v1738, 0
  %v1938 = vsel %vm156, %v1739, 0
  %v1940 = vsel %vm156, %v1740, 0
  %1942 = vmatprep.subr.bf16.mxu0 0
  %1943 = vmatpush1.bf16.msra.mxu0 %v1924
  %1944 = vmatprep.subr.bf16.mxu0 0
  %1945 = vmatpush1.bf16.msra.mxu0 %v1925
  %1946 = vmatprep.subr.bf16.mxu0 0
  %1947 = vmatpush1.bf16.msra.mxu0 %v1926
  %1948 = vmatprep.subr.bf16.mxu0 0
  %1949 = vmatpush1.bf16.msra.mxu0 %v1927
  %1950 = vmatprep.subr.bf16.mxu0 0
  %1951 = vmatpush1.bf16.msra.mxu0 0
  %1952 = vmatprep.subr.bf16.mxu0 0
  %1953 = vmatpush1.bf16.msra.mxu0 0
  %1954 = vmatprep.subr.bf16.mxu0 0
  %1955 = vmatpush1.bf16.msra.mxu0 0
  %1956 = vmatprep.subr.bf16.mxu0 0
  %1957 = vmatpush1.bf16.msra.mxu0 0
  %1958 = vmatprep.subr.bf16.mxu0 0
  %1959 = vmatpush1.bf16.msra.mxu0 0
  %1960 = vmatprep.subr.bf16.mxu0 0
  %1961 = vmatpush1.bf16.msra.mxu0 0
  %1962 = vmatprep.subr.bf16.mxu0 0
  %1963 = vmatpush1.bf16.msra.mxu0 0
  %1964 = vmatprep.subr.bf16.mxu0 0
  %1965 = vmatpush1.bf16.msra.mxu0 0
  %1966 = vmatprep.subr.bf16.mxu0 0
  %1967 = vmatpush1.bf16.msra.mxu0 0
  %1968 = vmatprep.subr.bf16.mxu0 0
  %1969 = vmatpush1.bf16.msra.mxu0 0
  %1970 = vmatprep.subr.bf16.mxu0 0
  %1971 = vmatpush1.bf16.msra.mxu0 0
  %1972 = vmatprep.subr.bf16.mxu0 0
  %1973 = vmatpush1.bf16.msra.mxu0 0
  %1974 = vmatprep.mubr.bf16.mxu0 0
  %1975 = vmatmul.mubr.bf16.gmra.mrb[0].mxu0 %v1932
  %v1976 = vpop.f32.mrb[0].mxu0
  %v1977 = vadd.f32 %v1871, %v1976
  %v1978 = vpop.f32.mrb[0].mxu0
  %v1979 = vpop.f32.mrb[0].mxu0
  %v1980 = vadd.f32 %v1874, %v1979
  %v1981 = vpop.f32.mrb[0].mxu0
  %1982 = vmatprep.mubr.bf16.mxu0 0
  %1983 = vmatmul.mubr.bf16.gmra.mrb[0].mxu0 %v1934
  %v1984 = vpop.f32.mrb[0].mxu0
  %v1985 = vadd.f32 %v1879, %v1984
  %v1986 = vpop.f32.mrb[0].mxu0
  %v1987 = vpop.f32.mrb[0].mxu0
  %v1988 = vadd.f32 %v1882, %v1987
  %v1989 = vpop.f32.mrb[0].mxu0
  %1990 = vmatprep.mubr.bf16.mxu0 0
  %1991 = vmatmul.mubr.bf16.gmra.mrb[0].mxu0 %v1936
  %v1992 = vpop.f32.mrb[0].mxu0
  %v1993 = vadd.f32 %v1887, %v1992
  %v1994 = vpop.f32.mrb[0].mxu0
  %v1995 = vpop.f32.mrb[0].mxu0
  %v1996 = vadd.f32 %v1890, %v1995
  %v1997 = vpop.f32.mrb[0].mxu0
  %1998 = vmatprep.mubr.bf16.mxu0 0
  %1999 = vmatmul.mubr.bf16.gmra.mrb[0].mxu0 %v1938
  %v2000 = vpop.f32.mrb[0].mxu0
  %v2001 = vadd.f32 %v1895, %v2000
  %v2002 = vpop.f32.mrb[0].mxu0
  %v2003 = vpop.f32.mrb[0].mxu0
  %v2004 = vadd.f32 %v1898, %v2003
  %v2005 = vpop.f32.mrb[0].mxu0
  %2006 = vmatprep.mubr.bf16.mxu0 0
  %2007 = vmatmul.mubr.bf16.gmra.mrb[0].mxu0 %v1940
  %v2008 = vpop.f32.mrb[0].mxu0
  %v2009 = vadd.f32 %v1903, %v2008
  %v2010 = vpop.f32.mrb[0].mxu0
  %v2011 = vpop.f32.mrb[0].mxu0
  %v2012 = vpop.f32.mrb[0].mxu0
  %2013 = vdwg.mxu0
  %s2014 = scalar_lea.vmem %s5, 64
  %v2015 = vld [vmem:[%s2014] sm:$0xf]
  %v2016 = vld [vmem:[%s2014 + $0x4] sm:$0xf]
  %v2017 = vld [vmem:[%s2014 + $0x8] sm:$0xf]
  %v2018 = vld [vmem:[%s2014 + $0xc] sm:$0xf]
  %v2019 = vld [vmem:[%s2014 + $0x10] sm:$0xf]
  %v2020 = vld [vmem:[%s2014 + $0x14] sm:$0xf]
  %v2021 = vld [vmem:[%s2014 + $0x18] sm:$0xf]
  %v2022 = vld [vmem:[%s2014 + $0x1c] sm:$0xf]
  %v2028 = vrot.slane %v1736, 1
  %v2029 = vrot.slane %v1737, 1
  %v2030 = vsel %vm361, %v2028, %v2029
  %v2031 = vrot.slane %v1738, 1
  %v2032 = vsel %vm361, %v2029, %v2031
  %v2033 = vrot.slane %v1739, 1
  %v2034 = vsel %vm361, %v2031, %v2033
  %v2035 = vrot.slane %v1740, 1
  %v2036 = vsel %vm361, %v2033, %v2035
  %v2045 = vunpack.c.l.b16 %v2015
  %v2046 = vunpack.c.l.b16 %v2016
  %v2047 = vunpack.c.l.b16 %v2017
  %v2048 = vunpack.c.l.b16 %v2018
  %v2049 = vunpack.c.l.b16 %v2019
  %v2050 = vunpack.c.l.b16 %v2020
  %v2051 = vunpack.c.l.b16 %v2021
  %v2052 = vunpack.c.l.b16 %v2022
  %v2053 = vpack.c.b16 %v2046, %v2045
  %v2054 = vpack.c.b16 %v2048, %v2047
  %v2055 = vpack.c.b16 %v2050, %v2049
  %v2056 = vpack.c.b16 %v2052, %v2051
  %v2062 = vsel %vm156, %v2030, 0
  %v2065 = vsel %vm156, %v2032, 0
  %v2068 = vsel %vm156, %v2034, 0
  %v2071 = vsel %vm156, %v2036, 0
  %v2074 = vsel %vm156, %v2035, 0
  %2076 = vmatprep.subr.bf16.mxu0 0
  %2077 = vmatpush1.bf16.msra.mxu0 %v2053
  %2078 = vmatprep.subr.bf16.mxu0 0
  %2079 = vmatpush1.bf16.msra.mxu0 %v2054
  %2080 = vmatprep.subr.bf16.mxu0 0
  %2081 = vmatpush1.bf16.msra.mxu0 %v2055
  %2082 = vmatprep.subr.bf16.mxu0 0
  %2083 = vmatpush1.bf16.msra.mxu0 %v2056
  %2084 = vmatprep.subr.bf16.mxu0 0
  %2085 = vmatpush1.bf16.msra.mxu0 0
  %2086 = vmatprep.subr.bf16.mxu0 0
  %2087 = vmatpush1.bf16.msra.mxu0 0
  %2088 = vmatprep.subr.bf16.mxu0 0
  %2089 = vmatpush1.bf16.msra.mxu0 0
  %2090 = vmatprep.subr.bf16.mxu0 0
  %2091 = vmatpush1.bf16.msra.mxu0 0
  %2092 = vmatprep.subr.bf16.mxu0 0
  %2093 = vmatpush1.bf16.msra.mxu0 0
  %2094 = vmatprep.subr.bf16.mxu0 0
  %2095 = vmatpush1.bf16.msra.mxu0 0
  %2096 = vmatprep.subr.bf16.mxu0 0
  %2097 = vmatpush1.bf16.msra.mxu0 0
  %2098 = vmatprep.subr.bf16.mxu0 0
  %2099 = vmatpush1.bf16.msra.mxu0 0
  %2100 = vmatprep.subr.bf16.mxu0 0
  %2101 = vmatpush1.bf16.msra.mxu0 0
  %2102 = vmatprep.subr.bf16.mxu0 0
  %2103 = vmatpush1.bf16.msra.mxu0 0
  %2104 = vmatprep.subr.bf16.mxu0 0
  %2105 = vmatpush1.bf16.msra.mxu0 0
  %2106 = vmatprep.subr.bf16.mxu0 0
  %2107 = vmatpush1.bf16.msra.mxu0 0
  %2108 = vmatprep.mubr.bf16.mxu0 0
  %2109 = vmatmul.mubr.bf16.gmra.mrb[0].mxu0 %v2062
  %v2110 = vpop.f32.mrb[0].mxu0
  %v2111 = vadd.f32 0.0, %v2110
  %v2112 = vpop.f32.mrb[0].mxu0
  %v2113 = vpop.f32.mrb[0].mxu0
  %v2114 = vadd.f32 0.0, %v2113
  %v2115 = vpop.f32.mrb[0].mxu0
  %2116 = vmatprep.mubr.bf16.mxu0 0
  %2117 = vmatmul.mubr.bf16.gmra.mrb[0].mxu0 %v2065
  %v2118 = vpop.f32.mrb[0].mxu0
  %v2119 = vadd.f32 0.0, %v2118
  %v2120 = vpop.f32.mrb[0].mxu0
  %v2121 = vpop.f32.mrb[0].mxu0
  %v2122 = vadd.f32 0.0, %v2121
  %v2123 = vpop.f32.mrb[0].mxu0
  %2124 = vmatprep.mubr.bf16.mxu0 0
  %2125 = vmatmul.mubr.bf16.gmra.mrb[0].mxu0 %v2068
  %v2126 = vpop.f32.mrb[0].mxu0
  %v2127 = vadd.f32 0.0, %v2126
  %v2128 = vpop.f32.mrb[0].mxu0
  %v2129 = vpop.f32.mrb[0].mxu0
  %v2130 = vadd.f32 0.0, %v2129
  %v2131 = vpop.f32.mrb[0].mxu0
  %2132 = vmatprep.mubr.bf16.mxu0 0
  %2133 = vmatmul.mubr.bf16.gmra.mrb[0].mxu0 %v2071
  %v2134 = vpop.f32.mrb[0].mxu0
  %v2135 = vadd.f32 0.0, %v2134
  %v2136 = vpop.f32.mrb[0].mxu0
  %v2137 = vpop.f32.mrb[0].mxu0
  %v2138 = vadd.f32 0.0, %v2137
  %v2139 = vpop.f32.mrb[0].mxu0
  %2140 = vmatprep.mubr.bf16.mxu0 0
  %2141 = vmatmul.mubr.bf16.gmra.mrb[0].mxu0 %v2074
  %v2142 = vpop.f32.mrb[0].mxu0
  %v2143 = vadd.f32 0.0, %v2142
  %v2144 = vpop.f32.mrb[0].mxu0
  %v2145 = vpop.f32.mrb[0].mxu0
  %v2146 = vpop.f32.mrb[0].mxu0
  %2147 = vdwg.mxu0
  %v2148 = vadd.f32 %v1977, %v2111
  %v2149 = vadd.f32 %v1980, %v2114
  %v2150 = vadd.f32 %v1985, %v2119
  %v2151 = vadd.f32 %v1988, %v2122
  %v2152 = vadd.f32 %v1993, %v2127
  %v2153 = vadd.f32 %v1996, %v2130
  %v2154 = vadd.f32 %v2001, %v2135
  %v2155 = vadd.f32 %v2004, %v2138
  %v2156 = vadd.f32 %v2009, %v2143
  %v2157 = vld [vmem:[%s6] sm:$0x1]
  %v2159 = vlaneseq
  %v2160 = vshrl.u32 %v2159, 7
  %v2161 = vsub.s32 0, %v2160
  %v2162 = vrot.slane %v2157, %v2161
  %v2164 = vadd.f32 %v2148, %v2162
  %v2165 = vadd.f32 %v2149, %v2162
  %v2166 = vadd.f32 %v2150, %v2162
  %v2167 = vadd.f32 %v2151, %v2162
  %v2168 = vadd.f32 %v2152, %v2162
  %v2169 = vadd.f32 %v2153, %v2162
  %v2170 = vadd.f32 %v2154, %v2162
  %v2171 = vadd.f32 %v2155, %v2162
  %v2172 = vadd.f32 %v2156, %v2162
  %s2173 = sadd.s32 %s39, 4294967293
  %v2174 = vstv %s2173
  %v2175 = vadd.s32 %v1125, %v2174
  %v2176 = vadd.s32 %v1126, %v2174
  %v2177 = vadd.s32 %v1127, %v2174
  %v2178 = vadd.s32 %v1128, %v2174
  %v2179 = vadd.s32 %v1129, %v2174
  %v2180 = vadd.s32 %v1130, %v2174
  %v2181 = vadd.s32 %v1131, %v2174
  %v2182 = vadd.s32 %v1132, %v2174
  %v2183 = vadd.s32 %v1133, %v2174
  %vm2184 = vcmp.ge.s32.totalorder %v2175, 0
  %vm2185 = vcmp.ge.s32.totalorder %v2176, 0
  %vm2186 = vcmp.ge.s32.totalorder %v2177, 0
  %vm2187 = vcmp.ge.s32.totalorder %v2178, 0
  %vm2188 = vcmp.ge.s32.totalorder %v2179, 0
  %vm2189 = vcmp.ge.s32.totalorder %v2180, 0
  %vm2190 = vcmp.ge.s32.totalorder %v2181, 0
  %vm2191 = vcmp.ge.s32.totalorder %v2182, 0
  %vm2192 = vcmp.ge.s32.totalorder %v2183, 0
  %vm2193 = vcmp.lt.s32.totalorder %v2175, 8
  %vm2194 = vcmp.lt.s32.totalorder %v2176, 8
  %vm2195 = vcmp.lt.s32.totalorder %v2177, 8
  %vm2196 = vcmp.lt.s32.totalorder %v2178, 8
  %vm2197 = vcmp.lt.s32.totalorder %v2179, 8
  %vm2198 = vcmp.lt.s32.totalorder %v2180, 8
  %vm2199 = vcmp.lt.s32.totalorder %v2181, 8
  %vm2200 = vcmp.lt.s32.totalorder %v2182, 8
  %vm2201 = vcmp.lt.s32.totalorder %v2183, 8
  %vm2202 = vmand %vm2184, %vm2193
  %vm2203 = vmand %vm2185, %vm2194
  %vm2204 = vmand %vm2186, %vm2195
  %vm2205 = vmand %vm2187, %vm2196
  %vm2206 = vmand %vm2188, %vm2197
  %vm2207 = vmand %vm2189, %vm2198
  %vm2208 = vmand %vm2190, %vm2199
  %vm2209 = vmand %vm2191, %vm2200
  %vm2210 = vmand %vm2192, %vm2201
  %v2211 = vsel %vm2202, 1, 0
  %v2212 = vsel %vm2203, 1, 0
  %v2213 = vsel %vm2204, 1, 0
  %v2214 = vsel %vm2205, 1, 0
  %v2215 = vsel %vm2206, 1, 0
  %v2216 = vsel %vm2207, 1, 0
  %v2217 = vsel %vm2208, 1, 0
  %v2218 = vsel %vm2209, 1, 0
  %v2219 = vsel %vm2210, 1, 0
  %vm2220 = vcmp.eq.s32.totalorder %v2211, 1
  %vm2221 = vcmp.eq.s32.totalorder %v2212, 1
  %vm2222 = vcmp.eq.s32.totalorder %v2213, 1
  %vm2223 = vcmp.eq.s32.totalorder %v2214, 1
  %vm2224 = vcmp.eq.s32.totalorder %v2215, 1
  %vm2225 = vcmp.eq.s32.totalorder %v2216, 1
  %vm2226 = vcmp.eq.s32.totalorder %v2217, 1
  %vm2227 = vcmp.eq.s32.totalorder %v2218, 1
  %vm2228 = vcmp.eq.s32.totalorder %v2219, 1
  %v2229 = vsel %vm2220, %v2164, 0.0
  %v2230 = vsel %vm2221, %v2165, 0.0
  %v2231 = vsel %vm2222, %v2166, 0.0
  %v2232 = vsel %vm2223, %v2167, 0.0
  %v2233 = vsel %vm2224, %v2168, 0.0
  %v2234 = vsel %vm2225, %v2169, 0.0
  %v2235 = vsel %vm2226, %v2170, 0.0
  %v2236 = vsel %vm2227, %v2171, 0.0
  %v2237 = vsel %vm2228, %v2172, 0.0
  %vm2238 = vcmp.ge.f32.partialorder %v2229, 0.0
  %vm2239 = vcmp.ge.f32.partialorder %v2230, 0.0
  %vm2240 = vcmp.ge.f32.partialorder %v2231, 0.0
  %vm2241 = vcmp.ge.f32.partialorder %v2232, 0.0
  %vm2242 = vcmp.ge.f32.partialorder %v2233, 0.0
  %vm2243 = vcmp.ge.f32.partialorder %v2234, 0.0
  %vm2244 = vcmp.ge.f32.partialorder %v2235, 0.0
  %vm2245 = vcmp.ge.f32.partialorder %v2236, 0.0
  %vm2246 = vcmp.ge.f32.partialorder %v2237, 0.0
  %v2247 = vmul.f32 %v2229, 0.1
  %v2248 = vmul.f32 %v2230, 0.1
  %v2249 = vmul.f32 %v2231, 0.1
  %v2250 = vmul.f32 %v2232, 0.1
  %v2251 = vmul.f32 %v2233, 0.1
  %v2252 = vmul.f32 %v2234, 0.1
  %v2253 = vmul.f32 %v2235, 0.1
  %v2254 = vmul.f32 %v2236, 0.1
  %v2255 = vmul.f32 %v2237, 0.1
  %v2256 = vsel %vm2238, %v2229, %v2247
  %v2257 = vsel %vm2239, %v2230, %v2248
  %v2258 = vsel %vm2240, %v2231, %v2249
  %v2259 = vsel %vm2241, %v2232, %v2250
  %v2260 = vsel %vm2242, %v2233, %v2251
  %v2261 = vsel %vm2243, %v2234, %v2252
  %v2262 = vsel %vm2244, %v2235, %v2253
  %v2263 = vsel %vm2245, %v2236, %v2254
  %v2264 = vsel %vm2246, %v2237, %v2255
  %v2265 = vpack.c.bf16 %v2257, %v2256
  %v2266 = vpack.c.bf16 %v2259, %v2258
  %v2267 = vpack.c.bf16 %v2261, %v2260
  %v2268 = vpack.c.bf16 %v2263, %v2262
  %v2269 = vpack.c.bf16 %v2264, %v2264
  %v2270 = vld [vmem:[%s7] sm:$0xf]
  %v2271 = vld [vmem:[%s7 + $0x4] sm:$0xf]
  %v2272 = vld [vmem:[%s7 + $0x8] sm:$0xf]
  %v2273 = vld [vmem:[%s7 + $0xc] sm:$0xf]
  %v2274 = vld [vmem:[%s7 + $0x10] sm:$0xf]
  %v2275 = vld [vmem:[%s7 + $0x14] sm:$0xf]
  %v2276 = vld [vmem:[%s7 + $0x18] sm:$0xf]
  %v2277 = vld [vmem:[%s7 + $0x1c] sm:$0xf]
  %v2278 = vld [vmem:[%s7 + $0x20] sm:$0xf]
  %v2279 = vld [vmem:[%s7 + $0x24] sm:$0xf]
  %v2280 = vld [vmem:[%s7 + $0x28] sm:$0xf]
  %v2281 = vld [vmem:[%s7 + $0x2c] sm:$0xf]
  %v2282 = vld [vmem:[%s7 + $0x30] sm:$0xf]
  %v2283 = vld [vmem:[%s7 + $0x34] sm:$0xf]
  %v2284 = vld [vmem:[%s7 + $0x38] sm:$0xf]
  %v2285 = vld [vmem:[%s7 + $0x3c] sm:$0xf]
  %s2286 = scalar_lea.vmem %s7, 64
  %v2287 = vld [vmem:[%s2286] sm:$0xf]
  %v2288 = vld [vmem:[%s2286 + $0x4] sm:$0xf]
  %v2289 = vld [vmem:[%s2286 + $0x8] sm:$0xf]
  %v2290 = vld [vmem:[%s2286 + $0xc] sm:$0xf]
  %v2291 = vld [vmem:[%s2286 + $0x10] sm:$0xf]
  %v2292 = vld [vmem:[%s2286 + $0x14] sm:$0xf]
  %v2293 = vld [vmem:[%s2286 + $0x18] sm:$0xf]
  %v2294 = vld [vmem:[%s2286 + $0x1c] sm:$0xf]
  %v2295 = vld [vmem:[%s2286 + $0x20] sm:$0xf]
  %v2296 = vld [vmem:[%s2286 + $0x24] sm:$0xf]
  %v2297 = vld [vmem:[%s2286 + $0x28] sm:$0xf]
  %v2298 = vld [vmem:[%s2286 + $0x2c] sm:$0xf]
  %v2299 = vld [vmem:[%s2286 + $0x30] sm:$0xf]
  %v2300 = vld [vmem:[%s2286 + $0x34] sm:$0xf]
  %v2301 = vld [vmem:[%s2286 + $0x38] sm:$0xf]
  %v2302 = vld [vmem:[%s2286 + $0x3c] sm:$0xf]
  %v2304 = vshrl.u32 %v2265, 16
  %v2306 = vshll.u32 %v2265, 16
  %v2308 = vrot.slane %v2306, 1
  %v2309 = vor.u32 %v2304, %v2308
  %v2311 = vshll.u32 %v2266, 16
  %v2313 = vrot.slane %v2311, 1
  %v2314 = vsel %vm92, %v2309, %v2313
  %v2315 = vshrl.u32 %v2266, 16
  %v2317 = vor.u32 %v2315, %v2313
  %v2319 = vshll.u32 %v2267, 16
  %v2321 = vrot.slane %v2319, 1
  %v2322 = vsel %vm92, %v2317, %v2321
  %v2323 = vshrl.u32 %v2267, 16
  %v2325 = vor.u32 %v2323, %v2321
  %v2327 = vshll.u32 %v2268, 16
  %v2329 = vrot.slane %v2327, 1
  %v2330 = vsel %vm92, %v2325, %v2329
  %v2331 = vshrl.u32 %v2268, 16
  %v2333 = vor.u32 %v2331, %v2329
  %v2335 = vshll.u32 %v2269, 16
  %v2337 = vrot.slane %v2335, 1
  %v2338 = vsel %vm92, %v2333, %v2337
  %v2339 = vshrl.u32 %v2269, 16
  %v2341 = vor.u32 %v2339, %v2337
  %v2363 = vunpack.c.l.b16 %v2287
  %v2364 = vunpack.c.l.b16 %v2288
  %v2365 = vunpack.c.l.b16 %v2289
  %v2366 = vunpack.c.l.b16 %v2290
  %v2367 = vunpack.c.l.b16 %v2291
  %v2368 = vunpack.c.l.b16 %v2292
  %v2369 = vunpack.c.l.b16 %v2293
  %v2370 = vunpack.c.l.b16 %v2294
  %v2371 = vunpack.c.l.b16 %v2295
  %v2372 = vunpack.c.l.b16 %v2296
  %v2373 = vunpack.c.l.b16 %v2297
  %v2374 = vunpack.c.l.b16 %v2298
  %v2375 = vunpack.c.l.b16 %v2299
  %v2376 = vunpack.c.l.b16 %v2300
  %v2377 = vunpack.c.l.b16 %v2301
  %v2378 = vunpack.c.l.b16 %v2302
  %v2379 = vpack.c.b16 %v2364, %v2363
  %v2380 = vpack.c.b16 %v2366, %v2365
  %v2381 = vpack.c.b16 %v2368, %v2367
  %v2382 = vpack.c.b16 %v2370, %v2369
  %v2383 = vpack.c.b16 %v2372, %v2371
  %v2384 = vpack.c.b16 %v2374, %v2373
  %v2385 = vpack.c.b16 %v2376, %v2375
  %v2386 = vpack.c.b16 %v2378, %v2377
  %2395 = vmatprep.subr.bf16.mxu0 0
  %2396 = vmatpush1.bf16.msra.mxu0 %v2379
  %2397 = vmatprep.subr.bf16.mxu0 0
  %2398 = vmatpush1.bf16.msra.mxu0 %v2380
  %2399 = vmatprep.subr.bf16.mxu0 0
  %2400 = vmatpush1.bf16.msra.mxu0 %v2381
  %2401 = vmatprep.subr.bf16.mxu0 0
  %2402 = vmatpush1.bf16.msra.mxu0 %v2382
  %2403 = vmatprep.subr.bf16.mxu0 0
  %2404 = vmatpush1.bf16.msra.mxu0 %v2383
  %2405 = vmatprep.subr.bf16.mxu0 0
  %2406 = vmatpush1.bf16.msra.mxu0 %v2384
  %2407 = vmatprep.subr.bf16.mxu0 0
  %2408 = vmatpush1.bf16.msra.mxu0 %v2385
  %2409 = vmatprep.subr.bf16.mxu0 0
  %2410 = vmatpush1.bf16.msra.mxu0 %v2386
  %2411 = vmatprep.subr.bf16.mxu0 0
  %2412 = vmatpush1.bf16.msra.mxu0 0
  %2413 = vmatprep.subr.bf16.mxu0 0
  %2414 = vmatpush1.bf16.msra.mxu0 0
  %2415 = vmatprep.subr.bf16.mxu0 0
  %2416 = vmatpush1.bf16.msra.mxu0 0
  %2417 = vmatprep.subr.bf16.mxu0 0
  %2418 = vmatpush1.bf16.msra.mxu0 0
  %2419 = vmatprep.subr.bf16.mxu0 0
  %2420 = vmatpush1.bf16.msra.mxu0 0
  %2421 = vmatprep.subr.bf16.mxu0 0
  %2422 = vmatpush1.bf16.msra.mxu0 0
  %2423 = vmatprep.subr.bf16.mxu0 0
  %2424 = vmatpush1.bf16.msra.mxu0 0
  %2425 = vmatprep.subr.bf16.mxu0 0
  %2426 = vmatpush1.bf16.msra.mxu0 0
  %2427 = vmatprep.mubr.bf16.mxu0 0
  %2428 = vmatmul.mubr.bf16.gmra.mrb[0].mxu0 %v2314
  %v2429 = vpop.f32.mrb[0].mxu0
  %v2430 = vadd.f32 0.0, %v2429
  %v2431 = vpop.f32.mrb[0].mxu0
  %v2432 = vpop.f32.mrb[0].mxu0
  %v2433 = vadd.f32 0.0, %v2432
  %v2434 = vpop.f32.mrb[0].mxu0
  %2435 = vmatprep.mubr.bf16.mxu0 0
  %2436 = vmatmul.mubr.bf16.gmra.mrb[0].mxu0 %v2322
  %v2437 = vpop.f32.mrb[0].mxu0
  %v2438 = vadd.f32 0.0, %v2437
  %v2439 = vpop.f32.mrb[0].mxu0
  %v2440 = vpop.f32.mrb[0].mxu0
  %v2441 = vadd.f32 0.0, %v2440
  %v2442 = vpop.f32.mrb[0].mxu0
  %2443 = vmatprep.mubr.bf16.mxu0 0
  %2444 = vmatmul.mubr.bf16.gmra.mrb[0].mxu0 %v2330
  %v2445 = vpop.f32.mrb[0].mxu0
  %v2446 = vadd.f32 0.0, %v2445
  %v2447 = vpop.f32.mrb[0].mxu0
  %v2448 = vpop.f32.mrb[0].mxu0
  %v2449 = vadd.f32 0.0, %v2448
  %v2450 = vpop.f32.mrb[0].mxu0
  %2451 = vmatprep.mubr.bf16.mxu0 0
  %2452 = vmatmul.mubr.bf16.gmra.mrb[0].mxu0 %v2338
  %v2453 = vpop.f32.mrb[0].mxu0
  %v2454 = vadd.f32 0.0, %v2453
  %v2455 = vpop.f32.mrb[0].mxu0
  %v2456 = vpop.f32.mrb[0].mxu0
  %v2457 = vadd.f32 0.0, %v2456
  %v2458 = vpop.f32.mrb[0].mxu0
  %2459 = vmatprep.mubr.bf16.mxu0 0
  %2460 = vmatmul.mubr.bf16.gmra.mrb[0].mxu0 %v2341
  %v2461 = vpop.f32.mrb[0].mxu0
  %v2462 = vadd.f32 0.0, %v2461
  %v2463 = vpop.f32.mrb[0].mxu0
  %v2464 = vpop.f32.mrb[0].mxu0
  %v2465 = vpop.f32.mrb[0].mxu0
  %2466 = vdwg.mxu0
  %v2483 = vunpack.c.l.b16 %v2270
  %v2484 = vunpack.c.l.b16 %v2271
  %v2485 = vunpack.c.l.b16 %v2272
  %v2486 = vunpack.c.l.b16 %v2273
  %v2487 = vunpack.c.l.b16 %v2274
  %v2488 = vunpack.c.l.b16 %v2275
  %v2489 = vunpack.c.l.b16 %v2276
  %v2490 = vunpack.c.l.b16 %v2277
  %v2491 = vunpack.c.l.b16 %v2278
  %v2492 = vunpack.c.l.b16 %v2279
  %v2493 = vunpack.c.l.b16 %v2280
  %v2494 = vunpack.c.l.b16 %v2281
  %v2495 = vunpack.c.l.b16 %v2282
  %v2496 = vunpack.c.l.b16 %v2283
  %v2497 = vunpack.c.l.b16 %v2284
  %v2498 = vunpack.c.l.b16 %v2285
  %v2499 = vpack.c.b16 %v2484, %v2483
  %v2500 = vpack.c.b16 %v2486, %v2485
  %v2501 = vpack.c.b16 %v2488, %v2487
  %v2502 = vpack.c.b16 %v2490, %v2489
  %v2503 = vpack.c.b16 %v2492, %v2491
  %v2504 = vpack.c.b16 %v2494, %v2493
  %v2505 = vpack.c.b16 %v2496, %v2495
  %v2506 = vpack.c.b16 %v2498, %v2497
  %2515 = vmatprep.subr.bf16.mxu0 0
  %2516 = vmatpush1.bf16.msra.mxu0 %v2499
  %2517 = vmatprep.subr.bf16.mxu0 0
  %2518 = vmatpush1.bf16.msra.mxu0 %v2500
  %2519 = vmatprep.subr.bf16.mxu0 0
  %2520 = vmatpush1.bf16.msra.mxu0 %v2501
  %2521 = vmatprep.subr.bf16.mxu0 0
  %2522 = vmatpush1.bf16.msra.mxu0 %v2502
  %2523 = vmatprep.subr.bf16.mxu0 0
  %2524 = vmatpush1.bf16.msra.mxu0 %v2503
  %2525 = vmatprep.subr.bf16.mxu0 0
  %2526 = vmatpush1.bf16.msra.mxu0 %v2504
  %2527 = vmatprep.subr.bf16.mxu0 0
  %2528 = vmatpush1.bf16.msra.mxu0 %v2505
  %2529 = vmatprep.subr.bf16.mxu0 0
  %2530 = vmatpush1.bf16.msra.mxu0 %v2506
  %2531 = vmatprep.subr.bf16.mxu0 0
  %2532 = vmatpush1.bf16.msra.mxu0 0
  %2533 = vmatprep.subr.bf16.mxu0 0
  %2534 = vmatpush1.bf16.msra.mxu0 0
  %2535 = vmatprep.subr.bf16.mxu0 0
  %2536 = vmatpush1.bf16.msra.mxu0 0
  %2537 = vmatprep.subr.bf16.mxu0 0
  %2538 = vmatpush1.bf16.msra.mxu0 0
  %2539 = vmatprep.subr.bf16.mxu0 0
  %2540 = vmatpush1.bf16.msra.mxu0 0
  %2541 = vmatprep.subr.bf16.mxu0 0
  %2542 = vmatpush1.bf16.msra.mxu0 0
  %2543 = vmatprep.subr.bf16.mxu0 0
  %2544 = vmatpush1.bf16.msra.mxu0 0
  %2545 = vmatprep.subr.bf16.mxu0 0
  %2546 = vmatpush1.bf16.msra.mxu0 0
  %2547 = vmatprep.mubr.bf16.mxu0 0
  %2548 = vmatmul.mubr.bf16.gmra.mrb[0].mxu0 %v2265
  %v2549 = vpop.f32.mrb[0].mxu0
  %v2550 = vadd.f32 %v2430, %v2549
  %v2551 = vpop.f32.mrb[0].mxu0
  %v2552 = vpop.f32.mrb[0].mxu0
  %v2553 = vadd.f32 %v2433, %v2552
  %v2554 = vpop.f32.mrb[0].mxu0
  %2555 = vmatprep.mubr.bf16.mxu0 0
  %2556 = vmatmul.mubr.bf16.gmra.mrb[0].mxu0 %v2266
  %v2557 = vpop.f32.mrb[0].mxu0
  %v2558 = vadd.f32 %v2438, %v2557
  %v2559 = vpop.f32.mrb[0].mxu0
  %v2560 = vpop.f32.mrb[0].mxu0
  %v2561 = vadd.f32 %v2441, %v2560
  %v2562 = vpop.f32.mrb[0].mxu0
  %2563 = vmatprep.mubr.bf16.mxu0 0
  %2564 = vmatmul.mubr.bf16.gmra.mrb[0].mxu0 %v2267
  %v2565 = vpop.f32.mrb[0].mxu0
  %v2566 = vadd.f32 %v2446, %v2565
  %v2567 = vpop.f32.mrb[0].mxu0
  %v2568 = vpop.f32.mrb[0].mxu0
  %v2569 = vadd.f32 %v2449, %v2568
  %v2570 = vpop.f32.mrb[0].mxu0
  %2571 = vmatprep.mubr.bf16.mxu0 0
  %2572 = vmatmul.mubr.bf16.gmra.mrb[0].mxu0 %v2268
  %v2573 = vpop.f32.mrb[0].mxu0
  %v2574 = vadd.f32 %v2454, %v2573
  %v2575 = vpop.f32.mrb[0].mxu0
  %v2576 = vpop.f32.mrb[0].mxu0
  %v2577 = vadd.f32 %v2457, %v2576
  %v2578 = vpop.f32.mrb[0].mxu0
  %2579 = vmatprep.mubr.bf16.mxu0 0
  %2580 = vmatmul.mubr.bf16.gmra.mrb[0].mxu0 %v2269
  %v2581 = vpop.f32.mrb[0].mxu0
  %v2582 = vadd.f32 %v2462, %v2581
  %v2583 = vpop.f32.mrb[0].mxu0
  %v2584 = vpop.f32.mrb[0].mxu0
  %v2585 = vpop.f32.mrb[0].mxu0
  %2586 = vdwg.mxu0
  %s2587 = scalar_lea.vmem %s7, 128
  %v2588 = vld [vmem:[%s2587] sm:$0xf]
  %v2589 = vld [vmem:[%s2587 + $0x4] sm:$0xf]
  %v2590 = vld [vmem:[%s2587 + $0x8] sm:$0xf]
  %v2591 = vld [vmem:[%s2587 + $0xc] sm:$0xf]
  %v2592 = vld [vmem:[%s2587 + $0x10] sm:$0xf]
  %v2593 = vld [vmem:[%s2587 + $0x14] sm:$0xf]
  %v2594 = vld [vmem:[%s2587 + $0x18] sm:$0xf]
  %v2595 = vld [vmem:[%s2587 + $0x1c] sm:$0xf]
  %v2596 = vld [vmem:[%s2587 + $0x20] sm:$0xf]
  %v2597 = vld [vmem:[%s2587 + $0x24] sm:$0xf]
  %v2598 = vld [vmem:[%s2587 + $0x28] sm:$0xf]
  %v2599 = vld [vmem:[%s2587 + $0x2c] sm:$0xf]
  %v2600 = vld [vmem:[%s2587 + $0x30] sm:$0xf]
  %v2601 = vld [vmem:[%s2587 + $0x34] sm:$0xf]
  %v2602 = vld [vmem:[%s2587 + $0x38] sm:$0xf]
  %v2603 = vld [vmem:[%s2587 + $0x3c] sm:$0xf]
  %v2609 = vrot.slane %v2265, 1
  %v2610 = vrot.slane %v2266, 1
  %v2611 = vsel %vm361, %v2609, %v2610
  %v2612 = vrot.slane %v2267, 1
  %v2613 = vsel %vm361, %v2610, %v2612
  %v2614 = vrot.slane %v2268, 1
  %v2615 = vsel %vm361, %v2612, %v2614
  %v2616 = vrot.slane %v2269, 1
  %v2617 = vsel %vm361, %v2614, %v2616
  %v2639 = vunpack.c.l.b16 %v2588
  %v2640 = vunpack.c.l.b16 %v2589
  %v2641 = vunpack.c.l.b16 %v2590
  %v2642 = vunpack.c.l.b16 %v2591
  %v2643 = vunpack.c.l.b16 %v2592
  %v2644 = vunpack.c.l.b16 %v2593
  %v2645 = vunpack.c.l.b16 %v2594
  %v2646 = vunpack.c.l.b16 %v2595
  %v2647 = vunpack.c.l.b16 %v2596
  %v2648 = vunpack.c.l.b16 %v2597
  %v2649 = vunpack.c.l.b16 %v2598
  %v2650 = vunpack.c.l.b16 %v2599
  %v2651 = vunpack.c.l.b16 %v2600
  %v2652 = vunpack.c.l.b16 %v2601
  %v2653 = vunpack.c.l.b16 %v2602
  %v2654 = vunpack.c.l.b16 %v2603
  %v2655 = vpack.c.b16 %v2640, %v2639
  %v2656 = vpack.c.b16 %v2642, %v2641
  %v2657 = vpack.c.b16 %v2644, %v2643
  %v2658 = vpack.c.b16 %v2646, %v2645
  %v2659 = vpack.c.b16 %v2648, %v2647
  %v2660 = vpack.c.b16 %v2650, %v2649
  %v2661 = vpack.c.b16 %v2652, %v2651
  %v2662 = vpack.c.b16 %v2654, %v2653
  %2671 = vmatprep.subr.bf16.mxu0 0
  %2672 = vmatpush1.bf16.msra.mxu0 %v2655
  %2673 = vmatprep.subr.bf16.mxu0 0
  %2674 = vmatpush1.bf16.msra.mxu0 %v2656
  %2675 = vmatprep.subr.bf16.mxu0 0
  %2676 = vmatpush1.bf16.msra.mxu0 %v2657
  %2677 = vmatprep.subr.bf16.mxu0 0
  %2678 = vmatpush1.bf16.msra.mxu0 %v2658
  %2679 = vmatprep.subr.bf16.mxu0 0
  %2680 = vmatpush1.bf16.msra.mxu0 %v2659
  %2681 = vmatprep.subr.bf16.mxu0 0
  %2682 = vmatpush1.bf16.msra.mxu0 %v2660
  %2683 = vmatprep.subr.bf16.mxu0 0
  %2684 = vmatpush1.bf16.msra.mxu0 %v2661
  %2685 = vmatprep.subr.bf16.mxu0 0
  %2686 = vmatpush1.bf16.msra.mxu0 %v2662
  %2687 = vmatprep.subr.bf16.mxu0 0
  %2688 = vmatpush1.bf16.msra.mxu0 0
  %2689 = vmatprep.subr.bf16.mxu0 0
  %2690 = vmatpush1.bf16.msra.mxu0 0
  %2691 = vmatprep.subr.bf16.mxu0 0
  %2692 = vmatpush1.bf16.msra.mxu0 0
  %2693 = vmatprep.subr.bf16.mxu0 0
  %2694 = vmatpush1.bf16.msra.mxu0 0
  %2695 = vmatprep.subr.bf16.mxu0 0
  %2696 = vmatpush1.bf16.msra.mxu0 0
  %2697 = vmatprep.subr.bf16.mxu0 0
  %2698 = vmatpush1.bf16.msra.mxu0 0
  %2699 = vmatprep.subr.bf16.mxu0 0
  %2700 = vmatpush1.bf16.msra.mxu0 0
  %2701 = vmatprep.subr.bf16.mxu0 0
  %2702 = vmatpush1.bf16.msra.mxu0 0
  %2703 = vmatprep.mubr.bf16.mxu0 0
  %2704 = vmatmul.mubr.bf16.gmra.mrb[0].mxu0 %v2611
  %v2705 = vpop.f32.mrb[0].mxu0
  %v2706 = vadd.f32 0.0, %v2705
  %v2707 = vpop.f32.mrb[0].mxu0
  %v2708 = vpop.f32.mrb[0].mxu0
  %v2709 = vadd.f32 0.0, %v2708
  %v2710 = vpop.f32.mrb[0].mxu0
  %2711 = vmatprep.mubr.bf16.mxu0 0
  %2712 = vmatmul.mubr.bf16.gmra.mrb[0].mxu0 %v2613
  %v2713 = vpop.f32.mrb[0].mxu0
  %v2714 = vadd.f32 0.0, %v2713
  %v2715 = vpop.f32.mrb[0].mxu0
  %v2716 = vpop.f32.mrb[0].mxu0
  %v2717 = vadd.f32 0.0, %v2716
  %v2718 = vpop.f32.mrb[0].mxu0
  %2719 = vmatprep.mubr.bf16.mxu0 0
  %2720 = vmatmul.mubr.bf16.gmra.mrb[0].mxu0 %v2615
  %v2721 = vpop.f32.mrb[0].mxu0
  %v2722 = vadd.f32 0.0, %v2721
  %v2723 = vpop.f32.mrb[0].mxu0
  %v2724 = vpop.f32.mrb[0].mxu0
  %v2725 = vadd.f32 0.0, %v2724
  %v2726 = vpop.f32.mrb[0].mxu0
  %2727 = vmatprep.mubr.bf16.mxu0 0
  %2728 = vmatmul.mubr.bf16.gmra.mrb[0].mxu0 %v2617
  %v2729 = vpop.f32.mrb[0].mxu0
  %v2730 = vadd.f32 0.0, %v2729
  %v2731 = vpop.f32.mrb[0].mxu0
  %v2732 = vpop.f32.mrb[0].mxu0
  %v2733 = vadd.f32 0.0, %v2732
  %v2734 = vpop.f32.mrb[0].mxu0
  %2735 = vmatprep.mubr.bf16.mxu0 0
  %2736 = vmatmul.mubr.bf16.gmra.mrb[0].mxu0 %v2616
  %v2737 = vpop.f32.mrb[0].mxu0
  %v2738 = vadd.f32 0.0, %v2737
  %v2739 = vpop.f32.mrb[0].mxu0
  %v2740 = vpop.f32.mrb[0].mxu0
  %v2741 = vpop.f32.mrb[0].mxu0
  %2742 = vdwg.mxu0
  %v2743 = vadd.f32 %v2550, %v2706
  %v2744 = vadd.f32 %v2553, %v2709
  %v2745 = vadd.f32 %v2558, %v2714
  %v2746 = vadd.f32 %v2561, %v2717
  %v2747 = vadd.f32 %v2566, %v2722
  %v2748 = vadd.f32 %v2569, %v2725
  %v2749 = vadd.f32 %v2574, %v2730
  %v2750 = vadd.f32 %v2577, %v2733
  %v2751 = vadd.f32 %v2582, %v2738
  %v2752 = vld [vmem:[%s8] sm:$0x1]
  %v2754 = vlaneseq
  %v2755 = vshrl.u32 %v2754, 7
  %v2756 = vsub.s32 0, %v2755
  %v2757 = vrot.slane %v2752, %v2756
  %v2759 = vadd.f32 %v2743, %v2757
  %v2760 = vadd.f32 %v2744, %v2757
  %v2761 = vadd.f32 %v2745, %v2757
  %v2762 = vadd.f32 %v2746, %v2757
  %v2763 = vadd.f32 %v2747, %v2757
  %v2764 = vadd.f32 %v2748, %v2757
  %v2765 = vadd.f32 %v2749, %v2757
  %v2766 = vadd.f32 %v2750, %v2757
  %v2767 = vadd.f32 %v2751, %v2757
  %v2768 = vmul.f32 %v2759, 0.5
  %v2769 = vmul.f32 %v2760, 0.5
  %v2770 = vmul.f32 %v2761, 0.5
  %v2771 = vmul.f32 %v2762, 0.5
  %v2772 = vmul.f32 %v2763, 0.5
  %v2773 = vmul.f32 %v2764, 0.5
  %v2774 = vmul.f32 %v2765, 0.5
  %v2775 = vmul.f32 %v2766, 0.5
  %v2776 = vmul.f32 %v2767, 0.5
  %vm2786 = vcmask 1041408
  %v2787 = vrot.slane %v2768, 6
  %v2788 = vrot.slane %v2769, 6
  %v2789 = vsel %vm2786, %v2787, %v2788
  %v2790 = vrot.slane %v2770, 6
  %v2791 = vsel %vm2786, %v2788, %v2790
  %v2792 = vrot.slane %v2771, 6
  %v2793 = vsel %vm2786, %v2790, %v2792
  %v2794 = vrot.slane %v2772, 6
  %v2795 = vsel %vm2786, %v2792, %v2794
  %v2796 = vrot.slane %v2773, 6
  %v2797 = vsel %vm2786, %v2794, %v2796
  %v2798 = vrot.slane %v2774, 6
  %v2799 = vsel %vm2786, %v2796, %v2798
  %v2800 = vrot.slane %v2775, 6
  %v2801 = vsel %vm2786, %v2798, %v2800
  %v2802 = vrot.slane %v2776, 6
  %v2803 = vsel %vm2786, %v2800, %v2802
  %v2813 = vadd.f32 %v1700, %v2787
  %v2814 = vadd.f32 %v1701, %v2789
  %v2815 = vadd.f32 %v1702, %v2791
  %v2816 = vadd.f32 %v1703, %v2793
  %v2817 = vadd.f32 %v1704, %v2795
  %v2818 = vadd.f32 %v1705, %v2797
  %v2819 = vadd.f32 %v1706, %v2799
  %v2820 = vadd.f32 %v1707, %v2801
  %v2821 = vadd.f32 %v1708, %v2803
  %s2822 = sadd.s32 %s39, 4294967294
  %v2823 = vstv %s2822
  %v2824 = vadd.s32 %v1125, %v2823
  %v2825 = vadd.s32 %v1126, %v2823
  %v2826 = vadd.s32 %v1127, %v2823
  %v2827 = vadd.s32 %v1128, %v2823
  %v2828 = vadd.s32 %v1129, %v2823
  %v2829 = vadd.s32 %v1130, %v2823
  %v2830 = vadd.s32 %v1131, %v2823
  %v2831 = vadd.s32 %v1132, %v2823
  %v2832 = vadd.s32 %v1133, %v2823
  %vm2833 = vcmp.ge.s32.totalorder %v2824, 0
  %vm2834 = vcmp.ge.s32.totalorder %v2825, 0
  %vm2835 = vcmp.ge.s32.totalorder %v2826, 0
  %vm2836 = vcmp.ge.s32.totalorder %v2827, 0
  %vm2837 = vcmp.ge.s32.totalorder %v2828, 0
  %vm2838 = vcmp.ge.s32.totalorder %v2829, 0
  %vm2839 = vcmp.ge.s32.totalorder %v2830, 0
  %vm2840 = vcmp.ge.s32.totalorder %v2831, 0
  %vm2841 = vcmp.ge.s32.totalorder %v2832, 0
  %vm2842 = vcmp.lt.s32.totalorder %v2824, 8
  %vm2843 = vcmp.lt.s32.totalorder %v2825, 8
  %vm2844 = vcmp.lt.s32.totalorder %v2826, 8
  %vm2845 = vcmp.lt.s32.totalorder %v2827, 8
  %vm2846 = vcmp.lt.s32.totalorder %v2828, 8
  %vm2847 = vcmp.lt.s32.totalorder %v2829, 8
  %vm2848 = vcmp.lt.s32.totalorder %v2830, 8
  %vm2849 = vcmp.lt.s32.totalorder %v2831, 8
  %vm2850 = vcmp.lt.s32.totalorder %v2832, 8
  %vm2851 = vmand %vm2833, %vm2842
  %vm2852 = vmand %vm2834, %vm2843
  %vm2853 = vmand %vm2835, %vm2844
  %vm2854 = vmand %vm2836, %vm2845
  %vm2855 = vmand %vm2837, %vm2846
  %vm2856 = vmand %vm2838, %vm2847
  %vm2857 = vmand %vm2839, %vm2848
  %vm2858 = vmand %vm2840, %vm2849
  %vm2859 = vmand %vm2841, %vm2850
  %v2860 = vsel %vm2851, 1, 0
  %v2861 = vsel %vm2852, 1, 0
  %v2862 = vsel %vm2853, 1, 0
  %v2863 = vsel %vm2854, 1, 0
  %v2864 = vsel %vm2855, 1, 0
  %v2865 = vsel %vm2856, 1, 0
  %v2866 = vsel %vm2857, 1, 0
  %v2867 = vsel %vm2858, 1, 0
  %v2868 = vsel %vm2859, 1, 0
  %vm2869 = vcmp.eq.s32.totalorder %v2860, 1
  %vm2870 = vcmp.eq.s32.totalorder %v2861, 1
  %vm2871 = vcmp.eq.s32.totalorder %v2862, 1
  %vm2872 = vcmp.eq.s32.totalorder %v2863, 1
  %vm2873 = vcmp.eq.s32.totalorder %v2864, 1
  %vm2874 = vcmp.eq.s32.totalorder %v2865, 1
  %vm2875 = vcmp.eq.s32.totalorder %v2866, 1
  %vm2876 = vcmp.eq.s32.totalorder %v2867, 1
  %vm2877 = vcmp.eq.s32.totalorder %v2868, 1
  %vm2887 = vcmask 1045504
  %v2888 = vrot.slane %v2813, 2
  %v2889 = vrot.slane %v2814, 2
  %v2890 = vsel %vm2887, %v2888, %v2889
  %v2891 = vrot.slane %v2815, 2
  %v2892 = vsel %vm2887, %v2889, %v2891
  %v2893 = vrot.slane %v2816, 2
  %v2894 = vsel %vm2887, %v2891, %v2893
  %v2895 = vrot.slane %v2817, 2
  %v2896 = vsel %vm2887, %v2893, %v2895
  %v2897 = vrot.slane %v2818, 2
  %v2898 = vsel %vm2887, %v2895, %v2897
  %v2899 = vrot.slane %v2819, 2
  %v2900 = vsel %vm2887, %v2897, %v2899
  %v2901 = vrot.slane %v2820, 2
  %v2902 = vsel %vm2887, %v2899, %v2901
  %v2903 = vrot.slane %v2821, 2
  %v2904 = vsel %vm2887, %v2901, %v2903
  %v2914 = vsel %vm2869, %v2890, 0.0
  %v2915 = vsel %vm2870, %v2892, 0.0
  %v2916 = vsel %vm2871, %v2894, 0.0
  %v2917 = vsel %vm2872, %v2896, 0.0
  %v2918 = vsel %vm2873, %v2898, 0.0
  %v2919 = vsel %vm2874, %v2900, 0.0
  %v2920 = vsel %vm2875, %v2902, 0.0
  %v2921 = vsel %vm2876, %v2904, 0.0
  %v2922 = vsel %vm2877, %v2903, 0.0
  %vm2923 = vcmp.ge.f32.partialorder %v2914, 0.0
  %vm2924 = vcmp.ge.f32.partialorder %v2915, 0.0
  %vm2925 = vcmp.ge.f32.partialorder %v2916, 0.0
  %vm2926 = vcmp.ge.f32.partialorder %v2917, 0.0
  %vm2927 = vcmp.ge.f32.partialorder %v2918, 0.0
  %vm2928 = vcmp.ge.f32.partialorder %v2919, 0.0
  %vm2929 = vcmp.ge.f32.partialorder %v2920, 0.0
  %vm2930 = vcmp.ge.f32.partialorder %v2921, 0.0
  %vm2931 = vcmp.ge.f32.partialorder %v2922, 0.0
  %v2932 = vmul.f32 %v2914, 0.1
  %v2933 = vmul.f32 %v2915, 0.1
  %v2934 = vmul.f32 %v2916, 0.1
  %v2935 = vmul.f32 %v2917, 0.1
  %v2936 = vmul.f32 %v2918, 0.1
  %v2937 = vmul.f32 %v2919, 0.1
  %v2938 = vmul.f32 %v2920, 0.1
  %v2939 = vmul.f32 %v2921, 0.1
  %v2940 = vmul.f32 %v2922, 0.1
  %v2941 = vsel %vm2923, %v2914, %v2932
  %v2942 = vsel %vm2924, %v2915, %v2933
  %v2943 = vsel %vm2925, %v2916, %v2934
  %v2944 = vsel %vm2926, %v2917, %v2935
  %v2945 = vsel %vm2927, %v2918, %v2936
  %v2946 = vsel %vm2928, %v2919, %v2937
  %v2947 = vsel %vm2929, %v2920, %v2938
  %v2948 = vsel %vm2930, %v2921, %v2939
  %v2949 = vsel %vm2931, %v2922, %v2940
  %v2950 = vpack.c.bf16 %v2942, %v2941
  %v2951 = vpack.c.bf16 %v2944, %v2943
  %v2952 = vpack.c.bf16 %v2946, %v2945
  %v2953 = vpack.c.bf16 %v2948, %v2947
  %v2954 = vpack.c.bf16 %v2949, %v2949
  %v2955 = vld [vmem:[%s9] sm:$0xf]
  %v2956 = vld [vmem:[%s9 + $0x4] sm:$0xf]
  %v2957 = vld [vmem:[%s9 + $0x8] sm:$0xf]
  %v2958 = vld [vmem:[%s9 + $0xc] sm:$0xf]
  %v2959 = vld [vmem:[%s9 + $0x10] sm:$0xf]
  %v2960 = vld [vmem:[%s9 + $0x14] sm:$0xf]
  %v2961 = vld [vmem:[%s9 + $0x18] sm:$0xf]
  %v2962 = vld [vmem:[%s9 + $0x1c] sm:$0xf]
  %s2963 = scalar_lea.vmem %s9, 32
  %v2964 = vld [vmem:[%s2963] sm:$0xf]
  %v2965 = vld [vmem:[%s2963 + $0x4] sm:$0xf]
  %v2966 = vld [vmem:[%s2963 + $0x8] sm:$0xf]
  %v2967 = vld [vmem:[%s2963 + $0xc] sm:$0xf]
  %v2968 = vld [vmem:[%s2963 + $0x10] sm:$0xf]
  %v2969 = vld [vmem:[%s2963 + $0x14] sm:$0xf]
  %v2970 = vld [vmem:[%s2963 + $0x18] sm:$0xf]
  %v2971 = vld [vmem:[%s2963 + $0x1c] sm:$0xf]
  %v2973 = vshrl.u32 %v2950, 16
  %v2975 = vshll.u32 %v2950, 16
  %v2977 = vrot.slane %v2975, 1
  %v2978 = vor.u32 %v2973, %v2977
  %v2980 = vshll.u32 %v2951, 16
  %v2982 = vrot.slane %v2980, 1
  %v2983 = vsel %vm92, %v2978, %v2982
  %v2984 = vshrl.u32 %v2951, 16
  %v2986 = vor.u32 %v2984, %v2982
  %v2988 = vshll.u32 %v2952, 16
  %v2990 = vrot.slane %v2988, 1
  %v2991 = vsel %vm92, %v2986, %v2990
  %v2992 = vshrl.u32 %v2952, 16
  %v2994 = vor.u32 %v2992, %v2990
  %v2996 = vshll.u32 %v2953, 16
  %v2998 = vrot.slane %v2996, 1
  %v2999 = vsel %vm92, %v2994, %v2998
  %v3000 = vshrl.u32 %v2953, 16
  %v3002 = vor.u32 %v3000, %v2998
  %v3004 = vshll.u32 %v2954, 16
  %v3006 = vrot.slane %v3004, 1
  %v3007 = vsel %vm92, %v3002, %v3006
  %v3016 = vunpack.c.l.b16 %v2964
  %v3017 = vunpack.c.l.b16 %v2965
  %v3018 = vunpack.c.l.b16 %v2966
  %v3019 = vunpack.c.l.b16 %v2967
  %v3020 = vunpack.c.l.b16 %v2968
  %v3021 = vunpack.c.l.b16 %v2969
  %v3022 = vunpack.c.l.b16 %v2970
  %v3023 = vunpack.c.l.b16 %v2971
  %v3024 = vpack.c.b16 %v3017, %v3016
  %v3025 = vpack.c.b16 %v3019, %v3018
  %v3026 = vpack.c.b16 %v3021, %v3020
  %v3027 = vpack.c.b16 %v3023, %v3022
  %v3033 = vsel %vm156, %v2983, 0
  %v3036 = vsel %vm156, %v2991, 0
  %v3039 = vsel %vm156, %v2999, 0
  %v3042 = vsel %vm156, %v3007, 0
  %3044 = vmatprep.subr.bf16.mxu0 0
  %3045 = vmatpush1.bf16.msra.mxu0 %v3024
  %3046 = vmatprep.subr.bf16.mxu0 0
  %3047 = vmatpush1.bf16.msra.mxu0 %v3025
  %3048 = vmatprep.subr.bf16.mxu0 0
  %3049 = vmatpush1.bf16.msra.mxu0 %v3026
  %3050 = vmatprep.subr.bf16.mxu0 0
  %3051 = vmatpush1.bf16.msra.mxu0 %v3027
  %3052 = vmatprep.subr.bf16.mxu0 0
  %3053 = vmatpush1.bf16.msra.mxu0 0
  %3054 = vmatprep.subr.bf16.mxu0 0
  %3055 = vmatpush1.bf16.msra.mxu0 0
  %3056 = vmatprep.subr.bf16.mxu0 0
  %3057 = vmatpush1.bf16.msra.mxu0 0
  %3058 = vmatprep.subr.bf16.mxu0 0
  %3059 = vmatpush1.bf16.msra.mxu0 0
  %3060 = vmatprep.subr.bf16.mxu0 0
  %3061 = vmatpush1.bf16.msra.mxu0 0
  %3062 = vmatprep.subr.bf16.mxu0 0
  %3063 = vmatpush1.bf16.msra.mxu0 0
  %3064 = vmatprep.subr.bf16.mxu0 0
  %3065 = vmatpush1.bf16.msra.mxu0 0
  %3066 = vmatprep.subr.bf16.mxu0 0
  %3067 = vmatpush1.bf16.msra.mxu0 0
  %3068 = vmatprep.subr.bf16.mxu0 0
  %3069 = vmatpush1.bf16.msra.mxu0 0
  %3070 = vmatprep.subr.bf16.mxu0 0
  %3071 = vmatpush1.bf16.msra.mxu0 0
  %3072 = vmatprep.subr.bf16.mxu0 0
  %3073 = vmatpush1.bf16.msra.mxu0 0
  %3074 = vmatprep.subr.bf16.mxu0 0
  %3075 = vmatpush1.bf16.msra.mxu0 0
  %3076 = vmatprep.mubr.bf16.mxu0 0
  %3077 = vmatmul.mubr.bf16.gmra.mrb[0].mxu0 %v3033
  %v3078 = vpop.f32.mrb[0].mxu0
  %v3079 = vadd.f32 0.0, %v3078
  %v3080 = vpop.f32.mrb[0].mxu0
  %v3081 = vpop.f32.mrb[0].mxu0
  %v3082 = vadd.f32 0.0, %v3081
  %v3083 = vpop.f32.mrb[0].mxu0
  %3084 = vmatprep.mubr.bf16.mxu0 0
  %3085 = vmatmul.mubr.bf16.gmra.mrb[0].mxu0 %v3036
  %v3086 = vpop.f32.mrb[0].mxu0
  %v3087 = vadd.f32 0.0, %v3086
  %v3088 = vpop.f32.mrb[0].mxu0
  %v3089 = vpop.f32.mrb[0].mxu0
  %v3090 = vadd.f32 0.0, %v3089
  %v3091 = vpop.f32.mrb[0].mxu0
  %3092 = vmatprep.mubr.bf16.mxu0 0
  %3093 = vmatmul.mubr.bf16.gmra.mrb[0].mxu0 %v3039
  %v3094 = vpop.f32.mrb[0].mxu0
  %v3095 = vadd.f32 0.0, %v3094
  %v3096 = vpop.f32.mrb[0].mxu0
  %v3097 = vpop.f32.mrb[0].mxu0
  %v3098 = vadd.f32 0.0, %v3097
  %v3099 = vpop.f32.mrb[0].mxu0
  %3100 = vmatprep.mubr.bf16.mxu0 0
  %3101 = vmatmul.mubr.bf16.gmra.mrb[0].mxu0 %v3042
  %v3102 = vpop.f32.mrb[0].mxu0
  %v3103 = vadd.f32 0.0, %v3102
  %v3104 = vpop.f32.mrb[0].mxu0
  %v3105 = vpop.f32.mrb[0].mxu0
  %v3106 = vadd.f32 0.0, %v3105
  %v3107 = vpop.f32.mrb[0].mxu0
  %3108 = vdwg.mxu0
  %v3117 = vunpack.c.l.b16 %v2955
  %v3118 = vunpack.c.l.b16 %v2956
  %v3119 = vunpack.c.l.b16 %v2957
  %v3120 = vunpack.c.l.b16 %v2958
  %v3121 = vunpack.c.l.b16 %v2959
  %v3122 = vunpack.c.l.b16 %v2960
  %v3123 = vunpack.c.l.b16 %v2961
  %v3124 = vunpack.c.l.b16 %v2962
  %v3125 = vpack.c.b16 %v3118, %v3117
  %v3126 = vpack.c.b16 %v3120, %v3119
  %v3127 = vpack.c.b16 %v3122, %v3121
  %v3128 = vpack.c.b16 %v3124, %v3123
  %v3133 = vsel %vm156, %v2950, 0
  %v3135 = vsel %vm156, %v2951, 0
  %v3137 = vsel %vm156, %v2952, 0
  %v3139 = vsel %vm156, %v2953, 0
  %3141 = vmatprep.subr.bf16.mxu0 0
  %3142 = vmatpush1.bf16.msra.mxu0 %v3125
  %3143 = vmatprep.subr.bf16.mxu0 0
  %3144 = vmatpush1.bf16.msra.mxu0 %v3126
  %3145 = vmatprep.subr.bf16.mxu0 0
  %3146 = vmatpush1.bf16.msra.mxu0 %v3127
  %3147 = vmatprep.subr.bf16.mxu0 0
  %3148 = vmatpush1.bf16.msra.mxu0 %v3128
  %3149 = vmatprep.subr.bf16.mxu0 0
  %3150 = vmatpush1.bf16.msra.mxu0 0
  %3151 = vmatprep.subr.bf16.mxu0 0
  %3152 = vmatpush1.bf16.msra.mxu0 0
  %3153 = vmatprep.subr.bf16.mxu0 0
  %3154 = vmatpush1.bf16.msra.mxu0 0
  %3155 = vmatprep.subr.bf16.mxu0 0
  %3156 = vmatpush1.bf16.msra.mxu0 0
  %3157 = vmatprep.subr.bf16.mxu0 0
  %3158 = vmatpush1.bf16.msra.mxu0 0
  %3159 = vmatprep.subr.bf16.mxu0 0
  %3160 = vmatpush1.bf16.msra.mxu0 0
  %3161 = vmatprep.subr.bf16.mxu0 0
  %3162 = vmatpush1.bf16.msra.mxu0 0
  %3163 = vmatprep.subr.bf16.mxu0 0
  %3164 = vmatpush1.bf16.msra.mxu0 0
  %3165 = vmatprep.subr.bf16.mxu0 0
  %3166 = vmatpush1.bf16.msra.mxu0 0
  %3167 = vmatprep.subr.bf16.mxu0 0
  %3168 = vmatpush1.bf16.msra.mxu0 0
  %3169 = vmatprep.subr.bf16.mxu0 0
  %3170 = vmatpush1.bf16.msra.mxu0 0
  %3171 = vmatprep.subr.bf16.mxu0 0
  %3172 = vmatpush1.bf16.msra.mxu0 0
  %3173 = vmatprep.mubr.bf16.mxu0 0
  %3174 = vmatmul.mubr.bf16.gmra.mrb[0].mxu0 %v3133
  %v3175 = vpop.f32.mrb[0].mxu0
  %v3176 = vadd.f32 %v3079, %v3175
  %v3177 = vpop.f32.mrb[0].mxu0
  %v3178 = vpop.f32.mrb[0].mxu0
  %v3179 = vadd.f32 %v3082, %v3178
  %v3180 = vpop.f32.mrb[0].mxu0
  %3181 = vmatprep.mubr.bf16.mxu0 0
  %3182 = vmatmul.mubr.bf16.gmra.mrb[0].mxu0 %v3135
  %v3183 = vpop.f32.mrb[0].mxu0
  %v3184 = vadd.f32 %v3087, %v3183
  %v3185 = vpop.f32.mrb[0].mxu0
  %v3186 = vpop.f32.mrb[0].mxu0
  %v3187 = vadd.f32 %v3090, %v3186
  %v3188 = vpop.f32.mrb[0].mxu0
  %3189 = vmatprep.mubr.bf16.mxu0 0
  %3190 = vmatmul.mubr.bf16.gmra.mrb[0].mxu0 %v3137
  %v3191 = vpop.f32.mrb[0].mxu0
  %v3192 = vadd.f32 %v3095, %v3191
  %v3193 = vpop.f32.mrb[0].mxu0
  %v3194 = vpop.f32.mrb[0].mxu0
  %v3195 = vadd.f32 %v3098, %v3194
  %v3196 = vpop.f32.mrb[0].mxu0
  %3197 = vmatprep.mubr.bf16.mxu0 0
  %3198 = vmatmul.mubr.bf16.gmra.mrb[0].mxu0 %v3139
  %v3199 = vpop.f32.mrb[0].mxu0
  %v3200 = vadd.f32 %v3103, %v3199
  %v3201 = vpop.f32.mrb[0].mxu0
  %v3202 = vpop.f32.mrb[0].mxu0
  %v3203 = vadd.f32 %v3106, %v3202
  %v3204 = vpop.f32.mrb[0].mxu0
  %3205 = vdwg.mxu0
  %s3206 = scalar_lea.vmem %s9, 64
  %v3207 = vld [vmem:[%s3206] sm:$0xf]
  %v3208 = vld [vmem:[%s3206 + $0x4] sm:$0xf]
  %v3209 = vld [vmem:[%s3206 + $0x8] sm:$0xf]
  %v3210 = vld [vmem:[%s3206 + $0xc] sm:$0xf]
  %v3211 = vld [vmem:[%s3206 + $0x10] sm:$0xf]
  %v3212 = vld [vmem:[%s3206 + $0x14] sm:$0xf]
  %v3213 = vld [vmem:[%s3206 + $0x18] sm:$0xf]
  %v3214 = vld [vmem:[%s3206 + $0x1c] sm:$0xf]
  %v3220 = vrot.slane %v2950, 1
  %v3221 = vrot.slane %v2951, 1
  %v3222 = vsel %vm361, %v3220, %v3221
  %v3223 = vrot.slane %v2952, 1
  %v3224 = vsel %vm361, %v3221, %v3223
  %v3225 = vrot.slane %v2953, 1
  %v3226 = vsel %vm361, %v3223, %v3225
  %v3227 = vrot.slane %v2954, 1
  %v3228 = vsel %vm361, %v3225, %v3227
  %v3237 = vunpack.c.l.b16 %v3207
  %v3238 = vunpack.c.l.b16 %v3208
  %v3239 = vunpack.c.l.b16 %v3209
  %v3240 = vunpack.c.l.b16 %v3210
  %v3241 = vunpack.c.l.b16 %v3211
  %v3242 = vunpack.c.l.b16 %v3212
  %v3243 = vunpack.c.l.b16 %v3213
  %v3244 = vunpack.c.l.b16 %v3214
  %v3245 = vpack.c.b16 %v3238, %v3237
  %v3246 = vpack.c.b16 %v3240, %v3239
  %v3247 = vpack.c.b16 %v3242, %v3241
  %v3248 = vpack.c.b16 %v3244, %v3243
  %v3254 = vsel %vm156, %v3222, 0
  %v3257 = vsel %vm156, %v3224, 0
  %v3260 = vsel %vm156, %v3226, 0
  %v3263 = vsel %vm156, %v3228, 0
  %3265 = vmatprep.subr.bf16.mxu0 0
  %3266 = vmatpush1.bf16.msra.mxu0 %v3245
  %3267 = vmatprep.subr.bf16.mxu0 0
  %3268 = vmatpush1.bf16.msra.mxu0 %v3246
  %3269 = vmatprep.subr.bf16.mxu0 0
  %3270 = vmatpush1.bf16.msra.mxu0 %v3247
  %3271 = vmatprep.subr.bf16.mxu0 0
  %3272 = vmatpush1.bf16.msra.mxu0 %v3248
  %3273 = vmatprep.subr.bf16.mxu0 0
  %3274 = vmatpush1.bf16.msra.mxu0 0
  %3275 = vmatprep.subr.bf16.mxu0 0
  %3276 = vmatpush1.bf16.msra.mxu0 0
  %3277 = vmatprep.subr.bf16.mxu0 0
  %3278 = vmatpush1.bf16.msra.mxu0 0
  %3279 = vmatprep.subr.bf16.mxu0 0
  %3280 = vmatpush1.bf16.msra.mxu0 0
  %3281 = vmatprep.subr.bf16.mxu0 0
  %3282 = vmatpush1.bf16.msra.mxu0 0
  %3283 = vmatprep.subr.bf16.mxu0 0
  %3284 = vmatpush1.bf16.msra.mxu0 0
  %3285 = vmatprep.subr.bf16.mxu0 0
  %3286 = vmatpush1.bf16.msra.mxu0 0
  %3287 = vmatprep.subr.bf16.mxu0 0
  %3288 = vmatpush1.bf16.msra.mxu0 0
  %3289 = vmatprep.subr.bf16.mxu0 0
  %3290 = vmatpush1.bf16.msra.mxu0 0
  %3291 = vmatprep.subr.bf16.mxu0 0
  %3292 = vmatpush1.bf16.msra.mxu0 0
  %3293 = vmatprep.subr.bf16.mxu0 0
  %3294 = vmatpush1.bf16.msra.mxu0 0
  %3295 = vmatprep.subr.bf16.mxu0 0
  %3296 = vmatpush1.bf16.msra.mxu0 0
  %3297 = vmatprep.mubr.bf16.mxu0 0
  %3298 = vmatmul.mubr.bf16.gmra.mrb[0].mxu0 %v3254
  %v3299 = vpop.f32.mrb[0].mxu0
  %v3300 = vadd.f32 0.0, %v3299
  %v3301 = vpop.f32.mrb[0].mxu0
  %v3302 = vpop.f32.mrb[0].mxu0
  %v3303 = vadd.f32 0.0, %v3302
  %v3304 = vpop.f32.mrb[0].mxu0
  %3305 = vmatprep.mubr.bf16.mxu0 0
  %3306 = vmatmul.mubr.bf16.gmra.mrb[0].mxu0 %v3257
  %v3307 = vpop.f32.mrb[0].mxu0
  %v3308 = vadd.f32 0.0, %v3307
  %v3309 = vpop.f32.mrb[0].mxu0
  %v3310 = vpop.f32.mrb[0].mxu0
  %v3311 = vadd.f32 0.0, %v3310
  %v3312 = vpop.f32.mrb[0].mxu0
  %3313 = vmatprep.mubr.bf16.mxu0 0
  %3314 = vmatmul.mubr.bf16.gmra.mrb[0].mxu0 %v3260
  %v3315 = vpop.f32.mrb[0].mxu0
  %v3316 = vadd.f32 0.0, %v3315
  %v3317 = vpop.f32.mrb[0].mxu0
  %v3318 = vpop.f32.mrb[0].mxu0
  %v3319 = vadd.f32 0.0, %v3318
  %v3320 = vpop.f32.mrb[0].mxu0
  %3321 = vmatprep.mubr.bf16.mxu0 0
  %3322 = vmatmul.mubr.bf16.gmra.mrb[0].mxu0 %v3263
  %v3323 = vpop.f32.mrb[0].mxu0
  %v3324 = vadd.f32 0.0, %v3323
  %v3325 = vpop.f32.mrb[0].mxu0
  %v3326 = vpop.f32.mrb[0].mxu0
  %v3327 = vadd.f32 0.0, %v3326
  %v3328 = vpop.f32.mrb[0].mxu0
  %3329 = vdwg.mxu0
  %v3330 = vadd.f32 %v3176, %v3300
  %v3331 = vadd.f32 %v3179, %v3303
  %v3332 = vadd.f32 %v3184, %v3308
  %v3333 = vadd.f32 %v3187, %v3311
  %v3334 = vadd.f32 %v3192, %v3316
  %v3335 = vadd.f32 %v3195, %v3319
  %v3336 = vadd.f32 %v3200, %v3324
  %v3337 = vadd.f32 %v3203, %v3327
  %s3338 = scalar_lea.vmem %s9, 96
  %v3339 = vld [vmem:[%s3338] sm:$0xf]
  %v3340 = vld [vmem:[%s3338 + $0x4] sm:$0xf]
  %v3341 = vld [vmem:[%s3338 + $0x8] sm:$0xf]
  %v3342 = vld [vmem:[%s3338 + $0xc] sm:$0xf]
  %v3343 = vld [vmem:[%s3338 + $0x10] sm:$0xf]
  %v3344 = vld [vmem:[%s3338 + $0x14] sm:$0xf]
  %v3345 = vld [vmem:[%s3338 + $0x18] sm:$0xf]
  %v3346 = vld [vmem:[%s3338 + $0x1c] sm:$0xf]
  %v3347 = vrot.slane %v2973, 1
  %v3348 = vrot.slane %v2975, 2
  %v3349 = vor.u32 %v3347, %v3348
  %v3350 = vrot.slane %v2984, 1
  %v3351 = vrot.slane %v2980, 2
  %v3352 = vor.u32 %v3350, %v3351
  %v3353 = vsel %vm502, %v3349, %v3352
  %v3354 = vrot.slane %v2992, 1
  %v3355 = vrot.slane %v2988, 2
  %v3356 = vor.u32 %v3354, %v3355
  %v3357 = vsel %vm502, %v3352, %v3356
  %v3358 = vrot.slane %v3000, 1
  %v3359 = vrot.slane %v2996, 2
  %v3360 = vor.u32 %v3358, %v3359
  %v3361 = vsel %vm502, %v3356, %v3360
  %v3362 = vshrl.u32 %v2954, 16
  %v3364 = vrot.slane %v3362, 1
  %v3365 = vrot.slane %v3004, 2
  %v3366 = vor.u32 %v3364, %v3365
  %v3367 = vsel %vm502, %v3360, %v3366
  %v3376 = vunpack.c.l.b16 %v3339
  %v3377 = vunpack.c.l.b16 %v3340
  %v3378 = vunpack.c.l.b16 %v3341
  %v3379 = vunpack.c.l.b16 %v3342
  %v3380 = vunpack.c.l.b16 %v3343
  %v3381 = vunpack.c.l.b16 %v3344
  %v3382 = vunpack.c.l.b16 %v3345
  %v3383 = vunpack.c.l.b16 %v3346
  %v3384 = vpack.c.b16 %v3377, %v3376
  %v3385 = vpack.c.b16 %v3379, %v3378
  %v3386 = vpack.c.b16 %v3381, %v3380
  %v3387 = vpack.c.b16 %v3383, %v3382
  %v3393 = vsel %vm156, %v3353, 0
  %v3396 = vsel %vm156, %v3357, 0
  %v3399 = vsel %vm156, %v3361, 0
  %v3402 = vsel %vm156, %v3367, 0
  %3404 = vmatprep.subr.bf16.mxu0 0
  %3405 = vmatpush1.bf16.msra.mxu0 %v3384
  %3406 = vmatprep.subr.bf16.mxu0 0
  %3407 = vmatpush1.bf16.msra.mxu0 %v3385
  %3408 = vmatprep.subr.bf16.mxu0 0
  %3409 = vmatpush1.bf16.msra.mxu0 %v3386
  %3410 = vmatprep.subr.bf16.mxu0 0
  %3411 = vmatpush1.bf16.msra.mxu0 %v3387
  %3412 = vmatprep.subr.bf16.mxu0 0
  %3413 = vmatpush1.bf16.msra.mxu0 0
  %3414 = vmatprep.subr.bf16.mxu0 0
  %3415 = vmatpush1.bf16.msra.mxu0 0
  %3416 = vmatprep.subr.bf16.mxu0 0
  %3417 = vmatpush1.bf16.msra.mxu0 0
  %3418 = vmatprep.subr.bf16.mxu0 0
  %3419 = vmatpush1.bf16.msra.mxu0 0
  %3420 = vmatprep.subr.bf16.mxu0 0
  %3421 = vmatpush1.bf16.msra.mxu0 0
  %3422 = vmatprep.subr.bf16.mxu0 0
  %3423 = vmatpush1.bf16.msra.mxu0 0
  %3424 = vmatprep.subr.bf16.mxu0 0
  %3425 = vmatpush1.bf16.msra.mxu0 0
  %3426 = vmatprep.subr.bf16.mxu0 0
  %3427 = vmatpush1.bf16.msra.mxu0 0
  %3428 = vmatprep.subr.bf16.mxu0 0
  %3429 = vmatpush1.bf16.msra.mxu0 0
  %3430 = vmatprep.subr.bf16.mxu0 0
  %3431 = vmatpush1.bf16.msra.mxu0 0
  %3432 = vmatprep.subr.bf16.mxu0 0
  %3433 = vmatpush1.bf16.msra.mxu0 0
  %3434 = vmatprep.subr.bf16.mxu0 0
  %3435 = vmatpush1.bf16.msra.mxu0 0
  %3436 = vmatprep.mubr.bf16.mxu0 0
  %3437 = vmatmul.mubr.bf16.gmra.mrb[0].mxu0 %v3393
  %v3438 = vpop.f32.mrb[0].mxu0
  %v3439 = vadd.f32 0.0, %v3438
  %v3440 = vpop.f32.mrb[0].mxu0
  %v3441 = vpop.f32.mrb[0].mxu0
  %v3442 = vadd.f32 0.0, %v3441
  %v3443 = vpop.f32.mrb[0].mxu0
  %3444 = vmatprep.mubr.bf16.mxu0 0
  %3445 = vmatmul.mubr.bf16.gmra.mrb[0].mxu0 %v3396
  %v3446 = vpop.f32.mrb[0].mxu0
  %v3447 = vadd.f32 0.0, %v3446
  %v3448 = vpop.f32.mrb[0].mxu0
  %v3449 = vpop.f32.mrb[0].mxu0
  %v3450 = vadd.f32 0.0, %v3449
  %v3451 = vpop.f32.mrb[0].mxu0
  %3452 = vmatprep.mubr.bf16.mxu0 0
  %3453 = vmatmul.mubr.bf16.gmra.mrb[0].mxu0 %v3399
  %v3454 = vpop.f32.mrb[0].mxu0
  %v3455 = vadd.f32 0.0, %v3454
  %v3456 = vpop.f32.mrb[0].mxu0
  %v3457 = vpop.f32.mrb[0].mxu0
  %v3458 = vadd.f32 0.0, %v3457
  %v3459 = vpop.f32.mrb[0].mxu0
  %3460 = vmatprep.mubr.bf16.mxu0 0
  %3461 = vmatmul.mubr.bf16.gmra.mrb[0].mxu0 %v3402
  %v3462 = vpop.f32.mrb[0].mxu0
  %v3463 = vadd.f32 0.0, %v3462
  %v3464 = vpop.f32.mrb[0].mxu0
  %v3465 = vpop.f32.mrb[0].mxu0
  %v3466 = vadd.f32 0.0, %v3465
  %v3467 = vpop.f32.mrb[0].mxu0
  %3468 = vdwg.mxu0
  %v3469 = vadd.f32 %v3330, %v3439
  %v3470 = vadd.f32 %v3331, %v3442
  %v3471 = vadd.f32 %v3332, %v3447
  %v3472 = vadd.f32 %v3333, %v3450
  %v3473 = vadd.f32 %v3334, %v3455
  %v3474 = vadd.f32 %v3335, %v3458
  %v3475 = vadd.f32 %v3336, %v3463
  %v3476 = vadd.f32 %v3337, %v3466
  %s3477 = scalar_lea.vmem %s9, 128
  %v3478 = vld [vmem:[%s3477] sm:$0xf]
  %v3479 = vld [vmem:[%s3477 + $0x4] sm:$0xf]
  %v3480 = vld [vmem:[%s3477 + $0x8] sm:$0xf]
  %v3481 = vld [vmem:[%s3477 + $0xc] sm:$0xf]
  %v3482 = vld [vmem:[%s3477 + $0x10] sm:$0xf]
  %v3483 = vld [vmem:[%s3477 + $0x14] sm:$0xf]
  %v3484 = vld [vmem:[%s3477 + $0x18] sm:$0xf]
  %v3485 = vld [vmem:[%s3477 + $0x1c] sm:$0xf]
  %v3486 = vrot.slane %v2950, 2
  %v3487 = vrot.slane %v2951, 2
  %v3488 = vsel %vm653, %v3486, %v3487
  %v3489 = vrot.slane %v2952, 2
  %v3490 = vsel %vm653, %v3487, %v3489
  %v3491 = vrot.slane %v2953, 2
  %v3492 = vsel %vm653, %v3489, %v3491
  %v3493 = vrot.slane %v2954, 2
  %v3494 = vsel %vm653, %v3491, %v3493
  %v3503 = vunpack.c.l.b16 %v3478
  %v3504 = vunpack.c.l.b16 %v3479
  %v3505 = vunpack.c.l.b16 %v3480
  %v3506 = vunpack.c.l.b16 %v3481
  %v3507 = vunpack.c.l.b16 %v3482
  %v3508 = vunpack.c.l.b16 %v3483
  %v3509 = vunpack.c.l.b16 %v3484
  %v3510 = vunpack.c.l.b16 %v3485
  %v3511 = vpack.c.b16 %v3504, %v3503
  %v3512 = vpack.c.b16 %v3506, %v3505
  %v3513 = vpack.c.b16 %v3508, %v3507
  %v3514 = vpack.c.b16 %v3510, %v3509
  %v3520 = vsel %vm156, %v3488, 0
  %v3523 = vsel %vm156, %v3490, 0
  %v3526 = vsel %vm156, %v3492, 0
  %v3529 = vsel %vm156, %v3494, 0
  %3531 = vmatprep.subr.bf16.mxu0 0
  %3532 = vmatpush1.bf16.msra.mxu0 %v3511
  %3533 = vmatprep.subr.bf16.mxu0 0
  %3534 = vmatpush1.bf16.msra.mxu0 %v3512
  %3535 = vmatprep.subr.bf16.mxu0 0
  %3536 = vmatpush1.bf16.msra.mxu0 %v3513
  %3537 = vmatprep.subr.bf16.mxu0 0
  %3538 = vmatpush1.bf16.msra.mxu0 %v3514
  %3539 = vmatprep.subr.bf16.mxu0 0
  %3540 = vmatpush1.bf16.msra.mxu0 0
  %3541 = vmatprep.subr.bf16.mxu0 0
  %3542 = vmatpush1.bf16.msra.mxu0 0
  %3543 = vmatprep.subr.bf16.mxu0 0
  %3544 = vmatpush1.bf16.msra.mxu0 0
  %3545 = vmatprep.subr.bf16.mxu0 0
  %3546 = vmatpush1.bf16.msra.mxu0 0
  %3547 = vmatprep.subr.bf16.mxu0 0
  %3548 = vmatpush1.bf16.msra.mxu0 0
  %3549 = vmatprep.subr.bf16.mxu0 0
  %3550 = vmatpush1.bf16.msra.mxu0 0
  %3551 = vmatprep.subr.bf16.mxu0 0
  %3552 = vmatpush1.bf16.msra.mxu0 0
  %3553 = vmatprep.subr.bf16.mxu0 0
  %3554 = vmatpush1.bf16.msra.mxu0 0
  %3555 = vmatprep.subr.bf16.mxu0 0
  %3556 = vmatpush1.bf16.msra.mxu0 0
  %3557 = vmatprep.subr.bf16.mxu0 0
  %3558 = vmatpush1.bf16.msra.mxu0 0
  %3559 = vmatprep.subr.bf16.mxu0 0
  %3560 = vmatpush1.bf16.msra.mxu0 0
  %3561 = vmatprep.subr.bf16.mxu0 0
  %3562 = vmatpush1.bf16.msra.mxu0 0
  %3563 = vmatprep.mubr.bf16.mxu0 0
  %3564 = vmatmul.mubr.bf16.gmra.mrb[0].mxu0 %v3520
  %v3565 = vpop.f32.mrb[0].mxu0
  %v3566 = vadd.f32 0.0, %v3565
  %v3567 = vpop.f32.mrb[0].mxu0
  %v3568 = vpop.f32.mrb[0].mxu0
  %v3569 = vadd.f32 0.0, %v3568
  %v3570 = vpop.f32.mrb[0].mxu0
  %3571 = vmatprep.mubr.bf16.mxu0 0
  %3572 = vmatmul.mubr.bf16.gmra.mrb[0].mxu0 %v3523
  %v3573 = vpop.f32.mrb[0].mxu0
  %v3574 = vadd.f32 0.0, %v3573
  %v3575 = vpop.f32.mrb[0].mxu0
  %v3576 = vpop.f32.mrb[0].mxu0
  %v3577 = vadd.f32 0.0, %v3576
  %v3578 = vpop.f32.mrb[0].mxu0
  %3579 = vmatprep.mubr.bf16.mxu0 0
  %3580 = vmatmul.mubr.bf16.gmra.mrb[0].mxu0 %v3526
  %v3581 = vpop.f32.mrb[0].mxu0
  %v3582 = vadd.f32 0.0, %v3581
  %v3583 = vpop.f32.mrb[0].mxu0
  %v3584 = vpop.f32.mrb[0].mxu0
  %v3585 = vadd.f32 0.0, %v3584
  %v3586 = vpop.f32.mrb[0].mxu0
  %3587 = vmatprep.mubr.bf16.mxu0 0
  %3588 = vmatmul.mubr.bf16.gmra.mrb[0].mxu0 %v3529
  %v3589 = vpop.f32.mrb[0].mxu0
  %v3590 = vadd.f32 0.0, %v3589
  %v3591 = vpop.f32.mrb[0].mxu0
  %v3592 = vpop.f32.mrb[0].mxu0
  %v3593 = vadd.f32 0.0, %v3592
  %v3594 = vpop.f32.mrb[0].mxu0
  %3595 = vdwg.mxu0
  %v3596 = vadd.f32 %v3469, %v3566
  %v3597 = vadd.f32 %v3470, %v3569
  %v3598 = vadd.f32 %v3471, %v3574
  %v3599 = vadd.f32 %v3472, %v3577
  %v3600 = vadd.f32 %v3473, %v3582
  %v3601 = vadd.f32 %v3474, %v3585
  %v3602 = vadd.f32 %v3475, %v3590
  %v3603 = vadd.f32 %v3476, %v3593
  %v3604 = vld [vmem:[%s10] sm:$0x1]
  %v3606 = vlaneseq
  %v3607 = vshrl.u32 %v3606, 7
  %v3608 = vsub.s32 0, %v3607
  %v3609 = vrot.slane %v3604, %v3608
  %v3611 = vadd.f32 %v3596, %v3609
  %v3612 = vadd.f32 %v3597, %v3609
  %v3613 = vadd.f32 %v3598, %v3609
  %v3614 = vadd.f32 %v3599, %v3609
  %v3615 = vadd.f32 %v3600, %v3609
  %v3616 = vadd.f32 %v3601, %v3609
  %v3617 = vadd.f32 %v3602, %v3609
  %v3618 = vadd.f32 %v3603, %v3609
  %v3619 = vtanh.pop %v3611
  %v3620 = vtanh.pop %v3612
  %v3621 = vtanh.pop %v3613
  %v3622 = vtanh.pop %v3614
  %v3623 = vtanh.pop %v3615
  %v3624 = vtanh.pop %v3616
  %v3625 = vtanh.pop %v3617
  %v3626 = vtanh.pop %v3618
  %vm3627 = vcmask 15360
  %3628 = vst.msk [vmem:[%s11] sm:$0xff] %vm3627, %v3619
  %3629 = vst.msk [vmem:[%s11 + $0x8] sm:$0xff] %vm3627, %v3620
  %3630 = vst.msk [vmem:[%s11 + $0x10] sm:$0xff] %vm3627, %v3621
  %3631 = vst.msk [vmem:[%s11 + $0x18] sm:$0xff] %vm3627, %v3622
  %3632 = vst.msk [vmem:[%s11 + $0x20] sm:$0xff] %vm3627, %v3623
  %3633 = vst.msk [vmem:[%s11 + $0x28] sm:$0xff] %vm3627, %v3624
  %3634 = vst.msk [vmem:[%s11 + $0x30] sm:$0xff] %vm3627, %v3625
  %3635 = vst.msk [vmem:[%s11 + $0x38] sm:$0xff] %vm3627, %v3626
  // Predicated region
  $region46: #{tpu_custom_call.1} parent=0 // pred_check
    _
  $region47: #{tpu_custom_call.1} parent=0 // pred_check_branch
    %3637 = sbr.rel (0) target = $region49
  $region48: #{tpu_custom_call.1} parent=0 // pred_region
    _
  $region49: #{tpu_custom_call.1} parent=0 // pred_fallthru
    _
  // Predicated region
  $region50: #{tpu_custom_call.1} parent=0 // pred_check
    _
  $region51: #{tpu_custom_call.1} parent=0 // pred_check_branch
    %3639 = sbr.rel (0) target = $region53
  $region52: #{tpu_custom_call.1} parent=0 // pred_region
    _
  $region53: #{tpu_custom_call.1} parent=0 // pred_fallthru
    _

</llo_original>
